<compile_context>
chip_gen: v7x
topology: tpu7x:2x2x1
jax: 0.10.0
libtpu: 0.0.40
codegen_flags: <defaults>
</compile_context>

<pallas_src>
import functools

import jax
import jax.numpy as jnp
from jax import lax
from jax.experimental import pallas as pl
from jax.experimental.pallas import tpu as pltpu

_LN_EPS = 1e-5  # PyTorch nn.LayerNorm default


def _erf(x):
    # Abramowitz & Stegun 7.1.26, |error| < 1.5e-7 -> matches exact erf
    # (torch.nn.GELU default, approximate='none') to float32 precision.
    a1 = 0.254829592
    a2 = -0.284496736
    a3 = 1.421413741
    a4 = -1.453152027
    a5 = 1.061405429
    p = 0.3275911
    s = jnp.where(x >= 0.0, 1.0, -1.0)
    ax = jnp.abs(x)
    t = 1.0 / (1.0 + p * ax)
    poly = ((((a5 * t + a4) * t + a3) * t + a2) * t + a1) * t
    return s * (1.0 - poly * jnp.exp(-ax * ax))


def _layernorm(x, gamma, beta):
    mu = jnp.mean(x, axis=-1, keepdims=True)
    xc = x - mu
    var = jnp.mean(xc * xc, axis=-1, keepdims=True)
    return xc * lax.rsqrt(var + _LN_EPS) * gamma + beta


def _crossformer_block_kernel(
    xg_ref, xs_ref,
    ln1_g_ref, ln1_b_ref,
    qkv_w_ref, qkv_b_ref,
    proj_w_ref, proj_b_ref,
    ln2_g_ref, ln2_b_ref,
    fc1_w_ref, fc1_b_ref,
    fc2_w_ref, fc2_b_ref,
    o_ref,
    ctx_ref,
    *, num_heads, matmul_dtype,
):
    gp, n, c = xg_ref.shape
    hd = c // num_heads
    tokens = gp * n

    def mxu(a):
        # optional bf16 MXU operands (v6e/v7x); accumulation stays f32.
        return a if matmul_dtype is None else a.astype(matmul_dtype)

    # load small params once (no per-head re-broadcast inside the head loop)
    ln1_g, ln1_b = ln1_g_ref[...], ln1_b_ref[...]
    ln2_g, ln2_b = ln2_g_ref[...], ln2_b_ref[...]
    qkv_b, proj_b = qkv_b_ref[...], proj_b_ref[...]
    fc1_b, fc2_b = fc1_b_ref[...], fc2_b_ref[...]

    # (GP, N, C) -> (GP*N, C): sublane-aligned flatten (N % 8 == 0 or GP == 1)
    xg = xg_ref[...].astype(jnp.float32).reshape(tokens, c)   # attention path
    xs = xs_ref[...].astype(jnp.float32).reshape(tokens, c)   # residual shortcut

    # ---- norm1 + fused QKV over all GP*N tokens (large MXU M dimension) ----
    # NOTE: the attention scale is already folded into the q columns of
    # qkv_w / qkv_b by the wrapper -> no per-head scaling below.
    xn = _layernorm(xg, ln1_g, ln1_b)
    qkv = jnp.dot(mxu(xn), mxu(qkv_w_ref[...]),
                  preferred_element_type=jnp.float32) + qkv_b          # (GP*N, 3C)
    qkv3 = qkv.reshape(gp, n, 3 * c)                                    # aligned split

    # ---- multi-head self-attention, batched over the GP groups per head ----
    # qkv column layout matches torch .reshape(B_, N, 3, nh, hd): [q | k | v],
    # each head-major.  Head outputs go straight into the ctx scratch at a
    # static column offset (no concat / relayout).
    for h in range(num_heads):
        qh = qkv3[:, :, h * hd:(h + 1) * hd]                            # (GP, N, hd)
        kh = qkv3[:, :, c + h * hd:c + (h + 1) * hd]
        vh = qkv3[:, :, 2 * c + h * hd:2 * c + (h + 1) * hd]
        s = jnp.einsum('gnd,gmd->gnm', mxu(qh), mxu(kh),
                       preferred_element_type=jnp.float32)              # (GP, N, N)
        s = s - jnp.max(s, axis=-1, keepdims=True)
        e = jnp.exp(s)                                                  # EUP
        denom = jnp.sum(e, axis=-1, keepdims=True)                      # >= 1 after max-sub
        p = e * pl.reciprocal(denom, approx=True)                       # EUP, not VALU divide
        oh = jnp.einsum('gnm,gmd->gnd', mxu(p), mxu(vh),
                        preferred_element_type=jnp.float32)             # (GP, N, hd)
        ctx_ref[:, h * hd:(h + 1) * hd] = oh.reshape(tokens, hd)

    # single proj matmul with K = C (better MXU utilization than per-head K=hd)
    attn_out = jnp.dot(mxu(ctx_ref[...]), mxu(proj_w_ref[...]),
                       preferred_element_type=jnp.float32) + proj_b
    x1 = xs + attn_out                                                  # residual 1 (drop_path = Identity)

    # ---- norm2 + MLP ----
    xn2 = _layernorm(x1, ln2_g, ln2_b)
    h1 = jnp.dot(mxu(xn2), mxu(fc1_w_ref[...]),
                 preferred_element_type=jnp.float32) + fc1_b
    h1 = 0.5 * h1 * (1.0 + _erf(h1 * 0.7071067811865476))               # exact-erf GELU
    h2 = jnp.dot(mxu(h1), mxu(fc2_w_ref[...]),
                 preferred_element_type=jnp.float32) + fc2_b

    o_ref[...] = (x1 + h2).reshape(gp, n, c).astype(o_ref.dtype)        # residual 2


def _choose_groups_per_step(num_groups, n_tokens, c, hidden,
                            max_tokens=2048, act_budget_bytes=8 << 20):
    """Pick how many groups each grid step processes (divisor of num_groups)."""
    if n_tokens % 8 != 0:
        return 1  # keep all in-kernel reshapes sublane-aligned
    # rough f32 activation footprint per group inside the kernel
    per_group = 4 * n_tokens * (3 * c + 3 * c + hidden + 2 * n_tokens)
    cap = max(1, min(max_tokens // max(n_tokens, 1),
                     act_budget_bytes // max(per_group, 1),
                     num_groups))
    gp = cap
    while num_groups % gp:
        gp -= 1
    # keep at least 2 grid steps when possible (pipelining + v7x dual TC)
    if num_groups >= 2 and num_groups // gp < 2:
        gp = max(1, num_groups // 2)
        while num_groups % gp:
            gp -= 1
    return gp


def _vmem_limit_bytes():
    """64 MiB scoped VMEM on big-VMEM chips, 3/4 of capacity on v7x (64 MiB)."""
    cap = None
    try:
        cap = pltpu.get_tpu_info().vmem_capacity_bytes
    except Exception:
        cap = None
    if not cap:
        cap = 128 * 1024 * 1024
    return int(min(64 * 1024 * 1024, cap * 3 // 4))


def crossformer_block(x, params, *, input_resolution, num_heads,
                      group_size=7, lsda_flag=0, mlp_ratio=4.0,
                      matmul_dtype=None, groups_per_step=None):
    H, W, T = input_resolution
    B, L, C = x.shape
    assert L == H * W * T, "input feature has wrong size"
    assert C % num_heads == 0

    # Same adjustment as CrossFormerBlock.__init__
    if min(input_resolution) <= group_size:
        lsda_flag = 0
        group_size = min(input_resolution)
    G = group_size
    assert H % G == 0 and W % G == 0 and T % G == 0, "resolution not divisible by group size"
    N = G ** 3
    hidden = int(C * mlp_ratio)
    head_dim = C // num_heads
    scale = head_dim ** -0.5
    num_groups = B * H * W * T // N

    x5 = x.reshape(B, H, W, T, C)

    # --- group embeddings: exactly the torch forward permute (attention path) ---
    if lsda_flag == 0:
        xg = x5.reshape(B, H // G, G, W // G, G, T // G, G, C).transpose(0, 1, 3, 5, 2, 4, 6, 7)
    else:
        xg = x5.reshape(B, G, H // G, G, W // G, G, T // G, C).transpose(0, 2, 4, 6, 1, 3, 5, 7)
    xg = xg.reshape(num_groups, N, C)

    # --- shortcut permuted by the INVERSE of the torch UNGROUP permute, so the
    # fused residual/MLP in grouped layout + one final torch ungroup is exact ---
    if lsda_flag == 0:
        # torch ungroup permute P=(0,1,3,5,2,4,6,7); inverse applied to x5:
        xs = x5.reshape(B, H // G, T // G, G, W // G, G, G, C).transpose(0, 1, 4, 2, 5, 3, 6, 7)
    else:
        # torch ungroup permute P=(0,4,1,5,2,6,3,7); its inverse equals the forward group
        xs = x5.reshape(B, G, H // G, G, W // G, G, T // G, C).transpose(0, 2, 4, 6, 1, 3, 5, 7)
    xs = xs.reshape(num_groups, N, C)

    GP = groups_per_step or _choose_groups_per_step(num_groups, N, C, hidden)
    assert num_groups % GP == 0
    num_steps = num_groups // GP

    # fold attention scale (head_dim**-0.5) into the q columns of qkv W & b
    # (weight-sized op done once in the wrapper; removes per-head VALU mul)
    qkv_w_eff = params["qkv_w"].at[:, :C].multiply(scale)
    qkv_b_eff = params["qkv_b"].at[:, :C].multiply(scale)

    # optional bf16 storage for the matmul weights (DMA/VMEM + MXU throughput)
    def _w(w):
        return w.astype(matmul_dtype) if matmul_dtype is not None else w

    kernel = functools.partial(_crossformer_block_kernel,
                               num_heads=num_heads, matmul_dtype=matmul_dtype)

    token_spec = pl.BlockSpec((GP, N, C), lambda i: (i, 0, 0))

    def _const(shape):
        # grid-invariant (weight) block: same tile every step -> Pallas only
        # DMAs it once.  TODO(synk): pipeline_mode=pl.Buffered(1) would halve
        # the weight VMEM (no double buffer needed for an invariant block).
        return pl.BlockSpec(shape, lambda i: (0,) * len(shape))

    out_g = pl.pallas_call(
        kernel,
        out_shape=jax.ShapeDtypeStruct((num_groups, N, C), x.dtype),
        grid_spec=pltpu.PrefetchScalarGridSpec(
            num_scalar_prefetch=0,
            grid=(num_steps,),
            in_specs=[
                token_spec, token_spec,                            # xg, xs
                _const((1, C)), _const((1, C)),                    # norm1 gamma, beta
                _const((C, 3 * C)), _const((1, 3 * C)),            # qkv W, b (q cols pre-scaled)
                _const((C, C)), _const((1, C)),                    # proj W, b
                _const((1, C)), _const((1, C)),                    # norm2 gamma, beta
                _const((C, hidden)), _const((1, hidden)),          # fc1 W, b
                _const((hidden, C)), _const((1, C)),               # fc2 W, b
            ],
            out_specs=token_spec,
            scratch_shapes=[pltpu.VMEM((GP * N, C), jnp.float32)],  # attention ctx
        ),
        compiler_params=pltpu.CompilerParams(
            dimension_semantics=("parallel",),
            vmem_limit_bytes=_vmem_limit_bytes(),
        ),
    )(
        xg, xs,
        params["ln1_g"], params["ln1_b"],
        _w(qkv_w_eff), qkv_b_eff,
        _w(params["proj_w"]), params["proj_b"],
        params["ln2_g"], params["ln2_b"],
        _w(params["fc1_w"]), params["fc1_b"],
        _w(params["fc2_w"]), params["fc2_b"],
    )

    # --- ungroup: verbatim the torch permutes (including its H/W swap quirk) ---
    out = out_g.reshape(B, H // G, W // G, T // G, G, G, G, C)
    if lsda_flag == 0:
        out = out.transpose(0, 1, 3, 5, 2, 4, 6, 7).reshape(B, H, W, T, C)
    else:
        out = out.transpose(0, 4, 1, 5, 2, 6, 3, 7).reshape(B, H, W, T, C)
    return out.reshape(B, L, C)


def init_params(key, dim, num_heads, mlp_ratio=4.0, dtype=jnp.float32):
    """Deterministic synthetic parameters (shapes follow CrossFormerBlock.__init__).
    Weights stored (in, out): y = x @ W + b == torch Linear with W_t = W.T."""
    hidden = int(dim * mlp_ratio)
    ks = jax.random.split(key, 4)

    def w(k, shape):
        return 0.02 * jax.random.normal(k, shape, dtype)

    return {
        "ln1_g": jnp.ones((1, dim), dtype), "ln1_b": jnp.zeros((1, dim), dtype),
        "qkv_w": w(ks[0], (dim, 3 * dim)), "qkv_b": jnp.zeros((1, 3 * dim), dtype),
        "proj_w": w(ks[1], (dim, dim)), "proj_b": jnp.zeros((1, dim), dtype),
        "ln2_g": jnp.ones((1, dim), dtype), "ln2_b": jnp.zeros((1, dim), dtype),
        "fc1_w": w(ks[2], (dim, hidden)), "fc1_b": jnp.zeros((1, hidden), dtype),
        "fc2_w": w(ks[3], (hidden, dim)), "fc2_b": jnp.zeros((1, dim), dtype),
    }


def _reference_block(x, params, *, input_resolution, num_heads,
                     group_size=7, lsda_flag=0, mlp_ratio=4.0):
    """Plain-JAX transcription of the PyTorch CrossFormerBlock.forward."""
    H, W, T = input_resolution
    B, L, C = x.shape
    if min(input_resolution) <= group_size:
        lsda_flag = 0
        group_size = min(input_resolution)
    G = group_size
    N = G ** 3
    hd = C // num_heads
    scale = hd ** -0.5
    HP = jax.lax.Precision.HIGHEST

    def ln(a, g, b):
        mu = jnp.mean(a, -1, keepdims=True)
        v = jnp.mean((a - mu) ** 2, -1, keepdims=True)
        return (a - mu) / jnp.sqrt(v + _LN_EPS) * g + b

    shortcut = x
    xn = ln(x, params["ln1_g"][0], params["ln1_b"][0])
    x5 = xn.reshape(B, H, W, T, C)
    if lsda_flag == 0:
        xgr = x5.reshape(B, H // G, G, W // G, G, T // G, G, C).transpose(0, 1, 3, 5, 2, 4, 6, 7)
    else:
        xgr = x5.reshape(B, G, H // G, G, W // G, G, T // G, C).transpose(0, 2, 4, 6, 1, 3, 5, 7)
    xgr = xgr.reshape(-1, N, C)

    qkv = jnp.einsum('bnc,cf->bnf', xgr, params["qkv_w"], precision=HP) + params["qkv_b"][0]
    qkv = qkv.reshape(-1, N, 3, num_heads, hd).transpose(2, 0, 3, 1, 4)
    q, k, v = qkv[0] * scale, qkv[1], qkv[2]
    attn = jnp.einsum('bhnd,bhmd->bhnm', q, k, precision=HP)
    attn = jax.nn.softmax(attn, axis=-1)
    ctx = jnp.einsum('bhnm,bhmd->bhnd', attn, v, precision=HP)
    ctx = ctx.transpose(0, 2, 1, 3).reshape(-1, N, C)
    y = jnp.einsum('bnc,cd->bnd', ctx, params["proj_w"], precision=HP) + params["proj_b"][0]

    y = y.reshape(B, H // G, W // G, T // G, G, G, G, C)
    if lsda_flag == 0:
        y = y.transpose(0, 1, 3, 5, 2, 4, 6, 7).reshape(B, H, W, T, C)
    else:
        y = y.transpose(0, 4, 1, 5, 2, 6, 3, 7).reshape(B, H, W, T, C)
    y = y.reshape(B, L, C)

    x1 = shortcut + y
    xn2 = ln(x1, params["ln2_g"][0], params["ln2_b"][0])
    h1 = jnp.einsum('blc,cf->blf', xn2, params["fc1_w"], precision=HP) + params["fc1_b"][0]
    h1 = 0.5 * h1 * (1.0 + lax.erf(h1 * 0.7071067811865476))
    h2 = jnp.einsum('blf,fc->blc', h1, params["fc2_w"], precision=HP) + params["fc2_b"][0]
    return x1 + h2


if __name__ == "__main__":
    key = jax.random.PRNGKey(0)
    kx, kp = jax.random.split(key)

    # Small config consistent with the module: dim=32, heads=4,
    # input_resolution=(4,4,4) -> L=64; group_size=7 gets clamped to 4 and
    # lsda_flag forced to 0 inside the block (exactly like __init__).
    # B=4 -> 4 attention groups -> 2 groups per grid step, grid of 2.
    B, dim, num_heads = 4, 32, 4
    input_resolution = (4, 4, 4)
    L = input_resolution[0] * input_resolution[1] * input_resolution[2]

    x = jax.random.normal(kx, (B, L, dim), jnp.float32)
    params = init_params(kp, dim, num_heads, mlp_ratio=4.0)

    out = crossformer_block(x, params, input_resolution=input_resolution,
                            num_heads=num_heads, group_size=7, lsda_flag=0,
                            mlp_ratio=4.0)
    out = jax.block_until_ready(out)

    ref = _reference_block(x, params, input_resolution=input_resolution,
                           num_heads=num_heads, group_size=7, lsda_flag=0,
                           mlp_ratio=4.0)
    ref = jax.block_until_ready(ref)

    assert out.shape == (B, L, dim), out.shape
    assert bool(jnp.all(jnp.isfinite(out)))
    assert float(jnp.max(jnp.abs(out - ref))) < 5e-2
    print("KERNEL_OK")
</pallas_src>

<mosaic_0001>
module attributes {stable_mosaic.version = 11 : i64} {
  func.func @_crossformer_block_kernel(%arg0: i32, %arg1: memref<2x64x32xf32, #tpu.memory_space<vmem>>, %arg2: memref<2x64x32xf32, #tpu.memory_space<vmem>>, %arg3: memref<1x32xf32, #tpu.memory_space<vmem>>, %arg4: memref<1x32xf32, #tpu.memory_space<vmem>>, %arg5: memref<32x96xf32, #tpu.memory_space<vmem>>, %arg6: memref<1x96xf32, #tpu.memory_space<vmem>>, %arg7: memref<32x32xf32, #tpu.memory_space<vmem>>, %arg8: memref<1x32xf32, #tpu.memory_space<vmem>>, %arg9: memref<1x32xf32, #tpu.memory_space<vmem>>, %arg10: memref<1x32xf32, #tpu.memory_space<vmem>>, %arg11: memref<32x128xf32, #tpu.memory_space<vmem>>, %arg12: memref<1x128xf32, #tpu.memory_space<vmem>>, %arg13: memref<128x32xf32, #tpu.memory_space<vmem>>, %arg14: memref<1x32xf32, #tpu.memory_space<vmem>>, %arg15: memref<2x64x32xf32, #tpu.memory_space<vmem>>, %arg16: memref<128x32xf32, #tpu.memory_space<vmem>>) attributes {dimension_semantics = [#tpu.dimension_semantics<parallel>], iteration_bounds = array<i64: 2>, scalar_prefetch = 0 : i64, scratch_operands = 1 : i64, tpu.core_type = #tpu.core_type<tc>, window_params = [{transform_indices = @transform_0, window_bounds = array<i64: 2, 64, 32>}, {transform_indices = @transform_1, window_bounds = array<i64: 2, 64, 32>}, {pipeline_mode = #tpu.pipeline_mode<synchronous>, transform_indices = @transform_2, window_bounds = array<i64: 1, 32>}, {pipeline_mode = #tpu.pipeline_mode<synchronous>, transform_indices = @transform_3, window_bounds = array<i64: 1, 32>}, {pipeline_mode = #tpu.pipeline_mode<synchronous>, transform_indices = @transform_4, window_bounds = array<i64: 32, 96>}, {pipeline_mode = #tpu.pipeline_mode<synchronous>, transform_indices = @transform_5, window_bounds = array<i64: 1, 96>}, {pipeline_mode = #tpu.pipeline_mode<synchronous>, transform_indices = @transform_6, window_bounds = array<i64: 32, 32>}, {pipeline_mode = #tpu.pipeline_mode<synchronous>, transform_indices = @transform_7, window_bounds = array<i64: 1, 32>}, {pipeline_mode = #tpu.pipeline_mode<synchronous>, transform_indices = @transform_8, window_bounds = array<i64: 1, 32>}, {pipeline_mode = #tpu.pipeline_mode<synchronous>, transform_indices = @transform_9, window_bounds = array<i64: 1, 32>}, {pipeline_mode = #tpu.pipeline_mode<synchronous>, transform_indices = @transform_10, window_bounds = array<i64: 32, 128>}, {pipeline_mode = #tpu.pipeline_mode<synchronous>, transform_indices = @transform_11, window_bounds = array<i64: 1, 128>}, {pipeline_mode = #tpu.pipeline_mode<synchronous>, transform_indices = @transform_12, window_bounds = array<i64: 128, 32>}, {pipeline_mode = #tpu.pipeline_mode<synchronous>, transform_indices = @transform_13, window_bounds = array<i64: 1, 32>}, {transform_indices = @transform_14, window_bounds = array<i64: 2, 64, 32>}]} {
    %c0 = arith.constant 0 : index
    %c0_0 = arith.constant 0 : index
    %0 = vector.load %arg3[%c0, %c0_0] : memref<1x32xf32, #tpu.memory_space<vmem>>, vector<1x32xf32>
    %c0_1 = arith.constant 0 : index
    %c0_2 = arith.constant 0 : index
    %1 = vector.load %arg4[%c0_1, %c0_2] : memref<1x32xf32, #tpu.memory_space<vmem>>, vector<1x32xf32>
    %c0_3 = arith.constant 0 : index
    %c0_4 = arith.constant 0 : index
    %2 = vector.load %arg9[%c0_3, %c0_4] : memref<1x32xf32, #tpu.memory_space<vmem>>, vector<1x32xf32>
    %c0_5 = arith.constant 0 : index
    %c0_6 = arith.constant 0 : index
    %3 = vector.load %arg10[%c0_5, %c0_6] : memref<1x32xf32, #tpu.memory_space<vmem>>, vector<1x32xf32>
    %c0_7 = arith.constant 0 : index
    %c0_8 = arith.constant 0 : index
    %4 = vector.load %arg6[%c0_7, %c0_8] : memref<1x96xf32, #tpu.memory_space<vmem>>, vector<1x96xf32>
    %c0_9 = arith.constant 0 : index
    %c0_10 = arith.constant 0 : index
    %5 = vector.load %arg8[%c0_9, %c0_10] : memref<1x32xf32, #tpu.memory_space<vmem>>, vector<1x32xf32>
    %c0_11 = arith.constant 0 : index
    %c0_12 = arith.constant 0 : index
    %6 = vector.load %arg12[%c0_11, %c0_12] : memref<1x128xf32, #tpu.memory_space<vmem>>, vector<1x128xf32>
    %c0_13 = arith.constant 0 : index
    %c0_14 = arith.constant 0 : index
    %7 = vector.load %arg14[%c0_13, %c0_14] : memref<1x32xf32, #tpu.memory_space<vmem>>, vector<1x32xf32>
    %c0_15 = arith.constant 0 : index
    %c0_16 = arith.constant 0 : index
    %c0_17 = arith.constant 0 : index
    %8 = vector.load %arg1[%c0_15, %c0_16, %c0_17] : memref<2x64x32xf32, #tpu.memory_space<vmem>>, vector<2x64x32xf32>
    %9 = vector.shape_cast %8 : vector<2x64x32xf32> to vector<128x32xf32>
    %c0_18 = arith.constant 0 : index
    %c0_19 = arith.constant 0 : index
    %c0_20 = arith.constant 0 : index
    %10 = vector.load %arg2[%c0_18, %c0_19, %c0_20] : memref<2x64x32xf32, #tpu.memory_space<vmem>>, vector<2x64x32xf32>
    %11 = vector.shape_cast %10 : vector<2x64x32xf32> to vector<128x32xf32>
    %cst = arith.constant dense<0.000000e+00> : vector<128xf32>
    %12 = vector.multi_reduction <add>, %9, %cst [1] : vector<128x32xf32> to vector<128xf32>
    %13 = vector.shape_cast %12 : vector<128xf32> to vector<128x1xf32>
    %cst_21 = arith.constant 3.200000e+01 : f32
    %14 = vector.broadcast %cst_21 : f32 to vector<128x1xf32>
    %15 = arith.divf %13, %14 : vector<128x1xf32>
    %16 = vector.broadcast %15 : vector<128x1xf32> to vector<128x32xf32>
    %17 = arith.subf %9, %16 : vector<128x32xf32>
    %18 = arith.mulf %17, %17 : vector<128x32xf32>
    %cst_22 = arith.constant dense<0.000000e+00> : vector<128xf32>
    %19 = vector.multi_reduction <add>, %18, %cst_22 [1] : vector<128x32xf32> to vector<128xf32>
    %20 = vector.shape_cast %19 : vector<128xf32> to vector<128x1xf32>
    %cst_23 = arith.constant 3.200000e+01 : f32
    %21 = vector.broadcast %cst_23 : f32 to vector<128x1xf32>
    %22 = arith.divf %20, %21 : vector<128x1xf32>
    %cst_24 = arith.constant 9.99999974E-6 : f32
    %23 = vector.broadcast %cst_24 : f32 to vector<128x1xf32>
    %24 = arith.addf %22, %23 : vector<128x1xf32>
    %25 = math.rsqrt %24 : vector<128x1xf32>
    %26 = vector.broadcast %25 : vector<128x1xf32> to vector<128x32xf32>
    %27 = arith.mulf %17, %26 : vector<128x32xf32>
    %28 = vector.broadcast %0 : vector<1x32xf32> to vector<128x32xf32>
    %29 = arith.mulf %27, %28 : vector<128x32xf32>
    %30 = vector.broadcast %1 : vector<1x32xf32> to vector<128x32xf32>
    %31 = arith.addf %29, %30 : vector<128x32xf32>
    %c0_25 = arith.constant 0 : index
    %c0_26 = arith.constant 0 : index
    %32 = vector.load %arg5[%c0_25, %c0_26] : memref<32x96xf32, #tpu.memory_space<vmem>>, vector<32x96xf32>
    %cst_27 = arith.constant dense<0.000000e+00> : vector<128x96xf32>
    %33 = tpu.matmul %31, %32, %cst_27 {dimension_numbers = #tpu.dot_dimension_numbers<[1], [0], [0], [1], [0, 0, 1, 1], [], []>} : vector<128x32xf32>, vector<32x96xf32>, vector<128x96xf32> -> vector<128x96xf32>
    %34 = vector.broadcast %4 : vector<1x96xf32> to vector<128x96xf32>
    %35 = arith.addf %33, %34 : vector<128x96xf32>
    %36 = vector.shape_cast %35 : vector<128x96xf32> to vector<2x64x96xf32>
    %37 = vector.extract_strided_slice %36 {offsets = [0, 0, 0], sizes = [2, 64, 8], strides = [1, 1, 1]} : vector<2x64x96xf32> to vector<2x64x8xf32>
    %38 = vector.extract_strided_slice %36 {offsets = [0, 0, 32], sizes = [2, 64, 8], strides = [1, 1, 1]} : vector<2x64x96xf32> to vector<2x64x8xf32>
    %39 = vector.extract_strided_slice %36 {offsets = [0, 0, 64], sizes = [2, 64, 8], strides = [1, 1, 1]} : vector<2x64x96xf32> to vector<2x64x8xf32>
    "tpu.trace_start"() <{level = 10 : i32, message = "gnd,gmd->gnm"}> : () -> ()
    %cst_28 = arith.constant dense<0.000000e+00> : vector<2x64x64xf32>
    %40 = tpu.matmul %37, %38, %cst_28 {dimension_numbers = #tpu.dot_dimension_numbers<[2], [2], [1], [1], [0, 0, 0, 1, 1, 1], [0], [0]>} : vector<2x64x8xf32>, vector<2x64x8xf32>, vector<2x64x64xf32> -> vector<2x64x64xf32>
    "tpu.trace_stop"() : () -> ()
    %cst_29 = arith.constant dense<0xFF800000> : vector<2x64xf32>
    %41 = vector.multi_reduction <maximumf>, %40, %cst_29 [2] : vector<2x64x64xf32> to vector<2x64xf32>
    %42 = vector.shape_cast %41 : vector<2x64xf32> to vector<2x64x1xf32>
    %43 = vector.broadcast %42 : vector<2x64x1xf32> to vector<2x64x64xf32>
    %44 = arith.subf %40, %43 : vector<2x64x64xf32>
    %45 = math.exp %44 : vector<2x64x64xf32>
    %cst_30 = arith.constant dense<0.000000e+00> : vector<2x64xf32>
    %46 = vector.multi_reduction <add>, %45, %cst_30 [2] : vector<2x64x64xf32> to vector<2x64xf32>
    %47 = vector.shape_cast %46 : vector<2x64xf32> to vector<2x64x1xf32>
    %48 = tpu.reciprocal %47 {approx = true} : vector<2x64x1xf32> -> vector<2x64x1xf32>
    %49 = vector.broadcast %48 : vector<2x64x1xf32> to vector<2x64x64xf32>
    %50 = arith.mulf %45, %49 : vector<2x64x64xf32>
    "tpu.trace_start"() <{level = 10 : i32, message = "gnm,gmd->gnd"}> : () -> ()
    %cst_31 = arith.constant dense<0.000000e+00> : vector<2x64x8xf32>
    %51 = tpu.matmul %50, %39, %cst_31 {dimension_numbers = #tpu.dot_dimension_numbers<[2], [1], [1], [2], [0, 0, 0, 1, 1, 2], [0], [0]>} : vector<2x64x64xf32>, vector<2x64x8xf32>, vector<2x64x8xf32> -> vector<2x64x8xf32>
    "tpu.trace_stop"() : () -> ()
    %52 = vector.shape_cast %51 : vector<2x64x8xf32> to vector<128x8xf32>
    %c0_32 = arith.constant 0 : index
    %c0_33 = arith.constant 0 : index
    %53 = vector.load %arg16[%c0_32, %c0_33] : memref<128x32xf32, #tpu.memory_space<vmem>>, vector<128x8xf32>
    tpu.vector_store %arg16[%c0_32, %c0_33], %52 {strides = array<i32>} : memref<128x32xf32, #tpu.memory_space<vmem>>, vector<128x8xf32>,
    %54 = vector.extract_strided_slice %36 {offsets = [0, 0, 8], sizes = [2, 64, 8], strides = [1, 1, 1]} : vector<2x64x96xf32> to vector<2x64x8xf32>
    %55 = vector.extract_strided_slice %36 {offsets = [0, 0, 40], sizes = [2, 64, 8], strides = [1, 1, 1]} : vector<2x64x96xf32> to vector<2x64x8xf32>
    %56 = vector.extract_strided_slice %36 {offsets = [0, 0, 72], sizes = [2, 64, 8], strides = [1, 1, 1]} : vector<2x64x96xf32> to vector<2x64x8xf32>
    "tpu.trace_start"() <{level = 10 : i32, message = "gnd,gmd->gnm"}> : () -> ()
    %cst_34 = arith.constant dense<0.000000e+00> : vector<2x64x64xf32>
    %57 = tpu.matmul %54, %55, %cst_34 {dimension_numbers = #tpu.dot_dimension_numbers<[2], [2], [1], [1], [0, 0, 0, 1, 1, 1], [0], [0]>} : vector<2x64x8xf32>, vector<2x64x8xf32>, vector<2x64x64xf32> -> vector<2x64x64xf32>
    "tpu.trace_stop"() : () -> ()
    %cst_35 = arith.constant dense<0xFF800000> : vector<2x64xf32>
    %58 = vector.multi_reduction <maximumf>, %57, %cst_35 [2] : vector<2x64x64xf32> to vector<2x64xf32>
    %59 = vector.shape_cast %58 : vector<2x64xf32> to vector<2x64x1xf32>
    %60 = vector.broadcast %59 : vector<2x64x1xf32> to vector<2x64x64xf32>
    %61 = arith.subf %57, %60 : vector<2x64x64xf32>
    %62 = math.exp %61 : vector<2x64x64xf32>
    %cst_36 = arith.constant dense<0.000000e+00> : vector<2x64xf32>
    %63 = vector.multi_reduction <add>, %62, %cst_36 [2] : vector<2x64x64xf32> to vector<2x64xf32>
    %64 = vector.shape_cast %63 : vector<2x64xf32> to vector<2x64x1xf32>
    %65 = tpu.reciprocal %64 {approx = true} : vector<2x64x1xf32> -> vector<2x64x1xf32>
    %66 = vector.broadcast %65 : vector<2x64x1xf32> to vector<2x64x64xf32>
    %67 = arith.mulf %62, %66 : vector<2x64x64xf32>
    "tpu.trace_start"() <{level = 10 : i32, message = "gnm,gmd->gnd"}> : () -> ()
    %cst_37 = arith.constant dense<0.000000e+00> : vector<2x64x8xf32>
    %68 = tpu.matmul %67, %56, %cst_37 {dimension_numbers = #tpu.dot_dimension_numbers<[2], [1], [1], [2], [0, 0, 0, 1, 1, 2], [0], [0]>} : vector<2x64x64xf32>, vector<2x64x8xf32>, vector<2x64x8xf32> -> vector<2x64x8xf32>
    "tpu.trace_stop"() : () -> ()
    %69 = vector.shape_cast %68 : vector<2x64x8xf32> to vector<128x8xf32>
    %c0_38 = arith.constant 0 : index
    %c8 = arith.constant 8 : index
    %70 = vector.load %arg16[%c0_38, %c8] : memref<128x32xf32, #tpu.memory_space<vmem>>, vector<128x8xf32>
    tpu.vector_store %arg16[%c0_38, %c8], %69 {strides = array<i32>} : memref<128x32xf32, #tpu.memory_space<vmem>>, vector<128x8xf32>,
    %71 = vector.extract_strided_slice %36 {offsets = [0, 0, 16], sizes = [2, 64, 8], strides = [1, 1, 1]} : vector<2x64x96xf32> to vector<2x64x8xf32>
    %72 = vector.extract_strided_slice %36 {offsets = [0, 0, 48], sizes = [2, 64, 8], strides = [1, 1, 1]} : vector<2x64x96xf32> to vector<2x64x8xf32>
    %73 = vector.extract_strided_slice %36 {offsets = [0, 0, 80], sizes = [2, 64, 8], strides = [1, 1, 1]} : vector<2x64x96xf32> to vector<2x64x8xf32>
    "tpu.trace_start"() <{level = 10 : i32, message = "gnd,gmd->gnm"}> : () -> ()
    %cst_39 = arith.constant dense<0.000000e+00> : vector<2x64x64xf32>
    %74 = tpu.matmul %71, %72, %cst_39 {dimension_numbers = #tpu.dot_dimension_numbers<[2], [2], [1], [1], [0, 0, 0, 1, 1, 1], [0], [0]>} : vector<2x64x8xf32>, vector<2x64x8xf32>, vector<2x64x64xf32> -> vector<2x64x64xf32>
    "tpu.trace_stop"() : () -> ()
    %cst_40 = arith.constant dense<0xFF800000> : vector<2x64xf32>
    %75 = vector.multi_reduction <maximumf>, %74, %cst_40 [2] : vector<2x64x64xf32> to vector<2x64xf32>
    %76 = vector.shape_cast %75 : vector<2x64xf32> to vector<2x64x1xf32>
    %77 = vector.broadcast %76 : vector<2x64x1xf32> to vector<2x64x64xf32>
    %78 = arith.subf %74, %77 : vector<2x64x64xf32>
    %79 = math.exp %78 : vector<2x64x64xf32>
    %cst_41 = arith.constant dense<0.000000e+00> : vector<2x64xf32>
    %80 = vector.multi_reduction <add>, %79, %cst_41 [2] : vector<2x64x64xf32> to vector<2x64xf32>
    %81 = vector.shape_cast %80 : vector<2x64xf32> to vector<2x64x1xf32>
    %82 = tpu.reciprocal %81 {approx = true} : vector<2x64x1xf32> -> vector<2x64x1xf32>
    %83 = vector.broadcast %82 : vector<2x64x1xf32> to vector<2x64x64xf32>
    %84 = arith.mulf %79, %83 : vector<2x64x64xf32>
    "tpu.trace_start"() <{level = 10 : i32, message = "gnm,gmd->gnd"}> : () -> ()
    %cst_42 = arith.constant dense<0.000000e+00> : vector<2x64x8xf32>
    %85 = tpu.matmul %84, %73, %cst_42 {dimension_numbers = #tpu.dot_dimension_numbers<[2], [1], [1], [2], [0, 0, 0, 1, 1, 2], [0], [0]>} : vector<2x64x64xf32>, vector<2x64x8xf32>, vector<2x64x8xf32> -> vector<2x64x8xf32>
    "tpu.trace_stop"() : () -> ()
    %86 = vector.shape_cast %85 : vector<2x64x8xf32> to vector<128x8xf32>
    %c0_43 = arith.constant 0 : index
    %c16 = arith.constant 16 : index
    %87 = vector.load %arg16[%c0_43, %c16] : memref<128x32xf32, #tpu.memory_space<vmem>>, vector<128x8xf32>
    tpu.vector_store %arg16[%c0_43, %c16], %86 {strides = array<i32>} : memref<128x32xf32, #tpu.memory_space<vmem>>, vector<128x8xf32>,
    %88 = vector.extract_strided_slice %36 {offsets = [0, 0, 24], sizes = [2, 64, 8], strides = [1, 1, 1]} : vector<2x64x96xf32> to vector<2x64x8xf32>
    %89 = vector.extract_strided_slice %36 {offsets = [0, 0, 56], sizes = [2, 64, 8], strides = [1, 1, 1]} : vector<2x64x96xf32> to vector<2x64x8xf32>
    %90 = vector.extract_strided_slice %36 {offsets = [0, 0, 88], sizes = [2, 64, 8], strides = [1, 1, 1]} : vector<2x64x96xf32> to vector<2x64x8xf32>
    "tpu.trace_start"() <{level = 10 : i32, message = "gnd,gmd->gnm"}> : () -> ()
    %cst_44 = arith.constant dense<0.000000e+00> : vector<2x64x64xf32>
    %91 = tpu.matmul %88, %89, %cst_44 {dimension_numbers = #tpu.dot_dimension_numbers<[2], [2], [1], [1], [0, 0, 0, 1, 1, 1], [0], [0]>} : vector<2x64x8xf32>, vector<2x64x8xf32>, vector<2x64x64xf32> -> vector<2x64x64xf32>
    "tpu.trace_stop"() : () -> ()
    %cst_45 = arith.constant dense<0xFF800000> : vector<2x64xf32>
    %92 = vector.multi_reduction <maximumf>, %91, %cst_45 [2] : vector<2x64x64xf32> to vector<2x64xf32>
    %93 = vector.shape_cast %92 : vector<2x64xf32> to vector<2x64x1xf32>
    %94 = vector.broadcast %93 : vector<2x64x1xf32> to vector<2x64x64xf32>
    %95 = arith.subf %91, %94 : vector<2x64x64xf32>
    %96 = math.exp %95 : vector<2x64x64xf32>
    %cst_46 = arith.constant dense<0.000000e+00> : vector<2x64xf32>
    %97 = vector.multi_reduction <add>, %96, %cst_46 [2] : vector<2x64x64xf32> to vector<2x64xf32>
    %98 = vector.shape_cast %97 : vector<2x64xf32> to vector<2x64x1xf32>
    %99 = tpu.reciprocal %98 {approx = true} : vector<2x64x1xf32> -> vector<2x64x1xf32>
    %100 = vector.broadcast %99 : vector<2x64x1xf32> to vector<2x64x64xf32>
    %101 = arith.mulf %96, %100 : vector<2x64x64xf32>
    "tpu.trace_start"() <{level = 10 : i32, message = "gnm,gmd->gnd"}> : () -> ()
    %cst_47 = arith.constant dense<0.000000e+00> : vector<2x64x8xf32>
    %102 = tpu.matmul %101, %90, %cst_47 {dimension_numbers = #tpu.dot_dimension_numbers<[2], [1], [1], [2], [0, 0, 0, 1, 1, 2], [0], [0]>} : vector<2x64x64xf32>, vector<2x64x8xf32>, vector<2x64x8xf32> -> vector<2x64x8xf32>
    "tpu.trace_stop"() : () -> ()
    %103 = vector.shape_cast %102 : vector<2x64x8xf32> to vector<128x8xf32>
    %c0_48 = arith.constant 0 : index
    %c24 = arith.constant 24 : index
    %104 = vector.load %arg16[%c0_48, %c24] : memref<128x32xf32, #tpu.memory_space<vmem>>, vector<128x8xf32>
    tpu.vector_store %arg16[%c0_48, %c24], %103 {strides = array<i32>} : memref<128x32xf32, #tpu.memory_space<vmem>>, vector<128x8xf32>,
    %c0_49 = arith.constant 0 : index
    %c0_50 = arith.constant 0 : index
    %105 = vector.load %arg16[%c0_49, %c0_50] : memref<128x32xf32, #tpu.memory_space<vmem>>, vector<128x32xf32>
    %c0_51 = arith.constant 0 : index
    %c0_52 = arith.constant 0 : index
    %106 = vector.load %arg7[%c0_51, %c0_52] : memref<32x32xf32, #tpu.memory_space<vmem>>, vector<32x32xf32>
    %cst_53 = arith.constant dense<0.000000e+00> : vector<128x32xf32>
    %107 = tpu.matmul %105, %106, %cst_53 {dimension_numbers = #tpu.dot_dimension_numbers<[1], [0], [0], [1], [0, 0, 1, 1], [], []>} : vector<128x32xf32>, vector<32x32xf32>, vector<128x32xf32> -> vector<128x32xf32>
    %108 = vector.broadcast %5 : vector<1x32xf32> to vector<128x32xf32>
    %109 = arith.addf %107, %108 : vector<128x32xf32>
    %110 = arith.addf %11, %109 : vector<128x32xf32>
    %cst_54 = arith.constant dense<0.000000e+00> : vector<128xf32>
    %111 = vector.multi_reduction <add>, %110, %cst_54 [1] : vector<128x32xf32> to vector<128xf32>
    %112 = vector.shape_cast %111 : vector<128xf32> to vector<128x1xf32>
    %cst_55 = arith.constant 3.200000e+01 : f32
    %113 = vector.broadcast %cst_55 : f32 to vector<128x1xf32>
    %114 = arith.divf %112, %113 : vector<128x1xf32>
    %115 = vector.broadcast %114 : vector<128x1xf32> to vector<128x32xf32>
    %116 = arith.subf %110, %115 : vector<128x32xf32>
    %117 = arith.mulf %116, %116 : vector<128x32xf32>
    %cst_56 = arith.constant dense<0.000000e+00> : vector<128xf32>
    %118 = vector.multi_reduction <add>, %117, %cst_56 [1] : vector<128x32xf32> to vector<128xf32>
    %119 = vector.shape_cast %118 : vector<128xf32> to vector<128x1xf32>
    %cst_57 = arith.constant 3.200000e+01 : f32
    %120 = vector.broadcast %cst_57 : f32 to vector<128x1xf32>
    %121 = arith.divf %119, %120 : vector<128x1xf32>
    %cst_58 = arith.constant 9.99999974E-6 : f32
    %122 = vector.broadcast %cst_58 : f32 to vector<128x1xf32>
    %123 = arith.addf %121, %122 : vector<128x1xf32>
    %124 = math.rsqrt %123 : vector<128x1xf32>
    %125 = vector.broadcast %124 : vector<128x1xf32> to vector<128x32xf32>
    %126 = arith.mulf %116, %125 : vector<128x32xf32>
    %127 = vector.broadcast %2 : vector<1x32xf32> to vector<128x32xf32>
    %128 = arith.mulf %126, %127 : vector<128x32xf32>
    %129 = vector.broadcast %3 : vector<1x32xf32> to vector<128x32xf32>
    %130 = arith.addf %128, %129 : vector<128x32xf32>
    %c0_59 = arith.constant 0 : index
    %c0_60 = arith.constant 0 : index
    %131 = vector.load %arg11[%c0_59, %c0_60] : memref<32x128xf32, #tpu.memory_space<vmem>>, vector<32x128xf32>
    %cst_61 = arith.constant dense<0.000000e+00> : vector<128x128xf32>
    %132 = tpu.matmul %130, %131, %cst_61 {dimension_numbers = #tpu.dot_dimension_numbers<[1], [0], [0], [1], [0, 0, 1, 1], [], []>} : vector<128x32xf32>, vector<32x128xf32>, vector<128x128xf32> -> vector<128x128xf32>
    %133 = vector.broadcast %6 : vector<1x128xf32> to vector<128x128xf32>
    %134 = arith.addf %132, %133 : vector<128x128xf32>
    %cst_62 = arith.constant 5.000000e-01 : f32
    %135 = vector.broadcast %cst_62 : f32 to vector<128x128xf32>
    %136 = arith.mulf %135, %134 : vector<128x128xf32>
    %cst_63 = arith.constant 0.707106769 : f32
    %137 = vector.broadcast %cst_63 : f32 to vector<128x128xf32>
    %138 = arith.mulf %134, %137 : vector<128x128xf32>
    %cst_64 = arith.constant 0.000000e+00 : f32
    %139 = vector.broadcast %cst_64 : f32 to vector<128x128xf32>
    %140 = arith.cmpf oge, %138, %139 : vector<128x128xf32>
    %cst_65 = arith.constant 1.000000e+00 : f32
    %cst_66 = arith.constant -1.000000e+00 : f32
    %141 = vector.broadcast %cst_65 : f32 to vector<128x128xf32>
    %142 = vector.broadcast %cst_66 : f32 to vector<128x128xf32>
    %143 = arith.select %140, %141, %142 : vector<128x128xi1>, vector<128x128xf32>
    %144 = math.absf %138 : vector<128x128xf32>
    %cst_67 = arith.constant 0.327591091 : f32
    %145 = vector.broadcast %cst_67 : f32 to vector<128x128xf32>
    %146 = arith.mulf %145, %144 : vector<128x128xf32>
    %cst_68 = arith.constant 1.000000e+00 : f32
    %147 = vector.broadcast %cst_68 : f32 to vector<128x128xf32>
    %148 = arith.addf %147, %146 : vector<128x128xf32>
    %cst_69 = arith.constant 1.000000e+00 : f32
    %149 = vector.broadcast %cst_69 : f32 to vector<128x128xf32>
    %150 = arith.divf %149, %148 : vector<128x128xf32>
    %cst_70 = arith.constant 1.06140542 : f32
    %151 = vector.broadcast %cst_70 : f32 to vector<128x128xf32>
    %152 = arith.mulf %151, %150 : vector<128x128xf32>
    %cst_71 = arith.constant -1.45315206 : f32
    %153 = vector.broadcast %cst_71 : f32 to vector<128x128xf32>
    %154 = arith.addf %152, %153 : vector<128x128xf32>
    %155 = arith.mulf %154, %150 : vector<128x128xf32>
    %cst_72 = arith.constant 1.42141378 : f32
    %156 = vector.broadcast %cst_72 : f32 to vector<128x128xf32>
    %157 = arith.addf %155, %156 : vector<128x128xf32>
    %158 = arith.mulf %157, %150 : vector<128x128xf32>
    %cst_73 = arith.constant -0.284496725 : f32
    %159 = vector.broadcast %cst_73 : f32 to vector<128x128xf32>
    %160 = arith.addf %158, %159 : vector<128x128xf32>
    %161 = arith.mulf %160, %150 : vector<128x128xf32>
    %cst_74 = arith.constant 0.254829586 : f32
    %162 = vector.broadcast %cst_74 : f32 to vector<128x128xf32>
    %163 = arith.addf %161, %162 : vector<128x128xf32>
    %164 = arith.mulf %163, %150 : vector<128x128xf32>
    %cst_75 = arith.constant 0.000000e+00 : f32
    %165 = vector.broadcast %cst_75 : f32 to vector<128x128xf32>
    %166 = arith.subf %165, %144 : vector<128x128xf32>
    %167 = arith.mulf %166, %144 : vector<128x128xf32>
    %168 = math.exp %167 : vector<128x128xf32>
    %169 = arith.mulf %164, %168 : vector<128x128xf32>
    %cst_76 = arith.constant 1.000000e+00 : f32
    %170 = vector.broadcast %cst_76 : f32 to vector<128x128xf32>
    %171 = arith.subf %170, %169 : vector<128x128xf32>
    %172 = arith.mulf %143, %171 : vector<128x128xf32>
    %cst_77 = arith.constant 1.000000e+00 : f32
    %173 = vector.broadcast %cst_77 : f32 to vector<128x128xf32>
    %174 = arith.addf %173, %172 : vector<128x128xf32>
    %175 = arith.mulf %136, %174 : vector<128x128xf32>
    %c0_78 = arith.constant 0 : index
    %c0_79 = arith.constant 0 : index
    %176 = vector.load %arg13[%c0_78, %c0_79] : memref<128x32xf32, #tpu.memory_space<vmem>>, vector<128x32xf32>
    %cst_80 = arith.constant dense<0.000000e+00> : vector<128x32xf32>
    %177 = tpu.matmul %175, %176, %cst_80 {dimension_numbers = #tpu.dot_dimension_numbers<[1], [0], [0], [1], [0, 0, 1, 1], [], []>} : vector<128x128xf32>, vector<128x32xf32>, vector<128x32xf32> -> vector<128x32xf32>
    %178 = vector.broadcast %7 : vector<1x32xf32> to vector<128x32xf32>
    %179 = arith.addf %177, %178 : vector<128x32xf32>
    %180 = arith.addf %110, %179 : vector<128x32xf32>
    %181 = vector.shape_cast %180 : vector<128x32xf32> to vector<2x64x32xf32>
    %c0_81 = arith.constant 0 : index
    %c0_82 = arith.constant 0 : index
    %c0_83 = arith.constant 0 : index
    %182 = vector.load %arg15[%c0_81, %c0_82, %c0_83] : memref<2x64x32xf32, #tpu.memory_space<vmem>>, vector<2x64x32xf32>
    tpu.vector_store %arg15[%c0_81, %c0_82, %c0_83], %181 {strides = array<i32>} : memref<2x64x32xf32, #tpu.memory_space<vmem>>, vector<2x64x32xf32>,
    return
  }
  func.func @transform_0(%arg0: i32) -> (i32, i32, i32) {
    %c0_i32 = arith.constant 0 : i32
    %c0_i32_0 = arith.constant 0 : i32
    %c0_i32_1 = arith.constant 0 : i32
    return %arg0, %c0_i32, %c0_i32_0 : i32, i32, i32
  }
  func.func @transform_1(%arg0: i32) -> (i32, i32, i32) {
    %c0_i32 = arith.constant 0 : i32
    %c0_i32_0 = arith.constant 0 : i32
    %c0_i32_1 = arith.constant 0 : i32
    return %arg0, %c0_i32, %c0_i32_0 : i32, i32, i32
  }
  func.func @transform_2(%arg0: i32) -> (i32, i32) {
    %c0_i32 = arith.constant 0 : i32
    %c0_i32_0 = arith.constant 0 : i32
    %c0_i32_1 = arith.constant 0 : i32
    return %c0_i32, %c0_i32_0 : i32, i32
  }
  func.func @transform_3(%arg0: i32) -> (i32, i32) {
    %c0_i32 = arith.constant 0 : i32
    %c0_i32_0 = arith.constant 0 : i32
    %c0_i32_1 = arith.constant 0 : i32
    return %c0_i32, %c0_i32_0 : i32, i32
  }
  func.func @transform_4(%arg0: i32) -> (i32, i32) {
    %c0_i32 = arith.constant 0 : i32
    %c0_i32_0 = arith.constant 0 : i32
    %c0_i32_1 = arith.constant 0 : i32
    return %c0_i32, %c0_i32_0 : i32, i32
  }
  func.func @transform_5(%arg0: i32) -> (i32, i32) {
    %c0_i32 = arith.constant 0 : i32
    %c0_i32_0 = arith.constant 0 : i32
    %c0_i32_1 = arith.constant 0 : i32
    return %c0_i32, %c0_i32_0 : i32, i32
  }
  func.func @transform_6(%arg0: i32) -> (i32, i32) {
    %c0_i32 = arith.constant 0 : i32
    %c0_i32_0 = arith.constant 0 : i32
    %c0_i32_1 = arith.constant 0 : i32
    return %c0_i32, %c0_i32_0 : i32, i32
  }
  func.func @transform_7(%arg0: i32) -> (i32, i32) {
    %c0_i32 = arith.constant 0 : i32
    %c0_i32_0 = arith.constant 0 : i32
    %c0_i32_1 = arith.constant 0 : i32
    return %c0_i32, %c0_i32_0 : i32, i32
  }
  func.func @transform_8(%arg0: i32) -> (i32, i32) {
    %c0_i32 = arith.constant 0 : i32
    %c0_i32_0 = arith.constant 0 : i32
    %c0_i32_1 = arith.constant 0 : i32
    return %c0_i32, %c0_i32_0 : i32, i32
  }
  func.func @transform_9(%arg0: i32) -> (i32, i32) {
    %c0_i32 = arith.constant 0 : i32
    %c0_i32_0 = arith.constant 0 : i32
    %c0_i32_1 = arith.constant 0 : i32
    return %c0_i32, %c0_i32_0 : i32, i32
  }
  func.func @transform_10(%arg0: i32) -> (i32, i32) {
    %c0_i32 = arith.constant 0 : i32
    %c0_i32_0 = arith.constant 0 : i32
    %c0_i32_1 = arith.constant 0 : i32
    return %c0_i32, %c0_i32_0 : i32, i32
  }
  func.func @transform_11(%arg0: i32) -> (i32, i32) {
    %c0_i32 = arith.constant 0 : i32
    %c0_i32_0 = arith.constant 0 : i32
    %c0_i32_1 = arith.constant 0 : i32
    return %c0_i32, %c0_i32_0 : i32, i32
  }
  func.func @transform_12(%arg0: i32) -> (i32, i32) {
    %c0_i32 = arith.constant 0 : i32
    %c0_i32_0 = arith.constant 0 : i32
    %c0_i32_1 = arith.constant 0 : i32
    return %c0_i32, %c0_i32_0 : i32, i32
  }
  func.func @transform_13(%arg0: i32) -> (i32, i32) {
    %c0_i32 = arith.constant 0 : i32
    %c0_i32_0 = arith.constant 0 : i32
    %c0_i32_1 = arith.constant 0 : i32
    return %c0_i32, %c0_i32_0 : i32, i32
  }
  func.func @transform_14(%arg0: i32) -> (i32, i32, i32) {
    %c0_i32 = arith.constant 0 : i32
    %c0_i32_0 = arith.constant 0 : i32
    %c0_i32_1 = arith.constant 0 : i32
    return %arg0, %c0_i32, %c0_i32_0 : i32, i32, i32
  }
}

</mosaic_0001>

<llo_original>
// kernel: tpu_custom_call.1
$region0: #{tpu_custom_call.1}
  #allocation0 [shape = 'u32[]', space=smem, size = 0x4, offset = 0x4, fixed_abs, tag = 'smem constant byte address 0x4 - core index']
  #allocation1 [shape = 'u32[144,128]{1,0:T(1,128)}', space=vmem, size = 0x12000, scoped, tag = 'internal scratch']
  #allocation2 [shape = 'f32[128,32]{1,0:T(8,128)}', space=vmem, size = 0x10000, scoped, tag = 'scratch operand']
  %s0 = inlined_call_operand.hbm [shape: f32[4,64,32], index: 0, kind: input, shape index: {}]
  %s1 = inlined_call_operand.hbm [shape: f32[4,64,32], index: 1, kind: input, shape index: {}]
  %s2 = inlined_call_operand.hbm [shape: f32[1,32], index: 2, kind: input, shape index: {}]
  %s3 = inlined_call_operand.hbm [shape: f32[1,32], index: 3, kind: input, shape index: {}]
  %s4 = inlined_call_operand.hbm [shape: f32[32,96], index: 4, kind: input, shape index: {}]
  %s5 = inlined_call_operand.hbm [shape: f32[1,96], index: 5, kind: input, shape index: {}]
  %s6 = inlined_call_operand.hbm [shape: f32[32,32], index: 6, kind: input, shape index: {}]
  %s7 = inlined_call_operand.hbm [shape: f32[1,32], index: 7, kind: input, shape index: {}]
  %s8 = inlined_call_operand.hbm [shape: f32[1,32], index: 8, kind: input, shape index: {}]
  %s9 = inlined_call_operand.hbm [shape: f32[1,32], index: 9, kind: input, shape index: {}]
  %s10 = inlined_call_operand.hbm [shape: f32[32,128], index: 10, kind: input, shape index: {}]
  %s11 = inlined_call_operand.hbm [shape: f32[1,128], index: 11, kind: input, shape index: {}]
  %s12 = inlined_call_operand.hbm [shape: f32[128,32], index: 12, kind: input, shape index: {}]
  %s13 = inlined_call_operand.hbm [shape: f32[1,32], index: 13, kind: input, shape index: {}]
  %s14 = inlined_call_operand.hbm [shape: f32[4,64,32], index: 14, kind: output, shape index: {}]
  %s15 = sld [smem:[#allocation0]]
  $region145: #{tpu_custom_call.1} parent=0
    _
  %s17 = ssub.s32 1, %s15
  %s18 = scalar_select 0, %s17, %s15
  $region1: #{tpu_custom_call.1} parent=0
    #allocation3 [shape = 'u8[131072]{0}', space=vmem, size = 0x20000, scoped, tag = 'input window, operand 0']
    #allocation4 [shape = 's32[2]{0}', space=sflag, size = 0x8, scoped, tag = 'scoped memory for tpu_custom_call.1']
    #allocation5 [shape = 's32[2]{0}', space=sflag, size = 0x8, scoped, tag = 'scoped memory for tpu_custom_call.1']
    #allocation6 [shape = 'u8[131072]{0}', space=vmem, size = 0x20000, scoped, tag = 'input window, operand 1']
    #allocation7 [shape = 's32[2]{0}', space=sflag, size = 0x8, scoped, tag = 'scoped memory for tpu_custom_call.1']
    #allocation8 [shape = 'u8[512]{0}', space=vmem, size = 0x400, scoped, tag = 'input window, operand 2, single buffered']
    #allocation9 [shape = 'u8[512]{0}', space=vmem, size = 0x400, scoped, tag = 'input window, operand 3, single buffered']
    #allocation10 [shape = 's32[1]{0}', space=sflag, size = 0x4, scoped, tag = 'scoped memory for tpu_custom_call.1']
    #allocation11 [shape = 'u8[16384]{0}', space=vmem, size = 0x4000, scoped, tag = 'input window, operand 4, single buffered']
    #allocation12 [shape = 'u8[512]{0}', space=vmem, size = 0x400, scoped, tag = 'input window, operand 5, single buffered']
    #allocation13 [shape = 's32[1]{0}', space=sflag, size = 0x4, scoped, tag = 'scoped memory for tpu_custom_call.1']
    #allocation14 [shape = 'u8[16384]{0}', space=vmem, size = 0x4000, scoped, tag = 'input window, operand 6, single buffered']
    #allocation15 [shape = 'u8[512]{0}', space=vmem, size = 0x400, scoped, tag = 'input window, operand 7, single buffered']
    #allocation16 [shape = 's32[1]{0}', space=sflag, size = 0x4, scoped, tag = 'scoped memory for tpu_custom_call.1']
    #allocation17 [shape = 'u8[512]{0}', space=vmem, size = 0x400, scoped, tag = 'input window, operand 8, single buffered']
    #allocation18 [shape = 'u8[512]{0}', space=vmem, size = 0x400, scoped, tag = 'input window, operand 9, single buffered']
    #allocation19 [shape = 's32[1]{0}', space=sflag, size = 0x4, scoped, tag = 'scoped memory for tpu_custom_call.1']
    #allocation20 [shape = 'u8[16384]{0}', space=vmem, size = 0x4000, scoped, tag = 'input window, operand 10, single buffered']
    #allocation21 [shape = 'u8[512]{0}', space=vmem, size = 0x400, scoped, tag = 'input window, operand 11, single buffered']
    #allocation22 [shape = 's32[1]{0}', space=sflag, size = 0x4, scoped, tag = 'scoped memory for tpu_custom_call.1']
    #allocation23 [shape = 'u8[65536]{0}', space=vmem, size = 0x10000, scoped, tag = 'input window, operand 12, single buffered']
    #allocation24 [shape = 'u8[512]{0}', space=vmem, size = 0x400, scoped, tag = 'input window, operand 13, single buffered']
    #allocation25 [shape = 's32[1]{0}', space=sflag, size = 0x4, scoped, tag = 'scoped memory for tpu_custom_call.1']
    #allocation26 [shape = 'u8[131072]{0}', space=vmem, size = 0x20000, scoped, tag = 'output window, operand 0']
    %19 = vsyncpa [#allocation4], 0
    %s20 = scalar_lea.sflag [#allocation4], 1
    %21 = vsyncpa %s20, 0
    %22 = vsyncpa [#allocation7], 0
    %s23 = scalar_lea.sflag [#allocation7], 1
    %24 = vsyncpa %s23, 0
    %25 = vsyncpa [#allocation10], 0
    %26 = vsyncpa [#allocation13], 0
    %27 = vsyncpa [#allocation16], 0
    %28 = vsyncpa [#allocation19], 0
    %29 = vsyncpa [#allocation22], 0
    %30 = vsyncpa [#allocation25], 0
    %31 = vsyncpa [#allocation5], 0
    %s32 = scalar_lea.sflag [#allocation5], 1
    %33 = vsyncpa %s32, 0
    loop: start=0, step=1, limit=4
    $region2: #{tpu_custom_call.1} parent=1 // loop_pre_header
      _
    $region3: #{tpu_custom_call.1} parent=1 // loop_header
      %s35 = sphi 0, %s39
      %p36 = scmp.ge.s32.totalorder %s35, 4
      %s45 = sphi 0, %s47
      %s48 = sphi 0, %s45
      %s49 = sphi 0, %s48
      %s65 = sphi 0, %s49
      %s71 = sphi 0, %s73
      %s74 = sphi 0, %s71
      %s75 = sphi 0, %s74
      %s91 = sphi 0, %s75
      %s95 = sphi 0, %s95
      %s97 = sphi 0, %s95
      %s98 = sphi 0, %s97
      %s112 = sphi 0, %s98
      %s116 = sphi 0, %s116
      %s118 = sphi 0, %s116
      %s119 = sphi 0, %s118
      %s133 = sphi 0, %s119
      %s137 = sphi 0, %s137
      %s139 = sphi 0, %s137
      %s140 = sphi 0, %s139
      %s154 = sphi 0, %s140
      %s158 = sphi 0, %s158
      %s160 = sphi 0, %s158
      %s161 = sphi 0, %s160
      %s175 = sphi 0, %s161
      %s179 = sphi 0, %s179
      %s181 = sphi 0, %s179
      %s182 = sphi 0, %s181
      %s196 = sphi 0, %s182
      %s200 = sphi 0, %s200
      %s202 = sphi 0, %s200
      %s203 = sphi 0, %s202
      %s217 = sphi 0, %s203
      %s221 = sphi 0, %s221
      %s223 = sphi 0, %s221
      %s224 = sphi 0, %s223
      %s238 = sphi 0, %s224
      %s242 = sphi 0, %s242
      %s244 = sphi 0, %s242
      %s245 = sphi 0, %s244
      %s259 = sphi 0, %s245
      %s263 = sphi 0, %s263
      %s265 = sphi 0, %s263
      %s266 = sphi 0, %s265
      %s280 = sphi 0, %s266
      %s284 = sphi 0, %s284
      %s286 = sphi 0, %s284
      %s287 = sphi 0, %s286
      %s301 = sphi 0, %s287
      %s305 = sphi 0, %s305
      %s307 = sphi 0, %s305
      %s308 = sphi 0, %s307
      %s322 = sphi 0, %s308
      %s326 = sphi 0, %s326
      %s328 = sphi 0, %s326
      %s329 = sphi 0, %s328
      %s343 = sphi 0, %s329
      %s349 = sphi 0, %s351
      %s352 = sphi 0, %s349
      %s353 = sphi 0, %s352
      %s369 = sphi 0, %s353
    $region4: #{tpu_custom_call.1} parent=1 // loop_header_branch
      %38 = sbr.rel (%p36) target = $region8
    $region5: #{tpu_custom_call.1} parent=1 // loop_body
      %s40 = ssub.s32 %s35, 1
      %s41 = ssub.s32 %s35, 2
      %s42 = sadd.s32 %s35, 1
      %s43 = ssub.s32 %s35, %s42
      %p44 = scmp.eq.s32.totalorder %s43, 0
      %s46 = sadd.s32 %s45, 1
      %s47 = scalar_select %p44, %s45, %s46
      %p50 = pneg %p44
      %p51 = scmp.eq.s32.totalorder %s35, 1
      %p52 = por %p50, %p51
      %p53 = scmp.ne.s32.totalorder %s45, %s48
      %p54 = scmp.eq.s32.totalorder %s35, 0
      %p55 = por %p53, %p54
      %p56 = scmp.ne.s32.totalorder %s45, %s48
      %p57 = scmp.eq.s32.totalorder %s40, 1
      %p58 = por %p56, %p57
      %p59 = scmp.ne.s32.totalorder %s48, %s49
      %p60 = scmp.eq.s32.totalorder %s40, 0
      %p61 = por %p59, %p60
      %p62 = scmp.ne.s32.totalorder %s48, %s49
      %p63 = scmp.eq.s32.totalorder %s41, 1
      %p64 = por %p62, %p63
      %p66 = scmp.ne.s32.totalorder %s49, %s65
      %p67 = scmp.eq.s32.totalorder %s41, 0
      %p68 = por %p66, %p67
      %s69 = ssub.s32 %s35, %s42
      %p70 = scmp.eq.s32.totalorder %s69, 0
      %s72 = sadd.s32 %s71, 1
      %s73 = scalar_select %p70, %s71, %s72
      %p76 = pneg %p70
      %p77 = scmp.eq.s32.totalorder %s35, 1
      %p78 = por %p76, %p77
      %p79 = scmp.ne.s32.totalorder %s71, %s74
      %p80 = scmp.eq.s32.totalorder %s35, 0
      %p81 = por %p79, %p80
      %p82 = scmp.ne.s32.totalorder %s71, %s74
      %p83 = scmp.eq.s32.totalorder %s40, 1
      %p84 = por %p82, %p83
      %p85 = scmp.ne.s32.totalorder %s74, %s75
      %p86 = scmp.eq.s32.totalorder %s40, 0
      %p87 = por %p85, %p86
      %p88 = scmp.ne.s32.totalorder %s74, %s75
      %p89 = scmp.eq.s32.totalorder %s41, 1
      %p90 = por %p88, %p89
      %p92 = scmp.ne.s32.totalorder %s75, %s91
      %p93 = scmp.eq.s32.totalorder %s41, 0
      %p94 = por %p92, %p93
      %s96 = sadd.s32 %s95, 1
      %p99 = scmp.eq.s32.totalorder %s35, 1
      %p100 = scmp.ne.s32.totalorder %s95, %s97
      %p101 = scmp.eq.s32.totalorder %s35, 0
      %p102 = por %p100, %p101
      %p103 = scmp.ne.s32.totalorder %s95, %s97
      %p104 = scmp.eq.s32.totalorder %s40, 1
      %p105 = por %p103, %p104
      %p106 = scmp.ne.s32.totalorder %s97, %s98
      %p107 = scmp.eq.s32.totalorder %s40, 0
      %p108 = por %p106, %p107
      %p109 = scmp.ne.s32.totalorder %s97, %s98
      %p110 = scmp.eq.s32.totalorder %s41, 1
      %p111 = por %p109, %p110
      %p113 = scmp.ne.s32.totalorder %s98, %s112
      %p114 = scmp.eq.s32.totalorder %s41, 0
      %p115 = por %p113, %p114
      %s117 = sadd.s32 %s116, 1
      %p120 = scmp.eq.s32.totalorder %s35, 1
      %p121 = scmp.ne.s32.totalorder %s116, %s118
      %p122 = scmp.eq.s32.totalorder %s35, 0
      %p123 = por %p121, %p122
      %p124 = scmp.ne.s32.totalorder %s116, %s118
      %p125 = scmp.eq.s32.totalorder %s40, 1
      %p126 = por %p124, %p125
      %p127 = scmp.ne.s32.totalorder %s118, %s119
      %p128 = scmp.eq.s32.totalorder %s40, 0
      %p129 = por %p127, %p128
      %p130 = scmp.ne.s32.totalorder %s118, %s119
      %p131 = scmp.eq.s32.totalorder %s41, 1
      %p132 = por %p130, %p131
      %p134 = scmp.ne.s32.totalorder %s119, %s133
      %p135 = scmp.eq.s32.totalorder %s41, 0
      %p136 = por %p134, %p135
      %s138 = sadd.s32 %s137, 1
      %p141 = scmp.eq.s32.totalorder %s35, 1
      %p142 = scmp.ne.s32.totalorder %s137, %s139
      %p143 = scmp.eq.s32.totalorder %s35, 0
      %p144 = por %p142, %p143
      %p145 = scmp.ne.s32.totalorder %s137, %s139
      %p146 = scmp.eq.s32.totalorder %s40, 1
      %p147 = por %p145, %p146
      %p148 = scmp.ne.s32.totalorder %s139, %s140
      %p149 = scmp.eq.s32.totalorder %s40, 0
      %p150 = por %p148, %p149
      %p151 = scmp.ne.s32.totalorder %s139, %s140
      %p152 = scmp.eq.s32.totalorder %s41, 1
      %p153 = por %p151, %p152
      %p155 = scmp.ne.s32.totalorder %s140, %s154
      %p156 = scmp.eq.s32.totalorder %s41, 0
      %p157 = por %p155, %p156
      %s159 = sadd.s32 %s158, 1
      %p162 = scmp.eq.s32.totalorder %s35, 1
      %p163 = scmp.ne.s32.totalorder %s158, %s160
      %p164 = scmp.eq.s32.totalorder %s35, 0
      %p165 = por %p163, %p164
      %p166 = scmp.ne.s32.totalorder %s158, %s160
      %p167 = scmp.eq.s32.totalorder %s40, 1
      %p168 = por %p166, %p167
      %p169 = scmp.ne.s32.totalorder %s160, %s161
      %p170 = scmp.eq.s32.totalorder %s40, 0
      %p171 = por %p169, %p170
      %p172 = scmp.ne.s32.totalorder %s160, %s161
      %p173 = scmp.eq.s32.totalorder %s41, 1
      %p174 = por %p172, %p173
      %p176 = scmp.ne.s32.totalorder %s161, %s175
      %p177 = scmp.eq.s32.totalorder %s41, 0
      %p178 = por %p176, %p177
      %s180 = sadd.s32 %s179, 1
      %p183 = scmp.eq.s32.totalorder %s35, 1
      %p184 = scmp.ne.s32.totalorder %s179, %s181
      %p185 = scmp.eq.s32.totalorder %s35, 0
      %p186 = por %p184, %p185
      %p187 = scmp.ne.s32.totalorder %s179, %s181
      %p188 = scmp.eq.s32.totalorder %s40, 1
      %p189 = por %p187, %p188
      %p190 = scmp.ne.s32.totalorder %s181, %s182
      %p191 = scmp.eq.s32.totalorder %s40, 0
      %p192 = por %p190, %p191
      %p193 = scmp.ne.s32.totalorder %s181, %s182
      %p194 = scmp.eq.s32.totalorder %s41, 1
      %p195 = por %p193, %p194
      %p197 = scmp.ne.s32.totalorder %s182, %s196
      %p198 = scmp.eq.s32.totalorder %s41, 0
      %p199 = por %p197, %p198
      %s201 = sadd.s32 %s200, 1
      %p204 = scmp.eq.s32.totalorder %s35, 1
      %p205 = scmp.ne.s32.totalorder %s200, %s202
      %p206 = scmp.eq.s32.totalorder %s35, 0
      %p207 = por %p205, %p206
      %p208 = scmp.ne.s32.totalorder %s200, %s202
      %p209 = scmp.eq.s32.totalorder %s40, 1
      %p210 = por %p208, %p209
      %p211 = scmp.ne.s32.totalorder %s202, %s203
      %p212 = scmp.eq.s32.totalorder %s40, 0
      %p213 = por %p211, %p212
      %p214 = scmp.ne.s32.totalorder %s202, %s203
      %p215 = scmp.eq.s32.totalorder %s41, 1
      %p216 = por %p214, %p215
      %p218 = scmp.ne.s32.totalorder %s203, %s217
      %p219 = scmp.eq.s32.totalorder %s41, 0
      %p220 = por %p218, %p219
      %s222 = sadd.s32 %s221, 1
      %p225 = scmp.eq.s32.totalorder %s35, 1
      %p226 = scmp.ne.s32.totalorder %s221, %s223
      %p227 = scmp.eq.s32.totalorder %s35, 0
      %p228 = por %p226, %p227
      %p229 = scmp.ne.s32.totalorder %s221, %s223
      %p230 = scmp.eq.s32.totalorder %s40, 1
      %p231 = por %p229, %p230
      %p232 = scmp.ne.s32.totalorder %s223, %s224
      %p233 = scmp.eq.s32.totalorder %s40, 0
      %p234 = por %p232, %p233
      %p235 = scmp.ne.s32.totalorder %s223, %s224
      %p236 = scmp.eq.s32.totalorder %s41, 1
      %p237 = por %p235, %p236
      %p239 = scmp.ne.s32.totalorder %s224, %s238
      %p240 = scmp.eq.s32.totalorder %s41, 0
      %p241 = por %p239, %p240
      %s243 = sadd.s32 %s242, 1
      %p246 = scmp.eq.s32.totalorder %s35, 1
      %p247 = scmp.ne.s32.totalorder %s242, %s244
      %p248 = scmp.eq.s32.totalorder %s35, 0
      %p249 = por %p247, %p248
      %p250 = scmp.ne.s32.totalorder %s242, %s244
      %p251 = scmp.eq.s32.totalorder %s40, 1
      %p252 = por %p250, %p251
      %p253 = scmp.ne.s32.totalorder %s244, %s245
      %p254 = scmp.eq.s32.totalorder %s40, 0
      %p255 = por %p253, %p254
      %p256 = scmp.ne.s32.totalorder %s244, %s245
      %p257 = scmp.eq.s32.totalorder %s41, 1
      %p258 = por %p256, %p257
      %p260 = scmp.ne.s32.totalorder %s245, %s259
      %p261 = scmp.eq.s32.totalorder %s41, 0
      %p262 = por %p260, %p261
      %s264 = sadd.s32 %s263, 1
      %p267 = scmp.eq.s32.totalorder %s35, 1
      %p268 = scmp.ne.s32.totalorder %s263, %s265
      %p269 = scmp.eq.s32.totalorder %s35, 0
      %p270 = por %p268, %p269
      %p271 = scmp.ne.s32.totalorder %s263, %s265
      %p272 = scmp.eq.s32.totalorder %s40, 1
      %p273 = por %p271, %p272
      %p274 = scmp.ne.s32.totalorder %s265, %s266
      %p275 = scmp.eq.s32.totalorder %s40, 0
      %p276 = por %p274, %p275
      %p277 = scmp.ne.s32.totalorder %s265, %s266
      %p278 = scmp.eq.s32.totalorder %s41, 1
      %p279 = por %p277, %p278
      %p281 = scmp.ne.s32.totalorder %s266, %s280
      %p282 = scmp.eq.s32.totalorder %s41, 0
      %p283 = por %p281, %p282
      %s285 = sadd.s32 %s284, 1
      %p288 = scmp.eq.s32.totalorder %s35, 1
      %p289 = scmp.ne.s32.totalorder %s284, %s286
      %p290 = scmp.eq.s32.totalorder %s35, 0
      %p291 = por %p289, %p290
      %p292 = scmp.ne.s32.totalorder %s284, %s286
      %p293 = scmp.eq.s32.totalorder %s40, 1
      %p294 = por %p292, %p293
      %p295 = scmp.ne.s32.totalorder %s286, %s287
      %p296 = scmp.eq.s32.totalorder %s40, 0
      %p297 = por %p295, %p296
      %p298 = scmp.ne.s32.totalorder %s286, %s287
      %p299 = scmp.eq.s32.totalorder %s41, 1
      %p300 = por %p298, %p299
      %p302 = scmp.ne.s32.totalorder %s287, %s301
      %p303 = scmp.eq.s32.totalorder %s41, 0
      %p304 = por %p302, %p303
      %s306 = sadd.s32 %s305, 1
      %p309 = scmp.eq.s32.totalorder %s35, 1
      %p310 = scmp.ne.s32.totalorder %s305, %s307
      %p311 = scmp.eq.s32.totalorder %s35, 0
      %p312 = por %p310, %p311
      %p313 = scmp.ne.s32.totalorder %s305, %s307
      %p314 = scmp.eq.s32.totalorder %s40, 1
      %p315 = por %p313, %p314
      %p316 = scmp.ne.s32.totalorder %s307, %s308
      %p317 = scmp.eq.s32.totalorder %s40, 0
      %p318 = por %p316, %p317
      %p319 = scmp.ne.s32.totalorder %s307, %s308
      %p320 = scmp.eq.s32.totalorder %s41, 1
      %p321 = por %p319, %p320
      %p323 = scmp.ne.s32.totalorder %s308, %s322
      %p324 = scmp.eq.s32.totalorder %s41, 0
      %p325 = por %p323, %p324
      %s327 = sadd.s32 %s326, 1
      %p330 = scmp.eq.s32.totalorder %s35, 1
      %p331 = scmp.ne.s32.totalorder %s326, %s328
      %p332 = scmp.eq.s32.totalorder %s35, 0
      %p333 = por %p331, %p332
      %p334 = scmp.ne.s32.totalorder %s326, %s328
      %p335 = scmp.eq.s32.totalorder %s40, 1
      %p336 = por %p334, %p335
      %p337 = scmp.ne.s32.totalorder %s328, %s329
      %p338 = scmp.eq.s32.totalorder %s40, 0
      %p339 = por %p337, %p338
      %p340 = scmp.ne.s32.totalorder %s328, %s329
      %p341 = scmp.eq.s32.totalorder %s41, 1
      %p342 = por %p340, %p341
      %p344 = scmp.ne.s32.totalorder %s329, %s343
      %p345 = scmp.eq.s32.totalorder %s41, 0
      %p346 = por %p344, %p345
      %s347 = ssub.s32 %s35, %s42
      %p348 = scmp.eq.s32.totalorder %s347, 0
      %s350 = sadd.s32 %s349, 1
      %s351 = scalar_select %p348, %s349, %s350
      %p354 = pneg %p348
      %p355 = scmp.eq.s32.totalorder %s35, 1
      %p356 = por %p354, %p355
      %p357 = scmp.ne.s32.totalorder %s349, %s352
      %p358 = scmp.eq.s32.totalorder %s35, 0
      %p359 = por %p357, %p358
      %p360 = scmp.ne.s32.totalorder %s349, %s352
      %p361 = scmp.eq.s32.totalorder %s40, 1
      %p362 = por %p360, %p361
      %p363 = scmp.ne.s32.totalorder %s352, %s353
      %p364 = scmp.eq.s32.totalorder %s40, 0
      %p365 = por %p363, %p364
      %p366 = scmp.ne.s32.totalorder %s352, %s353
      %p367 = scmp.eq.s32.totalorder %s41, 1
      %p368 = por %p366, %p367
      %p370 = scmp.ne.s32.totalorder %s353, %s369
      %p371 = scmp.eq.s32.totalorder %s41, 0
      %p372 = por %p370, %p371
      %p373 = scmp.le.s32.totalorder 1, %s35
      %p374 = scmp.lt.s32.totalorder %s35, 3
      %p375 = pnand %p373, %p374
      %p376 = pneg %p375
      // Predicated region
      $region9: #{tpu_custom_call.1} parent=5 // pred_check
        _
      $region10: #{tpu_custom_call.1} parent=5 // pred_check_branch
        %378 = sbr.rel (%p375) target = $region12
      $region11: #{tpu_custom_call.1} parent=5 // pred_region
        %s379 = ssub.s32 %s35, 1
        // Predicated region
        $region13: #{tpu_custom_call.1} parent=11 // pred_check
          %p380 = pneg %p108
        $region14: #{tpu_custom_call.1} parent=11 // pred_check_branch
          %382 = sbr.rel (%p380) target = $region16
        $region15: #{tpu_custom_call.1} parent=11 // pred_region
          %s384 = ssub.s32 16, 16
          %385 = vsyncadd [#allocation7], %s384
          %s387 = sshll.u32 [#allocation8], 4
          %s388 = int_to_ptr.vmem [resolvable:$true] %s387
          %390 = dma.hbm_to_vmem [thread:$0]  %s2, 16, %s388, [#allocation7]
        $region16: #{tpu_custom_call.1} parent=11 // pred_fallthru
          _
        // Predicated region
        $region17: #{tpu_custom_call.1} parent=11 // pred_check
          %p391 = pneg %p129
        $region18: #{tpu_custom_call.1} parent=11 // pred_check_branch
          %393 = sbr.rel (%p391) target = $region20
        $region19: #{tpu_custom_call.1} parent=11 // pred_region
          %s395 = ssub.s32 16, 16
          %396 = vsyncadd [#allocation10], %s395
          %s398 = sshll.u32 [#allocation9], 4
          %s399 = int_to_ptr.vmem [resolvable:$true] %s398
          %401 = dma.hbm_to_vmem [thread:$0]  %s3, 16, %s399, [#allocation10]
        $region20: #{tpu_custom_call.1} parent=11 // pred_fallthru
          _
        // Predicated region
        $region21: #{tpu_custom_call.1} parent=11 // pred_check
          %p402 = pneg %p150
        $region22: #{tpu_custom_call.1} parent=11 // pred_check_branch
          %404 = sbr.rel (%p402) target = $region24
        $region23: #{tpu_custom_call.1} parent=11 // pred_region
          %s406 = ssub.s32 512, 512
          %407 = vsyncadd [#allocation10], %s406
          %s408 = sshll.u32 [#allocation11], 4
          %s409 = int_to_ptr.vmem [resolvable:$true] %s408
          %414 = dma.hbm_to_vmem [thread:$0]  %s4, 512, %s409, [#allocation10], 128, 128, 8
        $region24: #{tpu_custom_call.1} parent=11 // pred_fallthru
          _
        // Predicated region
        $region25: #{tpu_custom_call.1} parent=11 // pred_check
          %p415 = pneg %p171
        $region26: #{tpu_custom_call.1} parent=11 // pred_check_branch
          %417 = sbr.rel (%p415) target = $region28
        $region27: #{tpu_custom_call.1} parent=11 // pred_region
          %s419 = ssub.s32 16, 16
          %420 = vsyncadd [#allocation13], %s419
          %s422 = sshll.u32 [#allocation12], 4
          %s423 = int_to_ptr.vmem [resolvable:$true] %s422
          %425 = dma.hbm_to_vmem [thread:$0]  %s5, 16, %s423, [#allocation13]
        $region28: #{tpu_custom_call.1} parent=11 // pred_fallthru
          _
        // Predicated region
        $region29: #{tpu_custom_call.1} parent=11 // pred_check
          %p426 = pneg %p192
        $region30: #{tpu_custom_call.1} parent=11 // pred_check_branch
          %428 = sbr.rel (%p426) target = $region32
        $region31: #{tpu_custom_call.1} parent=11 // pred_region
          %s430 = ssub.s32 512, 512
          %431 = vsyncadd [#allocation13], %s430
          %s432 = sshll.u32 [#allocation14], 4
          %s433 = int_to_ptr.vmem [resolvable:$true] %s432
          %438 = dma.hbm_to_vmem [thread:$0]  %s6, 512, %s433, [#allocation13], 128, 128, 8
        $region32: #{tpu_custom_call.1} parent=11 // pred_fallthru
          _
        // Predicated region
        $region33: #{tpu_custom_call.1} parent=11 // pred_check
          %p439 = pneg %p213
        $region34: #{tpu_custom_call.1} parent=11 // pred_check_branch
          %441 = sbr.rel (%p439) target = $region36
        $region35: #{tpu_custom_call.1} parent=11 // pred_region
          %s443 = ssub.s32 16, 16
          %444 = vsyncadd [#allocation16], %s443
          %s446 = sshll.u32 [#allocation15], 4
          %s447 = int_to_ptr.vmem [resolvable:$true] %s446
          %449 = dma.hbm_to_vmem [thread:$0]  %s7, 16, %s447, [#allocation16]
        $region36: #{tpu_custom_call.1} parent=11 // pred_fallthru
          _
        // Predicated region
        $region37: #{tpu_custom_call.1} parent=11 // pred_check
          %p450 = pneg %p234
        $region38: #{tpu_custom_call.1} parent=11 // pred_check_branch
          %452 = sbr.rel (%p450) target = $region40
        $region39: #{tpu_custom_call.1} parent=11 // pred_region
          %s454 = ssub.s32 16, 16
          %455 = vsyncadd [#allocation16], %s454
          %s457 = sshll.u32 [#allocation17], 4
          %s458 = int_to_ptr.vmem [resolvable:$true] %s457
          %460 = dma.hbm_to_vmem [thread:$0]  %s8, 16, %s458, [#allocation16]
        $region40: #{tpu_custom_call.1} parent=11 // pred_fallthru
          _
        // Predicated region
        $region41: #{tpu_custom_call.1} parent=11 // pred_check
          %p461 = pneg %p255
        $region42: #{tpu_custom_call.1} parent=11 // pred_check_branch
          %463 = sbr.rel (%p461) target = $region44
        $region43: #{tpu_custom_call.1} parent=11 // pred_region
          %s465 = ssub.s32 16, 16
          %466 = vsyncadd [#allocation19], %s465
          %s468 = sshll.u32 [#allocation18], 4
          %s469 = int_to_ptr.vmem [resolvable:$true] %s468
          %471 = dma.hbm_to_vmem [thread:$0]  %s9, 16, %s469, [#allocation19]
        $region44: #{tpu_custom_call.1} parent=11 // pred_fallthru
          _
        // Predicated region
        $region45: #{tpu_custom_call.1} parent=11 // pred_check
          %p472 = pneg %p276
        $region46: #{tpu_custom_call.1} parent=11 // pred_check_branch
          %474 = sbr.rel (%p472) target = $region48
        $region47: #{tpu_custom_call.1} parent=11 // pred_region
          %s476 = ssub.s32 512, 512
          %477 = vsyncadd [#allocation19], %s476
          %s478 = sshll.u32 [#allocation20], 4
          %s479 = int_to_ptr.vmem [resolvable:$true] %s478
          %484 = dma.hbm_to_vmem [thread:$0]  %s10, 512, %s479, [#allocation19], 128, 128, 8
        $region48: #{tpu_custom_call.1} parent=11 // pred_fallthru
          _
        // Predicated region
        $region49: #{tpu_custom_call.1} parent=11 // pred_check
          %p485 = pneg %p297
        $region50: #{tpu_custom_call.1} parent=11 // pred_check_branch
          %487 = sbr.rel (%p485) target = $region52
        $region51: #{tpu_custom_call.1} parent=11 // pred_region
          %s489 = ssub.s32 16, 16
          %490 = vsyncadd [#allocation22], %s489
          %s492 = sshll.u32 [#allocation21], 4
          %s493 = int_to_ptr.vmem [resolvable:$true] %s492
          %495 = dma.hbm_to_vmem [thread:$0]  %s11, 16, %s493, [#allocation22]
        $region52: #{tpu_custom_call.1} parent=11 // pred_fallthru
          _
        // Predicated region
        $region53: #{tpu_custom_call.1} parent=11 // pred_check
          %p496 = pneg %p318
        $region54: #{tpu_custom_call.1} parent=11 // pred_check_branch
          %498 = sbr.rel (%p496) target = $region56
        $region55: #{tpu_custom_call.1} parent=11 // pred_region
          %s500 = ssub.s32 2048, 2048
          %501 = vsyncadd [#allocation22], %s500
          %s502 = sshll.u32 [#allocation23], 4
          %s503 = int_to_ptr.vmem [resolvable:$true] %s502
          %508 = dma.hbm_to_vmem [thread:$0]  %s12, 2048, %s503, [#allocation22], 128, 128, 8
        $region56: #{tpu_custom_call.1} parent=11 // pred_fallthru
          _
        // Predicated region
        $region57: #{tpu_custom_call.1} parent=11 // pred_check
          %p509 = pneg %p339
        $region58: #{tpu_custom_call.1} parent=11 // pred_check_branch
          %511 = sbr.rel (%p509) target = $region60
        $region59: #{tpu_custom_call.1} parent=11 // pred_region
          %s513 = ssub.s32 16, 16
          %514 = vsyncadd [#allocation25], %s513
          %s516 = sshll.u32 [#allocation24], 4
          %s517 = int_to_ptr.vmem [resolvable:$true] %s516
          %519 = dma.hbm_to_vmem [thread:$0]  %s13, 16, %s517, [#allocation25]
        $region60: #{tpu_custom_call.1} parent=11 // pred_fallthru
          _
      $region12: #{tpu_custom_call.1} parent=5 // pred_fallthru
        _
      %p520 = scmp.lt.s32.totalorder %s35, 2
      // Predicated region
      $region61: #{tpu_custom_call.1} parent=5 // pred_check
        %p521 = pneg %p520
      $region62: #{tpu_custom_call.1} parent=5 // pred_check_branch
        %523 = sbr.rel (%p521) target = $region64
      $region63: #{tpu_custom_call.1} parent=5 // pred_region
        // Predicated region
        $region65: #{tpu_custom_call.1} parent=63 // pred_check
          %p524 = pneg %p55
        $region66: #{tpu_custom_call.1} parent=63 // pred_check_branch
          %526 = sbr.rel (%p524) target = $region68
        $region67: #{tpu_custom_call.1} parent=63 // pred_region
          %s527 = sand.u32 %s45, 1
          %s528 = scalar_lea.sflag [#allocation4], %s527
          %s529 = sand.u32 %s45, 1
          %s530 = smul.addr %s529, 128
          %s531 = scalar_lea.vmem [#allocation3], %s530
          %s532 = smul.u32 2, %s35
          %s534 = ssub.s32 2048, 2048
          %535 = vsyncadd %s528, %s534
          %s536 = smul.addr %s532, 8
          %s537 = smul.addr %s536, 128
          %s538 = scalar_lea.hbm %s0, %s537
          %s539 = sshll.u32 %s531, 4
          %s540 = int_to_ptr.vmem [resolvable:$true] %s539
          %545 = dma.hbm_to_vmem [thread:$0]  %s538, 2048, %s540, %s528, 128, 128, 8
        $region68: #{tpu_custom_call.1} parent=63 // pred_fallthru
          _
        // Predicated region
        $region69: #{tpu_custom_call.1} parent=63 // pred_check
          %p546 = pneg %p81
        $region70: #{tpu_custom_call.1} parent=63 // pred_check_branch
          %548 = sbr.rel (%p546) target = $region72
        $region71: #{tpu_custom_call.1} parent=63 // pred_region
          %s549 = sand.u32 %s35, 1
          %s550 = scalar_lea.sflag [#allocation7], %s549
          %s551 = sand.u32 %s71, 1
          %s552 = smul.addr %s551, 128
          %s553 = scalar_lea.vmem [#allocation6], %s552
          %s554 = smul.u32 2, %s35
          %s556 = ssub.s32 2048, 2048
          %557 = vsyncadd %s550, %s556
          %s558 = smul.addr %s554, 8
          %s559 = smul.addr %s558, 128
          %s560 = scalar_lea.hbm %s1, %s559
          %s561 = sshll.u32 %s553, 4
          %s562 = int_to_ptr.vmem [resolvable:$true] %s561
          %567 = dma.hbm_to_vmem [thread:$0]  %s560, 2048, %s562, %s550, 128, 128, 8
        $region72: #{tpu_custom_call.1} parent=63 // pred_fallthru
          _
      $region64: #{tpu_custom_call.1} parent=5 // pred_fallthru
        _
      %p568 = scmp.le.s32.totalorder 1, %s35
      %p569 = scmp.lt.s32.totalorder %s35, 3
      %p570 = pnand %p568, %p569
      %p571 = pneg %p570
      // Predicated region
      $region73: #{tpu_custom_call.1} parent=5 // pred_check
        _
      $region74: #{tpu_custom_call.1} parent=5 // pred_check_branch
        %573 = sbr.rel (%p570) target = $region76
      $region75: #{tpu_custom_call.1} parent=5 // pred_region
        %s574 = ssub.s32 %s35, 1
        %s575 = sand.u32 %s48, 1
        %s576 = scalar_lea.sflag [#allocation4], %s575
        %s577 = sand.u32 %s48, 1
        %s578 = smul.addr %s577, 128
        %s579 = scalar_lea.vmem [#allocation3], %s578
        // Predicated region
        $region77: #{tpu_custom_call.1} parent=75 // pred_check
          %p580 = pneg %p61
        $region78: #{tpu_custom_call.1} parent=75 // pred_check_branch
          %582 = sbr.rel (%p580) target = $region80
        $region79: #{tpu_custom_call.1} parent=75 // pred_region
          %583 = dma.done %s576, 2048
        $region80: #{tpu_custom_call.1} parent=75 // pred_fallthru
          _
        %s584 = sand.u32 %s40, 1
        %s585 = scalar_lea.sflag [#allocation7], %s584
        %s586 = sand.u32 %s74, 1
        %s587 = smul.addr %s586, 128
        %s588 = scalar_lea.vmem [#allocation6], %s587
        // Predicated region
        $region81: #{tpu_custom_call.1} parent=75 // pred_check
          %p589 = pneg %p87
        $region82: #{tpu_custom_call.1} parent=75 // pred_check_branch
          %591 = sbr.rel (%p589) target = $region84
        $region83: #{tpu_custom_call.1} parent=75 // pred_region
          %592 = dma.done %s585, 2048
        $region84: #{tpu_custom_call.1} parent=75 // pred_fallthru
          _
        // Predicated region
        $region85: #{tpu_custom_call.1} parent=75 // pred_check
          %p593 = pneg %p108
        $region86: #{tpu_custom_call.1} parent=75 // pred_check_branch
          %595 = sbr.rel (%p593) target = $region88
        $region87: #{tpu_custom_call.1} parent=75 // pred_region
          %596 = dma.done [#allocation7], 16
        $region88: #{tpu_custom_call.1} parent=75 // pred_fallthru
          _
        // Predicated region
        $region89: #{tpu_custom_call.1} parent=75 // pred_check
          %p597 = pneg %p129
        $region90: #{tpu_custom_call.1} parent=75 // pred_check_branch
          %599 = sbr.rel (%p597) target = $region92
        $region91: #{tpu_custom_call.1} parent=75 // pred_region
          %600 = dma.done [#allocation10], 16
        $region92: #{tpu_custom_call.1} parent=75 // pred_fallthru
          _
        // Predicated region
        $region93: #{tpu_custom_call.1} parent=75 // pred_check
          %p601 = pneg %p150
        $region94: #{tpu_custom_call.1} parent=75 // pred_check_branch
          %603 = sbr.rel (%p601) target = $region96
        $region95: #{tpu_custom_call.1} parent=75 // pred_region
          %604 = dma.done [#allocation10], 512
        $region96: #{tpu_custom_call.1} parent=75 // pred_fallthru
          _
        // Predicated region
        $region97: #{tpu_custom_call.1} parent=75 // pred_check
          %p605 = pneg %p171
        $region98: #{tpu_custom_call.1} parent=75 // pred_check_branch
          %607 = sbr.rel (%p605) target = $region100
        $region99: #{tpu_custom_call.1} parent=75 // pred_region
          %608 = dma.done [#allocation13], 16
        $region100: #{tpu_custom_call.1} parent=75 // pred_fallthru
          _
        // Predicated region
        $region101: #{tpu_custom_call.1} parent=75 // pred_check
          %p609 = pneg %p192
        $region102: #{tpu_custom_call.1} parent=75 // pred_check_branch
          %611 = sbr.rel (%p609) target = $region104
        $region103: #{tpu_custom_call.1} parent=75 // pred_region
          %612 = dma.done [#allocation13], 512
        $region104: #{tpu_custom_call.1} parent=75 // pred_fallthru
          _
        // Predicated region
        $region105: #{tpu_custom_call.1} parent=75 // pred_check
          %p613 = pneg %p213
        $region106: #{tpu_custom_call.1} parent=75 // pred_check_branch
          %615 = sbr.rel (%p613) target = $region108
        $region107: #{tpu_custom_call.1} parent=75 // pred_region
          %616 = dma.done [#allocation16], 16
        $region108: #{tpu_custom_call.1} parent=75 // pred_fallthru
          _
        // Predicated region
        $region109: #{tpu_custom_call.1} parent=75 // pred_check
          %p617 = pneg %p234
        $region110: #{tpu_custom_call.1} parent=75 // pred_check_branch
          %619 = sbr.rel (%p617) target = $region112
        $region111: #{tpu_custom_call.1} parent=75 // pred_region
          %620 = dma.done [#allocation16], 16
        $region112: #{tpu_custom_call.1} parent=75 // pred_fallthru
          _
        // Predicated region
        $region113: #{tpu_custom_call.1} parent=75 // pred_check
          %p621 = pneg %p255
        $region114: #{tpu_custom_call.1} parent=75 // pred_check_branch
          %623 = sbr.rel (%p621) target = $region116
        $region115: #{tpu_custom_call.1} parent=75 // pred_region
          %624 = dma.done [#allocation19], 16
        $region116: #{tpu_custom_call.1} parent=75 // pred_fallthru
          _
        // Predicated region
        $region117: #{tpu_custom_call.1} parent=75 // pred_check
          %p625 = pneg %p276
        $region118: #{tpu_custom_call.1} parent=75 // pred_check_branch
          %627 = sbr.rel (%p625) target = $region120
        $region119: #{tpu_custom_call.1} parent=75 // pred_region
          %628 = dma.done [#allocation19], 512
        $region120: #{tpu_custom_call.1} parent=75 // pred_fallthru
          _
        // Predicated region
        $region121: #{tpu_custom_call.1} parent=75 // pred_check
          %p629 = pneg %p297
        $region122: #{tpu_custom_call.1} parent=75 // pred_check_branch
          %631 = sbr.rel (%p629) target = $region124
        $region123: #{tpu_custom_call.1} parent=75 // pred_region
          %632 = dma.done [#allocation22], 16
        $region124: #{tpu_custom_call.1} parent=75 // pred_fallthru
          _
        // Predicated region
        $region125: #{tpu_custom_call.1} parent=75 // pred_check
          %p633 = pneg %p318
        $region126: #{tpu_custom_call.1} parent=75 // pred_check_branch
          %635 = sbr.rel (%p633) target = $region128
        $region127: #{tpu_custom_call.1} parent=75 // pred_region
          %636 = dma.done [#allocation22], 2048
        $region128: #{tpu_custom_call.1} parent=75 // pred_fallthru
          _
        // Predicated region
        $region129: #{tpu_custom_call.1} parent=75 // pred_check
          %p637 = pneg %p339
        $region130: #{tpu_custom_call.1} parent=75 // pred_check_branch
          %639 = sbr.rel (%p637) target = $region132
        $region131: #{tpu_custom_call.1} parent=75 // pred_region
          %640 = dma.done [#allocation25], 16
        $region132: #{tpu_custom_call.1} parent=75 // pred_fallthru
          _
        %s641 = sand.u32 %s48, 1
        %s642 = scalar_lea.sflag [#allocation4], %s641
        %s643 = sand.u32 %s48, 1
        %s644 = smul.addr %s643, 128
        %s645 = scalar_lea.vmem [#allocation3], %s644
        %p646 = pneg %p61
        %p647 = pneg %p58
        %s648 = sand.u32 %s40, 1
        %s649 = scalar_lea.sflag [#allocation7], %s648
        %s650 = sand.u32 %s74, 1
        %s651 = smul.addr %s650, 128
        %s652 = scalar_lea.vmem [#allocation6], %s651
        %p653 = pneg %p87
        %p654 = pneg %p84
        %p655 = pneg %p108
        %p656 = pneg %p105
        %p657 = pneg %p129
        %p658 = pneg %p126
        %p659 = pneg %p150
        %p660 = pneg %p147
        %p661 = pneg %p171
        %p662 = pneg %p168
        %p663 = pneg %p192
        %p664 = pneg %p189
        %p665 = pneg %p213
        %p666 = pneg %p210
        %p667 = pneg %p234
        %p668 = pneg %p231
        %p669 = pneg %p255
        %p670 = pneg %p252
        %p671 = pneg %p276
        %p672 = pneg %p273
        %p673 = pneg %p297
        %p674 = pneg %p294
        %p675 = pneg %p318
        %p676 = pneg %p315
        %p677 = pneg %p339
        %p678 = pneg %p336
        %p679 = pneg %p365
        %p680 = pneg %p362
        %s681 = sand.u32 %s352, 1
        %s682 = scalar_lea.sflag [#allocation5], %s681
        %s683 = sand.u32 %s352, 1
        %s684 = smul.addr %s683, 128
        %s685 = scalar_lea.vmem [#allocation26], %s684
        %s686 = smul.u32 2, %s40
        %s687 = smul.u32 2, %s40
        %s688 = smul.u32 2, %s40
        %v689 = vld [vmem:[#allocation8] sm:$0x1]
        %v690 = vld [vmem:[#allocation9] sm:$0x1]
        %v691 = vld [vmem:[#allocation17] sm:$0x1]
        %v692 = vld [vmem:[#allocation18] sm:$0x1]
        %v693 = vld [vmem:[#allocation12] sm:$0x1]
        %v694 = vld [vmem:[#allocation15] sm:$0x1]
        %v695 = vld [vmem:[#allocation21] sm:$0x1]
        %v696 = vld [vmem:[#allocation24] sm:$0x1]
        %v697 = vld [vmem:[%s579] sm:$0xff]
        %v698 = vld [vmem:[%s579 + $0x8] sm:$0xff]
        %v699 = vld [vmem:[%s579 + $0x10] sm:$0xff]
        %v700 = vld [vmem:[%s579 + $0x18] sm:$0xff]
        %v701 = vld [vmem:[%s579 + $0x20] sm:$0xff]
        %v702 = vld [vmem:[%s579 + $0x28] sm:$0xff]
        %v703 = vld [vmem:[%s579 + $0x30] sm:$0xff]
        %v704 = vld [vmem:[%s579 + $0x38] sm:$0xff]
        %v705 = vld [vmem:[%s579 + $0x40] sm:$0xff]
        %v706 = vld [vmem:[%s579 + $0x48] sm:$0xff]
        %v707 = vld [vmem:[%s579 + $0x50] sm:$0xff]
        %v708 = vld [vmem:[%s579 + $0x58] sm:$0xff]
        %v709 = vld [vmem:[%s579 + $0x60] sm:$0xff]
        %v710 = vld [vmem:[%s579 + $0x68] sm:$0xff]
        %v711 = vld [vmem:[%s579 + $0x70] sm:$0xff]
        %v712 = vld [vmem:[%s579 + $0x78] sm:$0xff]
        %v713 = vld [vmem:[%s588] sm:$0xff]
        %v714 = vld [vmem:[%s588 + $0x8] sm:$0xff]
        %v715 = vld [vmem:[%s588 + $0x10] sm:$0xff]
        %v716 = vld [vmem:[%s588 + $0x18] sm:$0xff]
        %v717 = vld [vmem:[%s588 + $0x20] sm:$0xff]
        %v718 = vld [vmem:[%s588 + $0x28] sm:$0xff]
        %v719 = vld [vmem:[%s588 + $0x30] sm:$0xff]
        %v720 = vld [vmem:[%s588 + $0x38] sm:$0xff]
        %v721 = vld [vmem:[%s588 + $0x40] sm:$0xff]
        %v722 = vld [vmem:[%s588 + $0x48] sm:$0xff]
        %v723 = vld [vmem:[%s588 + $0x50] sm:$0xff]
        %v724 = vld [vmem:[%s588 + $0x58] sm:$0xff]
        %v725 = vld [vmem:[%s588 + $0x60] sm:$0xff]
        %v726 = vld [vmem:[%s588 + $0x68] sm:$0xff]
        %v727 = vld [vmem:[%s588 + $0x70] sm:$0xff]
        %v728 = vld [vmem:[%s588 + $0x78] sm:$0xff]
        %vm729 = vcmask 261120
        %v730 = vsel %vm729, %v697, 0.0
        %731 = vadd.xlane.f32.xlu0 %v730
        %v732 = vpop.xlane.xlu0 %731
        %v733 = vsel %vm729, %v698, 0.0
        %734 = vadd.xlane.f32.xlu0 %v733
        %v735 = vpop.xlane.xlu0 %734
        %v736 = vsel %vm729, %v699, 0.0
        %737 = vadd.xlane.f32.xlu0 %v736
        %v738 = vpop.xlane.xlu0 %737
        %v739 = vsel %vm729, %v700, 0.0
        %740 = vadd.xlane.f32.xlu0 %v739
        %v741 = vpop.xlane.xlu0 %740
        %v742 = vsel %vm729, %v701, 0.0
        %743 = vadd.xlane.f32.xlu0 %v742
        %v744 = vpop.xlane.xlu0 %743
        %v745 = vsel %vm729, %v702, 0.0
        %746 = vadd.xlane.f32.xlu0 %v745
        %v747 = vpop.xlane.xlu0 %746
        %v748 = vsel %vm729, %v703, 0.0
        %749 = vadd.xlane.f32.xlu0 %v748
        %v750 = vpop.xlane.xlu0 %749
        %v751 = vsel %vm729, %v704, 0.0
        %752 = vadd.xlane.f32.xlu0 %v751
        %v753 = vpop.xlane.xlu0 %752
        %v754 = vsel %vm729, %v705, 0.0
        %755 = vadd.xlane.f32.xlu0 %v754
        %v756 = vpop.xlane.xlu0 %755
        %v757 = vsel %vm729, %v706, 0.0
        %758 = vadd.xlane.f32.xlu0 %v757
        %v759 = vpop.xlane.xlu0 %758
        %v760 = vsel %vm729, %v707, 0.0
        %761 = vadd.xlane.f32.xlu0 %v760
        %v762 = vpop.xlane.xlu0 %761
        %v763 = vsel %vm729, %v708, 0.0
        %764 = vadd.xlane.f32.xlu0 %v763
        %v765 = vpop.xlane.xlu0 %764
        %v766 = vsel %vm729, %v709, 0.0
        %767 = vadd.xlane.f32.xlu0 %v766
        %v768 = vpop.xlane.xlu0 %767
        %v769 = vsel %vm729, %v710, 0.0
        %770 = vadd.xlane.f32.xlu0 %v769
        %v771 = vpop.xlane.xlu0 %770
        %v772 = vsel %vm729, %v711, 0.0
        %773 = vadd.xlane.f32.xlu0 %v772
        %v774 = vpop.xlane.xlu0 %773
        %v775 = vsel %vm729, %v712, 0.0
        %776 = vadd.xlane.f32.xlu0 %v775
        %v777 = vpop.xlane.xlu0 %776
        %v778 = vrcp.pop 32.0
        %v779 = vmul.f32 %v732, %v778
        %v780 = vmul.f32 %v735, %v778
        %v781 = vmul.f32 %v738, %v778
        %v782 = vmul.f32 %v741, %v778
        %v783 = vmul.f32 %v744, %v778
        %v784 = vmul.f32 %v747, %v778
        %v785 = vmul.f32 %v750, %v778
        %v786 = vmul.f32 %v753, %v778
        %v787 = vmul.f32 %v756, %v778
        %v788 = vmul.f32 %v759, %v778
        %v789 = vmul.f32 %v762, %v778
        %v790 = vmul.f32 %v765, %v778
        %v791 = vmul.f32 %v768, %v778
        %v792 = vmul.f32 %v771, %v778
        %v793 = vmul.f32 %v774, %v778
        %v794 = vmul.f32 %v777, %v778
        %v795 = vsub.f32 %v697, %v779
        %v796 = vsub.f32 %v698, %v780
        %v797 = vsub.f32 %v699, %v781
        %v798 = vsub.f32 %v700, %v782
        %v799 = vsub.f32 %v701, %v783
        %v800 = vsub.f32 %v702, %v784
        %v801 = vsub.f32 %v703, %v785
        %v802 = vsub.f32 %v704, %v786
        %v803 = vsub.f32 %v705, %v787
        %v804 = vsub.f32 %v706, %v788
        %v805 = vsub.f32 %v707, %v789
        %v806 = vsub.f32 %v708, %v790
        %v807 = vsub.f32 %v709, %v791
        %v808 = vsub.f32 %v710, %v792
        %v809 = vsub.f32 %v711, %v793
        %v810 = vsub.f32 %v712, %v794
        %v811 = vmul.f32 %v795, %v795
        %v812 = vmul.f32 %v796, %v796
        %v813 = vmul.f32 %v797, %v797
        %v814 = vmul.f32 %v798, %v798
        %v815 = vmul.f32 %v799, %v799
        %v816 = vmul.f32 %v800, %v800
        %v817 = vmul.f32 %v801, %v801
        %v818 = vmul.f32 %v802, %v802
        %v819 = vmul.f32 %v803, %v803
        %v820 = vmul.f32 %v804, %v804
        %v821 = vmul.f32 %v805, %v805
        %v822 = vmul.f32 %v806, %v806
        %v823 = vmul.f32 %v807, %v807
        %v824 = vmul.f32 %v808, %v808
        %v825 = vmul.f32 %v809, %v809
        %v826 = vmul.f32 %v810, %v810
        %v827 = vsel %vm729, %v811, 0.0
        %828 = vadd.xlane.f32.xlu0 %v827
        %v829 = vpop.xlane.xlu0 %828
        %v830 = vsel %vm729, %v812, 0.0
        %831 = vadd.xlane.f32.xlu0 %v830
        %v832 = vpop.xlane.xlu0 %831
        %v833 = vsel %vm729, %v813, 0.0
        %834 = vadd.xlane.f32.xlu0 %v833
        %v835 = vpop.xlane.xlu0 %834
        %v836 = vsel %vm729, %v814, 0.0
        %837 = vadd.xlane.f32.xlu0 %v836
        %v838 = vpop.xlane.xlu0 %837
        %v839 = vsel %vm729, %v815, 0.0
        %840 = vadd.xlane.f32.xlu0 %v839
        %v841 = vpop.xlane.xlu0 %840
        %v842 = vsel %vm729, %v816, 0.0
        %843 = vadd.xlane.f32.xlu0 %v842
        %v844 = vpop.xlane.xlu0 %843
        %v845 = vsel %vm729, %v817, 0.0
        %846 = vadd.xlane.f32.xlu0 %v845
        %v847 = vpop.xlane.xlu0 %846
        %v848 = vsel %vm729, %v818, 0.0
        %849 = vadd.xlane.f32.xlu0 %v848
        %v850 = vpop.xlane.xlu0 %849
        %v851 = vsel %vm729, %v819, 0.0
        %852 = vadd.xlane.f32.xlu0 %v851
        %v853 = vpop.xlane.xlu0 %852
        %v854 = vsel %vm729, %v820, 0.0
        %855 = vadd.xlane.f32.xlu0 %v854
        %v856 = vpop.xlane.xlu0 %855
        %v857 = vsel %vm729, %v821, 0.0
        %858 = vadd.xlane.f32.xlu0 %v857
        %v859 = vpop.xlane.xlu0 %858
        %v860 = vsel %vm729, %v822, 0.0
        %861 = vadd.xlane.f32.xlu0 %v860
        %v862 = vpop.xlane.xlu0 %861
        %v863 = vsel %vm729, %v823, 0.0
        %864 = vadd.xlane.f32.xlu0 %v863
        %v865 = vpop.xlane.xlu0 %864
        %v866 = vsel %vm729, %v824, 0.0
        %867 = vadd.xlane.f32.xlu0 %v866
        %v868 = vpop.xlane.xlu0 %867
        %v869 = vsel %vm729, %v825, 0.0
        %870 = vadd.xlane.f32.xlu0 %v869
        %v871 = vpop.xlane.xlu0 %870
        %v872 = vsel %vm729, %v826, 0.0
        %873 = vadd.xlane.f32.xlu0 %v872
        %v874 = vpop.xlane.xlu0 %873
        %v875 = vmul.f32 %v829, %v778
        %v876 = vmul.f32 %v832, %v778
        %v877 = vmul.f32 %v835, %v778
        %v878 = vmul.f32 %v838, %v778
        %v879 = vmul.f32 %v841, %v778
        %v880 = vmul.f32 %v844, %v778
        %v881 = vmul.f32 %v847, %v778
        %v882 = vmul.f32 %v850, %v778
        %v883 = vmul.f32 %v853, %v778
        %v884 = vmul.f32 %v856, %v778
        %v885 = vmul.f32 %v859, %v778
        %v886 = vmul.f32 %v862, %v778
        %v887 = vmul.f32 %v865, %v778
        %v888 = vmul.f32 %v868, %v778
        %v889 = vmul.f32 %v871, %v778
        %v890 = vmul.f32 %v874, %v778
        %v891 = vadd.f32 %v875, 1e-05
        %v892 = vadd.f32 %v876, 1e-05
        %v893 = vadd.f32 %v877, 1e-05
        %v894 = vadd.f32 %v878, 1e-05
        %v895 = vadd.f32 %v879, 1e-05
        %v896 = vadd.f32 %v880, 1e-05
        %v897 = vadd.f32 %v881, 1e-05
        %v898 = vadd.f32 %v882, 1e-05
        %v899 = vadd.f32 %v883, 1e-05
        %v900 = vadd.f32 %v884, 1e-05
        %v901 = vadd.f32 %v885, 1e-05
        %v902 = vadd.f32 %v886, 1e-05
        %v903 = vadd.f32 %v887, 1e-05
        %v904 = vadd.f32 %v888, 1e-05
        %v905 = vadd.f32 %v889, 1e-05
        %v906 = vadd.f32 %v890, 1e-05
        %v907 = vrsqrt.pop %v891
        %v908 = vrsqrt.pop %v892
        %v909 = vrsqrt.pop %v893
        %v910 = vrsqrt.pop %v894
        %v911 = vrsqrt.pop %v895
        %v912 = vrsqrt.pop %v896
        %v913 = vrsqrt.pop %v897
        %v914 = vrsqrt.pop %v898
        %v915 = vrsqrt.pop %v899
        %v916 = vrsqrt.pop %v900
        %v917 = vrsqrt.pop %v901
        %v918 = vrsqrt.pop %v902
        %v919 = vrsqrt.pop %v903
        %v920 = vrsqrt.pop %v904
        %v921 = vrsqrt.pop %v905
        %v922 = vrsqrt.pop %v906
        %v923 = vmul.f32 %v795, %v907
        %v924 = vmul.f32 %v796, %v908
        %v925 = vmul.f32 %v797, %v909
        %v926 = vmul.f32 %v798, %v910
        %v927 = vmul.f32 %v799, %v911
        %v928 = vmul.f32 %v800, %v912
        %v929 = vmul.f32 %v801, %v913
        %v930 = vmul.f32 %v802, %v914
        %v931 = vmul.f32 %v803, %v915
        %v932 = vmul.f32 %v804, %v916
        %v933 = vmul.f32 %v805, %v917
        %v934 = vmul.f32 %v806, %v918
        %v935 = vmul.f32 %v807, %v919
        %v936 = vmul.f32 %v808, %v920
        %v937 = vmul.f32 %v809, %v921
        %v938 = vmul.f32 %v810, %v922
        %v940 = vlaneseq
        %v941 = vshrl.u32 %v940, 7
        %v942 = vsub.s32 0, %v941
        %v943 = vrot.slane %v689, %v942
        %v945 = vmul.f32 %v923, %v943
        %v946 = vmul.f32 %v924, %v943
        %v947 = vmul.f32 %v925, %v943
        %v948 = vmul.f32 %v926, %v943
        %v949 = vmul.f32 %v927, %v943
        %v950 = vmul.f32 %v928, %v943
        %v951 = vmul.f32 %v929, %v943
        %v952 = vmul.f32 %v930, %v943
        %v953 = vmul.f32 %v931, %v943
        %v954 = vmul.f32 %v932, %v943
        %v955 = vmul.f32 %v933, %v943
        %v956 = vmul.f32 %v934, %v943
        %v957 = vmul.f32 %v935, %v943
        %v958 = vmul.f32 %v936, %v943
        %v959 = vmul.f32 %v937, %v943
        %v960 = vmul.f32 %v938, %v943
        %v962 = vlaneseq
        %v963 = vshrl.u32 %v962, 7
        %v964 = vsub.s32 0, %v963
        %v965 = vrot.slane %v690, %v964
        %v967 = vadd.f32 %v945, %v965
        %v968 = vadd.f32 %v946, %v965
        %v969 = vadd.f32 %v947, %v965
        %v970 = vadd.f32 %v948, %v965
        %v971 = vadd.f32 %v949, %v965
        %v972 = vadd.f32 %v950, %v965
        %v973 = vadd.f32 %v951, %v965
        %v974 = vadd.f32 %v952, %v965
        %v975 = vadd.f32 %v953, %v965
        %v976 = vadd.f32 %v954, %v965
        %v977 = vadd.f32 %v955, %v965
        %v978 = vadd.f32 %v956, %v965
        %v979 = vadd.f32 %v957, %v965
        %v980 = vadd.f32 %v958, %v965
        %v981 = vadd.f32 %v959, %v965
        %v982 = vadd.f32 %v960, %v965
        %v983 = vld [vmem:[#allocation11] sm:$0xff]
        %v984 = vld [vmem:[#allocation11 + $0x8] sm:$0xff]
        %v985 = vld [vmem:[#allocation11 + $0x10] sm:$0xff]
        %v986 = vld [vmem:[#allocation11 + $0x18] sm:$0xff]
        %v988 = vlaneseq
        %v989 = vshrl.u32 %v988, 7
        %v990 = vsub.s32 0, %v989
        %v991 = vrot.slane %v693, %v990
        %v994 = vsel %vm729, %v967, 0
        %v997 = vsel %vm729, %v968, 0
        %v1000 = vsel %vm729, %v969, 0
        %v1003 = vsel %vm729, %v970, 0
        %v1006 = vsel %vm729, %v971, 0
        %v1009 = vsel %vm729, %v972, 0
        %v1012 = vsel %vm729, %v973, 0
        %v1015 = vsel %vm729, %v974, 0
        %v1018 = vsel %vm729, %v975, 0
        %v1021 = vsel %vm729, %v976, 0
        %v1024 = vsel %vm729, %v977, 0
        %v1027 = vsel %vm729, %v978, 0
        %v1030 = vsel %vm729, %v979, 0
        %v1033 = vsel %vm729, %v980, 0
        %v1036 = vsel %vm729, %v981, 0
        %v1039 = vsel %vm729, %v982, 0
        %1041 = vmatprep.subr.mxu0 0.0
        %1042 = vmatpush1.msra.mxu0 %v983
        %1043 = vmatprep.subr.mxu0 0.0
        %1044 = vmatpush1.msra.mxu0 %v984
        %1045 = vmatprep.subr.mxu0 0.0
        %1046 = vmatpush1.msra.mxu0 %v985
        %1047 = vmatprep.subr.mxu0 0.0
        %1048 = vmatpush1.msra.mxu0 %v986
        %1049 = vmatprep.subr.mxu0 0.0
        %1050 = vmatpush1.msra.mxu0 0.0
        %1051 = vmatprep.subr.mxu0 0.0
        %1052 = vmatpush1.msra.mxu0 0.0
        %1053 = vmatprep.subr.mxu0 0.0
        %1054 = vmatpush1.msra.mxu0 0.0
        %1055 = vmatprep.subr.mxu0 0.0
        %1056 = vmatpush1.msra.mxu0 0.0
        %1057 = vmatprep.subr.mxu0 0.0
        %1058 = vmatpush1.msra.mxu0 0.0
        %1059 = vmatprep.subr.mxu0 0.0
        %1060 = vmatpush1.msra.mxu0 0.0
        %1061 = vmatprep.subr.mxu0 0.0
        %1062 = vmatpush1.msra.mxu0 0.0
        %1063 = vmatprep.subr.mxu0 0.0
        %1064 = vmatpush1.msra.mxu0 0.0
        %1065 = vmatprep.subr.mxu0 0.0
        %1066 = vmatpush1.msra.mxu0 0.0
        %1067 = vmatprep.subr.mxu0 0.0
        %1068 = vmatpush1.msra.mxu0 0.0
        %1069 = vmatprep.subr.mxu0 0.0
        %1070 = vmatpush1.msra.mxu0 0.0
        %1071 = vmatprep.subr.mxu0 0.0
        %1072 = vmatpush1.msra.mxu0 0.0
        %1073 = vmatprep.subr.mxu0 0.0
        %1074 = vmatpush1.msra.mxu0 0.0
        %1075 = vmatprep.subr.mxu0 0.0
        %1076 = vmatpush1.msra.mxu0 0.0
        %1077 = vmatprep.subr.mxu0 0.0
        %1078 = vmatpush1.msra.mxu0 0.0
        %1079 = vmatprep.subr.mxu0 0.0
        %1080 = vmatpush1.msra.mxu0 0.0
        %1081 = vmatprep.subr.mxu0 0.0
        %1082 = vmatpush1.msra.mxu0 0.0
        %1083 = vmatprep.subr.mxu0 0.0
        %1084 = vmatpush1.msra.mxu0 0.0
        %1085 = vmatprep.subr.mxu0 0.0
        %1086 = vmatpush1.msra.mxu0 0.0
        %1087 = vmatprep.subr.mxu0 0.0
        %1088 = vmatpush1.msra.mxu0 0.0
        %1089 = vmatprep.subr.mxu0 0.0
        %1090 = vmatpush1.msra.mxu0 0.0
        %1091 = vmatprep.subr.mxu0 0.0
        %1092 = vmatpush1.msra.mxu0 0.0
        %1093 = vmatprep.subr.mxu0 0.0
        %1094 = vmatpush1.msra.mxu0 0.0
        %1095 = vmatprep.subr.mxu0 0.0
        %1096 = vmatpush1.msra.mxu0 0.0
        %1097 = vmatprep.subr.mxu0 0.0
        %1098 = vmatpush1.msra.mxu0 0.0
        %1099 = vmatprep.subr.mxu0 0.0
        %1100 = vmatpush1.msra.mxu0 0.0
        %1101 = vmatprep.subr.mxu0 0.0
        %1102 = vmatpush1.msra.mxu0 0.0
        %1103 = vmatprep.subr.mxu0 0.0
        %1104 = vmatpush1.msra.mxu0 0.0
        %1105 = vmatprep.mubr.f32.mxu0 0.0
        %1106 = vmatmul.mubr.f32.gmra.mrb[0].mxu0 %v994
        %v1107 = vpop.f32.mrb[0].mxu0
        %v1108 = vadd.f32 %v991, %v1107
        %v1109 = vpop.f32.mrb[0].mxu0
        %1110 = vmatprep.mubr.f32.mxu0 0.0
        %1111 = vmatmul.mubr.f32.gmra.mrb[0].mxu0 %v997
        %v1112 = vpop.f32.mrb[0].mxu0
        %v1113 = vadd.f32 %v991, %v1112
        %v1114 = vpop.f32.mrb[0].mxu0
        %1115 = vmatprep.mubr.f32.mxu0 0.0
        %1116 = vmatmul.mubr.f32.gmra.mrb[0].mxu0 %v1000
        %v1117 = vpop.f32.mrb[0].mxu0
        %v1118 = vadd.f32 %v991, %v1117
        %v1119 = vpop.f32.mrb[0].mxu0
        %1120 = vmatprep.mubr.f32.mxu0 0.0
        %1121 = vmatmul.mubr.f32.gmra.mrb[0].mxu0 %v1003
        %v1122 = vpop.f32.mrb[0].mxu0
        %v1123 = vadd.f32 %v991, %v1122
        %v1124 = vpop.f32.mrb[0].mxu0
        %1125 = vmatprep.mubr.f32.mxu0 0.0
        %1126 = vmatmul.mubr.f32.gmra.mrb[0].mxu0 %v1006
        %v1127 = vpop.f32.mrb[0].mxu0
        %v1128 = vadd.f32 %v991, %v1127
        %v1129 = vpop.f32.mrb[0].mxu0
        %1130 = vmatprep.mubr.f32.mxu0 0.0
        %1131 = vmatmul.mubr.f32.gmra.mrb[0].mxu0 %v1009
        %v1132 = vpop.f32.mrb[0].mxu0
        %v1133 = vadd.f32 %v991, %v1132
        %v1134 = vpop.f32.mrb[0].mxu0
        %1135 = vmatprep.mubr.f32.mxu0 0.0
        %1136 = vmatmul.mubr.f32.gmra.mrb[0].mxu0 %v1012
        %v1137 = vpop.f32.mrb[0].mxu0
        %v1138 = vadd.f32 %v991, %v1137
        %v1139 = vpop.f32.mrb[0].mxu0
        %1140 = vmatprep.mubr.f32.mxu0 0.0
        %1141 = vmatmul.mubr.f32.gmra.mrb[0].mxu0 %v1015
        %v1142 = vpop.f32.mrb[0].mxu0
        %v1143 = vadd.f32 %v991, %v1142
        %v1144 = vpop.f32.mrb[0].mxu0
        %1145 = vmatprep.mubr.f32.mxu0 0.0
        %1146 = vmatmul.mubr.f32.gmra.mrb[0].mxu0 %v1018
        %v1147 = vpop.f32.mrb[0].mxu0
        %v1148 = vadd.f32 %v991, %v1147
        %v1149 = vpop.f32.mrb[0].mxu0
        %1150 = vmatprep.mubr.f32.mxu0 0.0
        %1151 = vmatmul.mubr.f32.gmra.mrb[0].mxu0 %v1021
        %v1152 = vpop.f32.mrb[0].mxu0
        %v1153 = vadd.f32 %v991, %v1152
        %v1154 = vpop.f32.mrb[0].mxu0
        %1155 = vmatprep.mubr.f32.mxu0 0.0
        %1156 = vmatmul.mubr.f32.gmra.mrb[0].mxu0 %v1024
        %v1157 = vpop.f32.mrb[0].mxu0
        %v1158 = vadd.f32 %v991, %v1157
        %v1159 = vpop.f32.mrb[0].mxu0
        %1160 = vmatprep.mubr.f32.mxu0 0.0
        %1161 = vmatmul.mubr.f32.gmra.mrb[0].mxu0 %v1027
        %v1162 = vpop.f32.mrb[0].mxu0
        %v1163 = vadd.f32 %v991, %v1162
        %v1164 = vpop.f32.mrb[0].mxu0
        %1165 = vmatprep.mubr.f32.mxu0 0.0
        %1166 = vmatmul.mubr.f32.gmra.mrb[0].mxu0 %v1030
        %v1167 = vpop.f32.mrb[0].mxu0
        %v1168 = vadd.f32 %v991, %v1167
        %v1169 = vpop.f32.mrb[0].mxu0
        %1170 = vmatprep.mubr.f32.mxu0 0.0
        %1171 = vmatmul.mubr.f32.gmra.mrb[0].mxu0 %v1033
        %v1172 = vpop.f32.mrb[0].mxu0
        %v1173 = vadd.f32 %v991, %v1172
        %v1174 = vpop.f32.mrb[0].mxu0
        %1175 = vmatprep.mubr.f32.mxu0 0.0
        %1176 = vmatmul.mubr.f32.gmra.mrb[0].mxu0 %v1036
        %v1177 = vpop.f32.mrb[0].mxu0
        %v1178 = vadd.f32 %v991, %v1177
        %v1179 = vpop.f32.mrb[0].mxu0
        %1180 = vmatprep.mubr.f32.mxu0 0.0
        %1181 = vmatmul.mubr.f32.gmra.mrb[0].mxu0 %v1039
        %v1182 = vpop.f32.mrb[0].mxu0
        %v1183 = vadd.f32 %v991, %v1182
        %v1184 = vpop.f32.mrb[0].mxu0
        %1185 = vdwg.mxu0
        %1194 = vrot.lane.b32.xlu0 %v1108, 96
        %v1195 = vpop.permute.xlu0 %1194
        %1196 = vrot.lane.b32.xlu0 %v1113, 96
        %v1197 = vpop.permute.xlu0 %1196
        %1198 = vrot.lane.b32.xlu0 %v1118, 96
        %v1199 = vpop.permute.xlu0 %1198
        %1200 = vrot.lane.b32.xlu0 %v1123, 96
        %v1201 = vpop.permute.xlu0 %1200
        %1202 = vrot.lane.b32.xlu0 %v1128, 96
        %v1203 = vpop.permute.xlu0 %1202
        %1204 = vrot.lane.b32.xlu0 %v1133, 96
        %v1205 = vpop.permute.xlu0 %1204
        %1206 = vrot.lane.b32.xlu0 %v1138, 96
        %v1207 = vpop.permute.xlu0 %1206
        %1208 = vrot.lane.b32.xlu0 %v1143, 96
        %v1209 = vpop.permute.xlu0 %1208
        %vm1210 = vcmask 64512
        %v1211 = vsel %vm1210, %v1108, 0
        %v1213 = vsel %vm1210, %v1113, 0
        %v1215 = vsel %vm1210, %v1118, 0
        %v1217 = vsel %vm1210, %v1123, 0
        %v1219 = vsel %vm1210, %v1128, 0
        %v1221 = vsel %vm1210, %v1133, 0
        %v1223 = vsel %vm1210, %v1138, 0
        %v1225 = vsel %vm1210, %v1143, 0
        %v1227 = vsel %vm1210, %v1195, 0
        %v1229 = vsel %vm1210, %v1197, 0
        %v1231 = vsel %vm1210, %v1199, 0
        %v1233 = vsel %vm1210, %v1201, 0
        %v1235 = vsel %vm1210, %v1203, 0
        %v1237 = vsel %vm1210, %v1205, 0
        %v1239 = vsel %vm1210, %v1207, 0
        %v1241 = vsel %vm1210, %v1209, 0
        %1243 = vmatprep.subr.mxu0 0.0
        %1244 = vmatpush1.xpose.msra.mxu0 %v1227
        %1245 = vmatprep.subr.mxu0 0.0
        %1246 = vmatpush1.xpose.msra.mxu0 %v1229
        %1247 = vmatprep.subr.mxu0 0.0
        %1248 = vmatpush1.xpose.msra.mxu0 %v1231
        %1249 = vmatprep.subr.mxu0 0.0
        %1250 = vmatpush1.xpose.msra.mxu0 %v1233
        %1251 = vmatprep.subr.mxu0 0.0
        %1252 = vmatpush1.xpose.msra.mxu0 %v1235
        %1253 = vmatprep.subr.mxu0 0.0
        %1254 = vmatpush1.xpose.msra.mxu0 %v1237
        %1255 = vmatprep.subr.mxu0 0.0
        %1256 = vmatpush1.xpose.msra.mxu0 %v1239
        %1257 = vmatprep.subr.mxu0 0.0
        %1258 = vmatpush1.xpose.msra.mxu0 %v1241
        %1259 = vmatprep.subr.mxu0 0.0
        %1260 = vmatpush1.xpose.msra.mxu0 0.0
        %1261 = vmatprep.subr.mxu0 0.0
        %1262 = vmatpush1.xpose.msra.mxu0 0.0
        %1263 = vmatprep.subr.mxu0 0.0
        %1264 = vmatpush1.xpose.msra.mxu0 0.0
        %1265 = vmatprep.subr.mxu0 0.0
        %1266 = vmatpush1.xpose.msra.mxu0 0.0
        %1267 = vmatprep.subr.mxu0 0.0
        %1268 = vmatpush1.xpose.msra.mxu0 0.0
        %1269 = vmatprep.subr.mxu0 0.0
        %1270 = vmatpush1.xpose.msra.mxu0 0.0
        %1271 = vmatprep.subr.mxu0 0.0
        %1272 = vmatpush1.xpose.msra.mxu0 0.0
        %1273 = vmatprep.subr.mxu0 0.0
        %1274 = vmatpush1.xpose.msra.mxu0 0.0
        %1275 = vmatprep.subr.mxu0 0.0
        %1276 = vmatpush1.xpose.msra.mxu0 0.0
        %1277 = vmatprep.subr.mxu0 0.0
        %1278 = vmatpush1.xpose.msra.mxu0 0.0
        %1279 = vmatprep.subr.mxu0 0.0
        %1280 = vmatpush1.xpose.msra.mxu0 0.0
        %1281 = vmatprep.subr.mxu0 0.0
        %1282 = vmatpush1.xpose.msra.mxu0 0.0
        %1283 = vmatprep.subr.mxu0 0.0
        %1284 = vmatpush1.xpose.msra.mxu0 0.0
        %1285 = vmatprep.subr.mxu0 0.0
        %1286 = vmatpush1.xpose.msra.mxu0 0.0
        %1287 = vmatprep.subr.mxu0 0.0
        %1288 = vmatpush1.xpose.msra.mxu0 0.0
        %1289 = vmatprep.subr.mxu0 0.0
        %1290 = vmatpush1.xpose.msra.mxu0 0.0
        %1291 = vmatprep.subr.mxu0 0.0
        %1292 = vmatpush1.xpose.msra.mxu0 0.0
        %1293 = vmatprep.subr.mxu0 0.0
        %1294 = vmatpush1.xpose.msra.mxu0 0.0
        %1295 = vmatprep.subr.mxu0 0.0
        %1296 = vmatpush1.xpose.msra.mxu0 0.0
        %1297 = vmatprep.subr.mxu0 0.0
        %1298 = vmatpush1.xpose.msra.mxu0 0.0
        %1299 = vmatprep.subr.mxu0 0.0
        %1300 = vmatpush1.xpose.msra.mxu0 0.0
        %1301 = vmatprep.subr.mxu0 0.0
        %1302 = vmatpush1.xpose.msra.mxu0 0.0
        %1303 = vmatprep.subr.mxu0 0.0
        %1304 = vmatpush1.xpose.msra.mxu0 0.0
        %1305 = vmatprep.subr.mxu0 0.0
        %1306 = vmatpush1.xpose.msra.mxu0 0.0
        %1307 = vmatprep.mubr.f32.mxu0 0.0
        %1308 = vmatmul.mubr.f32.gmra.mrb[0].mxu0 %v1211
        %v1309 = vpop.f32.mrb[0].mxu0
        %v1310 = vadd.f32 0.0, %v1309
        %v1311 = vpop.f32.mrb[0].mxu0
        %1312 = vmatprep.mubr.f32.mxu0 0.0
        %1313 = vmatmul.mubr.f32.gmra.mrb[0].mxu0 %v1213
        %v1314 = vpop.f32.mrb[0].mxu0
        %v1315 = vadd.f32 0.0, %v1314
        %v1316 = vpop.f32.mrb[0].mxu0
        %1317 = vmatprep.mubr.f32.mxu0 0.0
        %1318 = vmatmul.mubr.f32.gmra.mrb[0].mxu0 %v1215
        %v1319 = vpop.f32.mrb[0].mxu0
        %v1320 = vadd.f32 0.0, %v1319
        %v1321 = vpop.f32.mrb[0].mxu0
        %1322 = vmatprep.mubr.f32.mxu0 0.0
        %1323 = vmatmul.mubr.f32.gmra.mrb[0].mxu0 %v1217
        %v1324 = vpop.f32.mrb[0].mxu0
        %v1325 = vadd.f32 0.0, %v1324
        %v1326 = vpop.f32.mrb[0].mxu0
        %1327 = vmatprep.mubr.f32.mxu0 0.0
        %1328 = vmatmul.mubr.f32.gmra.mrb[0].mxu0 %v1219
        %v1329 = vpop.f32.mrb[0].mxu0
        %v1330 = vadd.f32 0.0, %v1329
        %v1331 = vpop.f32.mrb[0].mxu0
        %1332 = vmatprep.mubr.f32.mxu0 0.0
        %1333 = vmatmul.mubr.f32.gmra.mrb[0].mxu0 %v1221
        %v1334 = vpop.f32.mrb[0].mxu0
        %v1335 = vadd.f32 0.0, %v1334
        %v1336 = vpop.f32.mrb[0].mxu0
        %1337 = vmatprep.mubr.f32.mxu0 0.0
        %1338 = vmatmul.mubr.f32.gmra.mrb[0].mxu0 %v1223
        %v1339 = vpop.f32.mrb[0].mxu0
        %v1340 = vadd.f32 0.0, %v1339
        %v1341 = vpop.f32.mrb[0].mxu0
        %1342 = vmatprep.mubr.f32.mxu0 0.0
        %1343 = vmatmul.mubr.f32.gmra.mrb[0].mxu0 %v1225
        %v1344 = vpop.f32.mrb[0].mxu0
        %v1345 = vadd.f32 0.0, %v1344
        %v1346 = vpop.f32.mrb[0].mxu0
        %1347 = vdwg.mxu0
        %1356 = vrot.lane.b32.xlu0 %v1148, 96
        %v1357 = vpop.permute.xlu0 %1356
        %1358 = vrot.lane.b32.xlu0 %v1153, 96
        %v1359 = vpop.permute.xlu0 %1358
        %1360 = vrot.lane.b32.xlu0 %v1158, 96
        %v1361 = vpop.permute.xlu0 %1360
        %1362 = vrot.lane.b32.xlu0 %v1163, 96
        %v1363 = vpop.permute.xlu0 %1362
        %1364 = vrot.lane.b32.xlu0 %v1168, 96
        %v1365 = vpop.permute.xlu0 %1364
        %1366 = vrot.lane.b32.xlu0 %v1173, 96
        %v1367 = vpop.permute.xlu0 %1366
        %1368 = vrot.lane.b32.xlu0 %v1178, 96
        %v1369 = vpop.permute.xlu0 %1368
        %1370 = vrot.lane.b32.xlu0 %v1183, 96
        %v1371 = vpop.permute.xlu0 %1370
        %v1372 = vsel %vm1210, %v1148, 0
        %v1374 = vsel %vm1210, %v1153, 0
        %v1376 = vsel %vm1210, %v1158, 0
        %v1378 = vsel %vm1210, %v1163, 0
        %v1380 = vsel %vm1210, %v1168, 0
        %v1382 = vsel %vm1210, %v1173, 0
        %v1384 = vsel %vm1210, %v1178, 0
        %v1386 = vsel %vm1210, %v1183, 0
        %v1388 = vsel %vm1210, %v1357, 0
        %v1390 = vsel %vm1210, %v1359, 0
        %v1392 = vsel %vm1210, %v1361, 0
        %v1394 = vsel %vm1210, %v1363, 0
        %v1396 = vsel %vm1210, %v1365, 0
        %v1398 = vsel %vm1210, %v1367, 0
        %v1400 = vsel %vm1210, %v1369, 0
        %v1402 = vsel %vm1210, %v1371, 0
        %1404 = vmatprep.subr.mxu0 0.0
        %1405 = vmatpush1.xpose.msra.mxu0 %v1388
        %1406 = vmatprep.subr.mxu0 0.0
        %1407 = vmatpush1.xpose.msra.mxu0 %v1390
        %1408 = vmatprep.subr.mxu0 0.0
        %1409 = vmatpush1.xpose.msra.mxu0 %v1392
        %1410 = vmatprep.subr.mxu0 0.0
        %1411 = vmatpush1.xpose.msra.mxu0 %v1394
        %1412 = vmatprep.subr.mxu0 0.0
        %1413 = vmatpush1.xpose.msra.mxu0 %v1396
        %1414 = vmatprep.subr.mxu0 0.0
        %1415 = vmatpush1.xpose.msra.mxu0 %v1398
        %1416 = vmatprep.subr.mxu0 0.0
        %1417 = vmatpush1.xpose.msra.mxu0 %v1400
        %1418 = vmatprep.subr.mxu0 0.0
        %1419 = vmatpush1.xpose.msra.mxu0 %v1402
        %1420 = vmatprep.subr.mxu0 0.0
        %1421 = vmatpush1.xpose.msra.mxu0 0.0
        %1422 = vmatprep.subr.mxu0 0.0
        %1423 = vmatpush1.xpose.msra.mxu0 0.0
        %1424 = vmatprep.subr.mxu0 0.0
        %1425 = vmatpush1.xpose.msra.mxu0 0.0
        %1426 = vmatprep.subr.mxu0 0.0
        %1427 = vmatpush1.xpose.msra.mxu0 0.0
        %1428 = vmatprep.subr.mxu0 0.0
        %1429 = vmatpush1.xpose.msra.mxu0 0.0
        %1430 = vmatprep.subr.mxu0 0.0
        %1431 = vmatpush1.xpose.msra.mxu0 0.0
        %1432 = vmatprep.subr.mxu0 0.0
        %1433 = vmatpush1.xpose.msra.mxu0 0.0
        %1434 = vmatprep.subr.mxu0 0.0
        %1435 = vmatpush1.xpose.msra.mxu0 0.0
        %1436 = vmatprep.subr.mxu0 0.0
        %1437 = vmatpush1.xpose.msra.mxu0 0.0
        %1438 = vmatprep.subr.mxu0 0.0
        %1439 = vmatpush1.xpose.msra.mxu0 0.0
        %1440 = vmatprep.subr.mxu0 0.0
        %1441 = vmatpush1.xpose.msra.mxu0 0.0
        %1442 = vmatprep.subr.mxu0 0.0
        %1443 = vmatpush1.xpose.msra.mxu0 0.0
        %1444 = vmatprep.subr.mxu0 0.0
        %1445 = vmatpush1.xpose.msra.mxu0 0.0
        %1446 = vmatprep.subr.mxu0 0.0
        %1447 = vmatpush1.xpose.msra.mxu0 0.0
        %1448 = vmatprep.subr.mxu0 0.0
        %1449 = vmatpush1.xpose.msra.mxu0 0.0
        %1450 = vmatprep.subr.mxu0 0.0
        %1451 = vmatpush1.xpose.msra.mxu0 0.0
        %1452 = vmatprep.subr.mxu0 0.0
        %1453 = vmatpush1.xpose.msra.mxu0 0.0
        %1454 = vmatprep.subr.mxu0 0.0
        %1455 = vmatpush1.xpose.msra.mxu0 0.0
        %1456 = vmatprep.subr.mxu0 0.0
        %1457 = vmatpush1.xpose.msra.mxu0 0.0
        %1458 = vmatprep.subr.mxu0 0.0
        %1459 = vmatpush1.xpose.msra.mxu0 0.0
        %1460 = vmatprep.subr.mxu0 0.0
        %1461 = vmatpush1.xpose.msra.mxu0 0.0
        %1462 = vmatprep.subr.mxu0 0.0
        %1463 = vmatpush1.xpose.msra.mxu0 0.0
        %1464 = vmatprep.subr.mxu0 0.0
        %1465 = vmatpush1.xpose.msra.mxu0 0.0
        %1466 = vmatprep.subr.mxu0 0.0
        %1467 = vmatpush1.xpose.msra.mxu0 0.0
        %1468 = vmatprep.mubr.f32.mxu0 0.0
        %1469 = vmatmul.mubr.f32.gmra.mrb[0].mxu0 %v1372
        %v1470 = vpop.f32.mrb[0].mxu0
        %v1471 = vadd.f32 0.0, %v1470
        %v1472 = vpop.f32.mrb[0].mxu0
        %1473 = vmatprep.mubr.f32.mxu0 0.0
        %1474 = vmatmul.mubr.f32.gmra.mrb[0].mxu0 %v1374
        %v1475 = vpop.f32.mrb[0].mxu0
        %v1476 = vadd.f32 0.0, %v1475
        %v1477 = vpop.f32.mrb[0].mxu0
        %1478 = vmatprep.mubr.f32.mxu0 0.0
        %1479 = vmatmul.mubr.f32.gmra.mrb[0].mxu0 %v1376
        %v1480 = vpop.f32.mrb[0].mxu0
        %v1481 = vadd.f32 0.0, %v1480
        %v1482 = vpop.f32.mrb[0].mxu0
        %1483 = vmatprep.mubr.f32.mxu0 0.0
        %1484 = vmatmul.mubr.f32.gmra.mrb[0].mxu0 %v1378
        %v1485 = vpop.f32.mrb[0].mxu0
        %v1486 = vadd.f32 0.0, %v1485
        %v1487 = vpop.f32.mrb[0].mxu0
        %1488 = vmatprep.mubr.f32.mxu0 0.0
        %1489 = vmatmul.mubr.f32.gmra.mrb[0].mxu0 %v1380
        %v1490 = vpop.f32.mrb[0].mxu0
        %v1491 = vadd.f32 0.0, %v1490
        %v1492 = vpop.f32.mrb[0].mxu0
        %1493 = vmatprep.mubr.f32.mxu0 0.0
        %1494 = vmatmul.mubr.f32.gmra.mrb[0].mxu0 %v1382
        %v1495 = vpop.f32.mrb[0].mxu0
        %v1496 = vadd.f32 0.0, %v1495
        %v1497 = vpop.f32.mrb[0].mxu0
        %1498 = vmatprep.mubr.f32.mxu0 0.0
        %1499 = vmatmul.mubr.f32.gmra.mrb[0].mxu0 %v1384
        %v1500 = vpop.f32.mrb[0].mxu0
        %v1501 = vadd.f32 0.0, %v1500
        %v1502 = vpop.f32.mrb[0].mxu0
        %1503 = vmatprep.mubr.f32.mxu0 0.0
        %1504 = vmatmul.mubr.f32.gmra.mrb[0].mxu0 %v1386
        %v1505 = vpop.f32.mrb[0].mxu0
        %v1506 = vadd.f32 0.0, %v1505
        %v1507 = vpop.f32.mrb[0].mxu0
        %1508 = vdwg.mxu0
        %vm1509 = vcmask 523264
        %v1510 = vsel %vm1509, %v1310, -inf
        %1511 = vmax.xlane.f32.xlu0 %v1510
        %v1512 = vpop.xlane.xlu0 %1511
        %v1513 = vsel %vm1509, %v1315, -inf
        %1514 = vmax.xlane.f32.xlu0 %v1513
        %v1515 = vpop.xlane.xlu0 %1514
        %v1516 = vsel %vm1509, %v1320, -inf
        %1517 = vmax.xlane.f32.xlu0 %v1516
        %v1518 = vpop.xlane.xlu0 %1517
        %v1519 = vsel %vm1509, %v1325, -inf
        %1520 = vmax.xlane.f32.xlu0 %v1519
        %v1521 = vpop.xlane.xlu0 %1520
        %v1522 = vsel %vm1509, %v1330, -inf
        %1523 = vmax.xlane.f32.xlu0 %v1522
        %v1524 = vpop.xlane.xlu0 %1523
        %v1525 = vsel %vm1509, %v1335, -inf
        %1526 = vmax.xlane.f32.xlu0 %v1525
        %v1527 = vpop.xlane.xlu0 %1526
        %v1528 = vsel %vm1509, %v1340, -inf
        %1529 = vmax.xlane.f32.xlu0 %v1528
        %v1530 = vpop.xlane.xlu0 %1529
        %v1531 = vsel %vm1509, %v1345, -inf
        %1532 = vmax.xlane.f32.xlu0 %v1531
        %v1533 = vpop.xlane.xlu0 %1532
        %v1534 = vsel %vm1509, %v1471, -inf
        %1535 = vmax.xlane.f32.xlu0 %v1534
        %v1536 = vpop.xlane.xlu0 %1535
        %v1537 = vsel %vm1509, %v1476, -inf
        %1538 = vmax.xlane.f32.xlu0 %v1537
        %v1539 = vpop.xlane.xlu0 %1538
        %v1540 = vsel %vm1509, %v1481, -inf
        %1541 = vmax.xlane.f32.xlu0 %v1540
        %v1542 = vpop.xlane.xlu0 %1541
        %v1543 = vsel %vm1509, %v1486, -inf
        %1544 = vmax.xlane.f32.xlu0 %v1543
        %v1545 = vpop.xlane.xlu0 %1544
        %v1546 = vsel %vm1509, %v1491, -inf
        %1547 = vmax.xlane.f32.xlu0 %v1546
        %v1548 = vpop.xlane.xlu0 %1547
        %v1549 = vsel %vm1509, %v1496, -inf
        %1550 = vmax.xlane.f32.xlu0 %v1549
        %v1551 = vpop.xlane.xlu0 %1550
        %v1552 = vsel %vm1509, %v1501, -inf
        %1553 = vmax.xlane.f32.xlu0 %v1552
        %v1554 = vpop.xlane.xlu0 %1553
        %v1555 = vsel %vm1509, %v1506, -inf
        %1556 = vmax.xlane.f32.xlu0 %v1555
        %v1557 = vpop.xlane.xlu0 %1556
        %v1558 = vsub.f32 %v1310, %v1512
        %v1559 = vsub.f32 %v1315, %v1515
        %v1560 = vsub.f32 %v1320, %v1518
        %v1561 = vsub.f32 %v1325, %v1521
        %v1562 = vsub.f32 %v1330, %v1524
        %v1563 = vsub.f32 %v1335, %v1527
        %v1564 = vsub.f32 %v1340, %v1530
        %v1565 = vsub.f32 %v1345, %v1533
        %v1566 = vsub.f32 %v1471, %v1536
        %v1567 = vsub.f32 %v1476, %v1539
        %v1568 = vsub.f32 %v1481, %v1542
        %v1569 = vsub.f32 %v1486, %v1545
        %v1570 = vsub.f32 %v1491, %v1548
        %v1571 = vsub.f32 %v1496, %v1551
        %v1572 = vsub.f32 %v1501, %v1554
        %v1573 = vsub.f32 %v1506, %v1557
        %v1574 = vmul.f32 %v1558, 1.442695
        %v1575 = vpow.pop %v1574
        %v1576 = vmul.f32 %v1559, 1.442695
        %v1577 = vpow.pop %v1576
        %v1578 = vmul.f32 %v1560, 1.442695
        %v1579 = vpow.pop %v1578
        %v1580 = vmul.f32 %v1561, 1.442695
        %v1581 = vpow.pop %v1580
        %v1582 = vmul.f32 %v1562, 1.442695
        %v1583 = vpow.pop %v1582
        %v1584 = vmul.f32 %v1563, 1.442695
        %v1585 = vpow.pop %v1584
        %v1586 = vmul.f32 %v1564, 1.442695
        %v1587 = vpow.pop %v1586
        %v1588 = vmul.f32 %v1565, 1.442695
        %v1589 = vpow.pop %v1588
        %v1590 = vmul.f32 %v1566, 1.442695
        %v1591 = vpow.pop %v1590
        %v1592 = vmul.f32 %v1567, 1.442695
        %v1593 = vpow.pop %v1592
        %v1594 = vmul.f32 %v1568, 1.442695
        %v1595 = vpow.pop %v1594
        %v1596 = vmul.f32 %v1569, 1.442695
        %v1597 = vpow.pop %v1596
        %v1598 = vmul.f32 %v1570, 1.442695
        %v1599 = vpow.pop %v1598
        %v1600 = vmul.f32 %v1571, 1.442695
        %v1601 = vpow.pop %v1600
        %v1602 = vmul.f32 %v1572, 1.442695
        %v1603 = vpow.pop %v1602
        %v1604 = vmul.f32 %v1573, 1.442695
        %v1605 = vpow.pop %v1604
        %v1606 = vsel %vm1509, %v1575, 0.0
        %1607 = vadd.xlane.f32.xlu0 %v1606
        %v1608 = vpop.xlane.xlu0 %1607
        %v1609 = vsel %vm1509, %v1577, 0.0
        %1610 = vadd.xlane.f32.xlu0 %v1609
        %v1611 = vpop.xlane.xlu0 %1610
        %v1612 = vsel %vm1509, %v1579, 0.0
        %1613 = vadd.xlane.f32.xlu0 %v1612
        %v1614 = vpop.xlane.xlu0 %1613
        %v1615 = vsel %vm1509, %v1581, 0.0
        %1616 = vadd.xlane.f32.xlu0 %v1615
        %v1617 = vpop.xlane.xlu0 %1616
        %v1618 = vsel %vm1509, %v1583, 0.0
        %1619 = vadd.xlane.f32.xlu0 %v1618
        %v1620 = vpop.xlane.xlu0 %1619
        %v1621 = vsel %vm1509, %v1585, 0.0
        %1622 = vadd.xlane.f32.xlu0 %v1621
        %v1623 = vpop.xlane.xlu0 %1622
        %v1624 = vsel %vm1509, %v1587, 0.0
        %1625 = vadd.xlane.f32.xlu0 %v1624
        %v1626 = vpop.xlane.xlu0 %1625
        %v1627 = vsel %vm1509, %v1589, 0.0
        %1628 = vadd.xlane.f32.xlu0 %v1627
        %v1629 = vpop.xlane.xlu0 %1628
        %v1630 = vsel %vm1509, %v1591, 0.0
        %1631 = vadd.xlane.f32.xlu0 %v1630
        %v1632 = vpop.xlane.xlu0 %1631
        %v1633 = vsel %vm1509, %v1593, 0.0
        %1634 = vadd.xlane.f32.xlu0 %v1633
        %v1635 = vpop.xlane.xlu0 %1634
        %v1636 = vsel %vm1509, %v1595, 0.0
        %1637 = vadd.xlane.f32.xlu0 %v1636
        %v1638 = vpop.xlane.xlu0 %1637
        %v1639 = vsel %vm1509, %v1597, 0.0
        %1640 = vadd.xlane.f32.xlu0 %v1639
        %v1641 = vpop.xlane.xlu0 %1640
        %v1642 = vsel %vm1509, %v1599, 0.0
        %1643 = vadd.xlane.f32.xlu0 %v1642
        %v1644 = vpop.xlane.xlu0 %1643
        %v1645 = vsel %vm1509, %v1601, 0.0
        %1646 = vadd.xlane.f32.xlu0 %v1645
        %v1647 = vpop.xlane.xlu0 %1646
        %v1648 = vsel %vm1509, %v1603, 0.0
        %1649 = vadd.xlane.f32.xlu0 %v1648
        %v1650 = vpop.xlane.xlu0 %1649
        %v1651 = vsel %vm1509, %v1605, 0.0
        %1652 = vadd.xlane.f32.xlu0 %v1651
        %v1653 = vpop.xlane.xlu0 %1652
        %v1654 = vrcp.pop %v1608
        %v1655 = vrcp.pop %v1611
        %v1656 = vrcp.pop %v1614
        %v1657 = vrcp.pop %v1617
        %v1658 = vrcp.pop %v1620
        %v1659 = vrcp.pop %v1623
        %v1660 = vrcp.pop %v1626
        %v1661 = vrcp.pop %v1629
        %v1662 = vrcp.pop %v1632
        %v1663 = vrcp.pop %v1635
        %v1664 = vrcp.pop %v1638
        %v1665 = vrcp.pop %v1641
        %v1666 = vrcp.pop %v1644
        %v1667 = vrcp.pop %v1647
        %v1668 = vrcp.pop %v1650
        %v1669 = vrcp.pop %v1653
        %v1670 = vmul.f32 %v1575, %v1654
        %v1671 = vmul.f32 %v1577, %v1655
        %v1672 = vmul.f32 %v1579, %v1656
        %v1673 = vmul.f32 %v1581, %v1657
        %v1674 = vmul.f32 %v1583, %v1658
        %v1675 = vmul.f32 %v1585, %v1659
        %v1676 = vmul.f32 %v1587, %v1660
        %v1677 = vmul.f32 %v1589, %v1661
        %v1678 = vmul.f32 %v1591, %v1662
        %v1679 = vmul.f32 %v1593, %v1663
        %v1680 = vmul.f32 %v1595, %v1664
        %v1681 = vmul.f32 %v1597, %v1665
        %v1682 = vmul.f32 %v1599, %v1666
        %v1683 = vmul.f32 %v1601, %v1667
        %v1684 = vmul.f32 %v1603, %v1668
        %v1685 = vmul.f32 %v1605, %v1669
        %1686 = vrot.lane.b32.xlu0 %v1108, 64
        %v1687 = vpop.permute.xlu0 %1686
        %1688 = vrot.lane.b32.xlu0 %v1113, 64
        %v1689 = vpop.permute.xlu0 %1688
        %1690 = vrot.lane.b32.xlu0 %v1118, 64
        %v1691 = vpop.permute.xlu0 %1690
        %1692 = vrot.lane.b32.xlu0 %v1123, 64
        %v1693 = vpop.permute.xlu0 %1692
        %1694 = vrot.lane.b32.xlu0 %v1128, 64
        %v1695 = vpop.permute.xlu0 %1694
        %1696 = vrot.lane.b32.xlu0 %v1133, 64
        %v1697 = vpop.permute.xlu0 %1696
        %1698 = vrot.lane.b32.xlu0 %v1138, 64
        %v1699 = vpop.permute.xlu0 %1698
        %1700 = vrot.lane.b32.xlu0 %v1143, 64
        %v1701 = vpop.permute.xlu0 %1700
        %v1711 = vsel %vm1509, %v1670, 0
        %v1714 = vsel %vm1509, %v1671, 0
        %v1717 = vsel %vm1509, %v1672, 0
        %v1720 = vsel %vm1509, %v1673, 0
        %v1723 = vsel %vm1509, %v1674, 0
        %v1726 = vsel %vm1509, %v1675, 0
        %v1729 = vsel %vm1509, %v1676, 0
        %v1732 = vsel %vm1509, %v1677, 0
        %1734 = vmatprep.subr.mxu0 0.0
        %1735 = vmatpush1.msra.mxu0 %v1687
        %1736 = vmatprep.subr.mxu0 0.0
        %1737 = vmatpush1.msra.mxu0 %v1689
        %1738 = vmatprep.subr.mxu0 0.0
        %1739 = vmatpush1.msra.mxu0 %v1691
        %1740 = vmatprep.subr.mxu0 0.0
        %1741 = vmatpush1.msra.mxu0 %v1693
        %1742 = vmatprep.subr.mxu0 0.0
        %1743 = vmatpush1.msra.mxu0 %v1695
        %1744 = vmatprep.subr.mxu0 0.0
        %1745 = vmatpush1.msra.mxu0 %v1697
        %1746 = vmatprep.subr.mxu0 0.0
        %1747 = vmatpush1.msra.mxu0 %v1699
        %1748 = vmatprep.subr.mxu0 0.0
        %1749 = vmatpush1.msra.mxu0 %v1701
        %1750 = vmatprep.subr.mxu0 0.0
        %1751 = vmatpush1.msra.mxu0 0.0
        %1752 = vmatprep.subr.mxu0 0.0
        %1753 = vmatpush1.msra.mxu0 0.0
        %1754 = vmatprep.subr.mxu0 0.0
        %1755 = vmatpush1.msra.mxu0 0.0
        %1756 = vmatprep.subr.mxu0 0.0
        %1757 = vmatpush1.msra.mxu0 0.0
        %1758 = vmatprep.subr.mxu0 0.0
        %1759 = vmatpush1.msra.mxu0 0.0
        %1760 = vmatprep.subr.mxu0 0.0
        %1761 = vmatpush1.msra.mxu0 0.0
        %1762 = vmatprep.subr.mxu0 0.0
        %1763 = vmatpush1.msra.mxu0 0.0
        %1764 = vmatprep.subr.mxu0 0.0
        %1765 = vmatpush1.msra.mxu0 0.0
        %1766 = vmatprep.subr.mxu0 0.0
        %1767 = vmatpush1.msra.mxu0 0.0
        %1768 = vmatprep.subr.mxu0 0.0
        %1769 = vmatpush1.msra.mxu0 0.0
        %1770 = vmatprep.subr.mxu0 0.0
        %1771 = vmatpush1.msra.mxu0 0.0
        %1772 = vmatprep.subr.mxu0 0.0
        %1773 = vmatpush1.msra.mxu0 0.0
        %1774 = vmatprep.subr.mxu0 0.0
        %1775 = vmatpush1.msra.mxu0 0.0
        %1776 = vmatprep.subr.mxu0 0.0
        %1777 = vmatpush1.msra.mxu0 0.0
        %1778 = vmatprep.subr.mxu0 0.0
        %1779 = vmatpush1.msra.mxu0 0.0
        %1780 = vmatprep.subr.mxu0 0.0
        %1781 = vmatpush1.msra.mxu0 0.0
        %1782 = vmatprep.subr.mxu0 0.0
        %1783 = vmatpush1.msra.mxu0 0.0
        %1784 = vmatprep.subr.mxu0 0.0
        %1785 = vmatpush1.msra.mxu0 0.0
        %1786 = vmatprep.subr.mxu0 0.0
        %1787 = vmatpush1.msra.mxu0 0.0
        %1788 = vmatprep.subr.mxu0 0.0
        %1789 = vmatpush1.msra.mxu0 0.0
        %1790 = vmatprep.subr.mxu0 0.0
        %1791 = vmatpush1.msra.mxu0 0.0
        %1792 = vmatprep.subr.mxu0 0.0
        %1793 = vmatpush1.msra.mxu0 0.0
        %1794 = vmatprep.subr.mxu0 0.0
        %1795 = vmatpush1.msra.mxu0 0.0
        %1796 = vmatprep.subr.mxu0 0.0
        %1797 = vmatpush1.msra.mxu0 0.0
        %1798 = vmatprep.mubr.f32.mxu0 0.0
        %1799 = vmatmul.mubr.f32.gmra.mrb[0].mxu0 %v1711
        %v1800 = vpop.f32.mrb[0].mxu0
        %v1801 = vadd.f32 0.0, %v1800
        %v1802 = vpop.f32.mrb[0].mxu0
        %1803 = vmatprep.mubr.f32.mxu0 0.0
        %1804 = vmatmul.mubr.f32.gmra.mrb[0].mxu0 %v1714
        %v1805 = vpop.f32.mrb[0].mxu0
        %v1806 = vadd.f32 0.0, %v1805
        %v1807 = vpop.f32.mrb[0].mxu0
        %1808 = vmatprep.mubr.f32.mxu0 0.0
        %1809 = vmatmul.mubr.f32.gmra.mrb[0].mxu0 %v1717
        %v1810 = vpop.f32.mrb[0].mxu0
        %v1811 = vadd.f32 0.0, %v1810
        %v1812 = vpop.f32.mrb[0].mxu0
        %1813 = vmatprep.mubr.f32.mxu0 0.0
        %1814 = vmatmul.mubr.f32.gmra.mrb[0].mxu0 %v1720
        %v1815 = vpop.f32.mrb[0].mxu0
        %v1816 = vadd.f32 0.0, %v1815
        %v1817 = vpop.f32.mrb[0].mxu0
        %1818 = vmatprep.mubr.f32.mxu0 0.0
        %1819 = vmatmul.mubr.f32.gmra.mrb[0].mxu0 %v1723
        %v1820 = vpop.f32.mrb[0].mxu0
        %v1821 = vadd.f32 0.0, %v1820
        %v1822 = vpop.f32.mrb[0].mxu0
        %1823 = vmatprep.mubr.f32.mxu0 0.0
        %1824 = vmatmul.mubr.f32.gmra.mrb[0].mxu0 %v1726
        %v1825 = vpop.f32.mrb[0].mxu0
        %v1826 = vadd.f32 0.0, %v1825
        %v1827 = vpop.f32.mrb[0].mxu0
        %1828 = vmatprep.mubr.f32.mxu0 0.0
        %1829 = vmatmul.mubr.f32.gmra.mrb[0].mxu0 %v1729
        %v1830 = vpop.f32.mrb[0].mxu0
        %v1831 = vadd.f32 0.0, %v1830
        %v1832 = vpop.f32.mrb[0].mxu0
        %1833 = vmatprep.mubr.f32.mxu0 0.0
        %1834 = vmatmul.mubr.f32.gmra.mrb[0].mxu0 %v1732
        %v1835 = vpop.f32.mrb[0].mxu0
        %v1836 = vadd.f32 0.0, %v1835
        %v1837 = vpop.f32.mrb[0].mxu0
        %1838 = vdwg.mxu0
        %1839 = vrot.lane.b32.xlu0 %v1148, 64
        %v1840 = vpop.permute.xlu0 %1839
        %1841 = vrot.lane.b32.xlu0 %v1153, 64
        %v1842 = vpop.permute.xlu0 %1841
        %1843 = vrot.lane.b32.xlu0 %v1158, 64
        %v1844 = vpop.permute.xlu0 %1843
        %1845 = vrot.lane.b32.xlu0 %v1163, 64
        %v1846 = vpop.permute.xlu0 %1845
        %1847 = vrot.lane.b32.xlu0 %v1168, 64
        %v1848 = vpop.permute.xlu0 %1847
        %1849 = vrot.lane.b32.xlu0 %v1173, 64
        %v1850 = vpop.permute.xlu0 %1849
        %1851 = vrot.lane.b32.xlu0 %v1178, 64
        %v1852 = vpop.permute.xlu0 %1851
        %1853 = vrot.lane.b32.xlu0 %v1183, 64
        %v1854 = vpop.permute.xlu0 %1853
        %v1864 = vsel %vm1509, %v1678, 0
        %v1867 = vsel %vm1509, %v1679, 0
        %v1870 = vsel %vm1509, %v1680, 0
        %v1873 = vsel %vm1509, %v1681, 0
        %v1876 = vsel %vm1509, %v1682, 0
        %v1879 = vsel %vm1509, %v1683, 0
        %v1882 = vsel %vm1509, %v1684, 0
        %v1885 = vsel %vm1509, %v1685, 0
        %1887 = vmatprep.subr.mxu0 0.0
        %1888 = vmatpush1.msra.mxu0 %v1840
        %1889 = vmatprep.subr.mxu0 0.0
        %1890 = vmatpush1.msra.mxu0 %v1842
        %1891 = vmatprep.subr.mxu0 0.0
        %1892 = vmatpush1.msra.mxu0 %v1844
        %1893 = vmatprep.subr.mxu0 0.0
        %1894 = vmatpush1.msra.mxu0 %v1846
        %1895 = vmatprep.subr.mxu0 0.0
        %1896 = vmatpush1.msra.mxu0 %v1848
        %1897 = vmatprep.subr.mxu0 0.0
        %1898 = vmatpush1.msra.mxu0 %v1850
        %1899 = vmatprep.subr.mxu0 0.0
        %1900 = vmatpush1.msra.mxu0 %v1852
        %1901 = vmatprep.subr.mxu0 0.0
        %1902 = vmatpush1.msra.mxu0 %v1854
        %1903 = vmatprep.subr.mxu0 0.0
        %1904 = vmatpush1.msra.mxu0 0.0
        %1905 = vmatprep.subr.mxu0 0.0
        %1906 = vmatpush1.msra.mxu0 0.0
        %1907 = vmatprep.subr.mxu0 0.0
        %1908 = vmatpush1.msra.mxu0 0.0
        %1909 = vmatprep.subr.mxu0 0.0
        %1910 = vmatpush1.msra.mxu0 0.0
        %1911 = vmatprep.subr.mxu0 0.0
        %1912 = vmatpush1.msra.mxu0 0.0
        %1913 = vmatprep.subr.mxu0 0.0
        %1914 = vmatpush1.msra.mxu0 0.0
        %1915 = vmatprep.subr.mxu0 0.0
        %1916 = vmatpush1.msra.mxu0 0.0
        %1917 = vmatprep.subr.mxu0 0.0
        %1918 = vmatpush1.msra.mxu0 0.0
        %1919 = vmatprep.subr.mxu0 0.0
        %1920 = vmatpush1.msra.mxu0 0.0
        %1921 = vmatprep.subr.mxu0 0.0
        %1922 = vmatpush1.msra.mxu0 0.0
        %1923 = vmatprep.subr.mxu0 0.0
        %1924 = vmatpush1.msra.mxu0 0.0
        %1925 = vmatprep.subr.mxu0 0.0
        %1926 = vmatpush1.msra.mxu0 0.0
        %1927 = vmatprep.subr.mxu0 0.0
        %1928 = vmatpush1.msra.mxu0 0.0
        %1929 = vmatprep.subr.mxu0 0.0
        %1930 = vmatpush1.msra.mxu0 0.0
        %1931 = vmatprep.subr.mxu0 0.0
        %1932 = vmatpush1.msra.mxu0 0.0
        %1933 = vmatprep.subr.mxu0 0.0
        %1934 = vmatpush1.msra.mxu0 0.0
        %1935 = vmatprep.subr.mxu0 0.0
        %1936 = vmatpush1.msra.mxu0 0.0
        %1937 = vmatprep.subr.mxu0 0.0
        %1938 = vmatpush1.msra.mxu0 0.0
        %1939 = vmatprep.subr.mxu0 0.0
        %1940 = vmatpush1.msra.mxu0 0.0
        %1941 = vmatprep.subr.mxu0 0.0
        %1942 = vmatpush1.msra.mxu0 0.0
        %1943 = vmatprep.subr.mxu0 0.0
        %1944 = vmatpush1.msra.mxu0 0.0
        %1945 = vmatprep.subr.mxu0 0.0
        %1946 = vmatpush1.msra.mxu0 0.0
        %1947 = vmatprep.subr.mxu0 0.0
        %1948 = vmatpush1.msra.mxu0 0.0
        %1949 = vmatprep.subr.mxu0 0.0
        %1950 = vmatpush1.msra.mxu0 0.0
        %1951 = vmatprep.mubr.f32.mxu0 0.0
        %1952 = vmatmul.mubr.f32.gmra.mrb[0].mxu0 %v1864
        %v1953 = vpop.f32.mrb[0].mxu0
        %v1954 = vadd.f32 0.0, %v1953
        %v1955 = vpop.f32.mrb[0].mxu0
        %1956 = vmatprep.mubr.f32.mxu0 0.0
        %1957 = vmatmul.mubr.f32.gmra.mrb[0].mxu0 %v1867
        %v1958 = vpop.f32.mrb[0].mxu0
        %v1959 = vadd.f32 0.0, %v1958
        %v1960 = vpop.f32.mrb[0].mxu0
        %1961 = vmatprep.mubr.f32.mxu0 0.0
        %1962 = vmatmul.mubr.f32.gmra.mrb[0].mxu0 %v1870
        %v1963 = vpop.f32.mrb[0].mxu0
        %v1964 = vadd.f32 0.0, %v1963
        %v1965 = vpop.f32.mrb[0].mxu0
        %1966 = vmatprep.mubr.f32.mxu0 0.0
        %1967 = vmatmul.mubr.f32.gmra.mrb[0].mxu0 %v1873
        %v1968 = vpop.f32.mrb[0].mxu0
        %v1969 = vadd.f32 0.0, %v1968
        %v1970 = vpop.f32.mrb[0].mxu0
        %1971 = vmatprep.mubr.f32.mxu0 0.0
        %1972 = vmatmul.mubr.f32.gmra.mrb[0].mxu0 %v1876
        %v1973 = vpop.f32.mrb[0].mxu0
        %v1974 = vadd.f32 0.0, %v1973
        %v1975 = vpop.f32.mrb[0].mxu0
        %1976 = vmatprep.mubr.f32.mxu0 0.0
        %1977 = vmatmul.mubr.f32.gmra.mrb[0].mxu0 %v1879
        %v1978 = vpop.f32.mrb[0].mxu0
        %v1979 = vadd.f32 0.0, %v1978
        %v1980 = vpop.f32.mrb[0].mxu0
        %1981 = vmatprep.mubr.f32.mxu0 0.0
        %1982 = vmatmul.mubr.f32.gmra.mrb[0].mxu0 %v1882
        %v1983 = vpop.f32.mrb[0].mxu0
        %v1984 = vadd.f32 0.0, %v1983
        %v1985 = vpop.f32.mrb[0].mxu0
        %1986 = vmatprep.mubr.f32.mxu0 0.0
        %1987 = vmatmul.mubr.f32.gmra.mrb[0].mxu0 %v1885
        %v1988 = vpop.f32.mrb[0].mxu0
        %v1989 = vadd.f32 0.0, %v1988
        %v1990 = vpop.f32.mrb[0].mxu0
        %1991 = vdwg.mxu0
        %1992 = vst.msk [vmem:[#allocation2] sm:$0xff] %vm1210, %v1801
        %1993 = vst.msk [vmem:[#allocation2 + $0x8] sm:$0xff] %vm1210, %v1806
        %1994 = vst.msk [vmem:[#allocation2 + $0x10] sm:$0xff] %vm1210, %v1811
        %1995 = vst.msk [vmem:[#allocation2 + $0x18] sm:$0xff] %vm1210, %v1816
        %1996 = vst.msk [vmem:[#allocation2 + $0x20] sm:$0xff] %vm1210, %v1821
        %1997 = vst.msk [vmem:[#allocation2 + $0x28] sm:$0xff] %vm1210, %v1826
        %1998 = vst.msk [vmem:[#allocation2 + $0x30] sm:$0xff] %vm1210, %v1831
        %1999 = vst.msk [vmem:[#allocation2 + $0x38] sm:$0xff] %vm1210, %v1836
        %2000 = vst.msk [vmem:[#allocation2 + $0x40] sm:$0xff] %vm1210, %v1954
        %2001 = vst.msk [vmem:[#allocation2 + $0x48] sm:$0xff] %vm1210, %v1959
        %2002 = vst.msk [vmem:[#allocation2 + $0x50] sm:$0xff] %vm1210, %v1964
        %2003 = vst.msk [vmem:[#allocation2 + $0x58] sm:$0xff] %vm1210, %v1969
        %2004 = vst.msk [vmem:[#allocation2 + $0x60] sm:$0xff] %vm1210, %v1974
        %2005 = vst.msk [vmem:[#allocation2 + $0x68] sm:$0xff] %vm1210, %v1979
        %2006 = vst.msk [vmem:[#allocation2 + $0x70] sm:$0xff] %vm1210, %v1984
        %2007 = vst.msk [vmem:[#allocation2 + $0x78] sm:$0xff] %vm1210, %v1989
        %2008 = vrot.lane.b32.xlu0 %v1108, 120
        %v2009 = vpop.permute.xlu0 %2008
        %2010 = vrot.lane.b32.xlu0 %v1113, 120
        %v2011 = vpop.permute.xlu0 %2010
        %2012 = vrot.lane.b32.xlu0 %v1118, 120
        %v2013 = vpop.permute.xlu0 %2012
        %2014 = vrot.lane.b32.xlu0 %v1123, 120
        %v2015 = vpop.permute.xlu0 %2014
        %2016 = vrot.lane.b32.xlu0 %v1128, 120
        %v2017 = vpop.permute.xlu0 %2016
        %2018 = vrot.lane.b32.xlu0 %v1133, 120
        %v2019 = vpop.permute.xlu0 %2018
        %2020 = vrot.lane.b32.xlu0 %v1138, 120
        %v2021 = vpop.permute.xlu0 %2020
        %2022 = vrot.lane.b32.xlu0 %v1143, 120
        %v2023 = vpop.permute.xlu0 %2022
        %2024 = vrot.lane.b32.xlu0 %v1108, 88
        %v2025 = vpop.permute.xlu0 %2024
        %2026 = vrot.lane.b32.xlu0 %v1113, 88
        %v2027 = vpop.permute.xlu0 %2026
        %2028 = vrot.lane.b32.xlu0 %v1118, 88
        %v2029 = vpop.permute.xlu0 %2028
        %2030 = vrot.lane.b32.xlu0 %v1123, 88
        %v2031 = vpop.permute.xlu0 %2030
        %2032 = vrot.lane.b32.xlu0 %v1128, 88
        %v2033 = vpop.permute.xlu0 %2032
        %2034 = vrot.lane.b32.xlu0 %v1133, 88
        %v2035 = vpop.permute.xlu0 %2034
        %2036 = vrot.lane.b32.xlu0 %v1138, 88
        %v2037 = vpop.permute.xlu0 %2036
        %2038 = vrot.lane.b32.xlu0 %v1143, 88
        %v2039 = vpop.permute.xlu0 %2038
        %v2040 = vsel %vm1210, %v2009, 0
        %v2042 = vsel %vm1210, %v2011, 0
        %v2044 = vsel %vm1210, %v2013, 0
        %v2046 = vsel %vm1210, %v2015, 0
        %v2048 = vsel %vm1210, %v2017, 0
        %v2050 = vsel %vm1210, %v2019, 0
        %v2052 = vsel %vm1210, %v2021, 0
        %v2054 = vsel %vm1210, %v2023, 0
        %v2056 = vsel %vm1210, %v2025, 0
        %v2058 = vsel %vm1210, %v2027, 0
        %v2060 = vsel %vm1210, %v2029, 0
        %v2062 = vsel %vm1210, %v2031, 0
        %v2064 = vsel %vm1210, %v2033, 0
        %v2066 = vsel %vm1210, %v2035, 0
        %v2068 = vsel %vm1210, %v2037, 0
        %v2070 = vsel %vm1210, %v2039, 0
        %2072 = vmatprep.subr.mxu0 0.0
        %2073 = vmatpush1.xpose.msra.mxu0 %v2056
        %2074 = vmatprep.subr.mxu0 0.0
        %2075 = vmatpush1.xpose.msra.mxu0 %v2058
        %2076 = vmatprep.subr.mxu0 0.0
        %2077 = vmatpush1.xpose.msra.mxu0 %v2060
        %2078 = vmatprep.subr.mxu0 0.0
        %2079 = vmatpush1.xpose.msra.mxu0 %v2062
        %2080 = vmatprep.subr.mxu0 0.0
        %2081 = vmatpush1.xpose.msra.mxu0 %v2064
        %2082 = vmatprep.subr.mxu0 0.0
        %2083 = vmatpush1.xpose.msra.mxu0 %v2066
        %2084 = vmatprep.subr.mxu0 0.0
        %2085 = vmatpush1.xpose.msra.mxu0 %v2068
        %2086 = vmatprep.subr.mxu0 0.0
        %2087 = vmatpush1.xpose.msra.mxu0 %v2070
        %2088 = vmatprep.subr.mxu0 0.0
        %2089 = vmatpush1.xpose.msra.mxu0 0.0
        %2090 = vmatprep.subr.mxu0 0.0
        %2091 = vmatpush1.xpose.msra.mxu0 0.0
        %2092 = vmatprep.subr.mxu0 0.0
        %2093 = vmatpush1.xpose.msra.mxu0 0.0
        %2094 = vmatprep.subr.mxu0 0.0
        %2095 = vmatpush1.xpose.msra.mxu0 0.0
        %2096 = vmatprep.subr.mxu0 0.0
        %2097 = vmatpush1.xpose.msra.mxu0 0.0
        %2098 = vmatprep.subr.mxu0 0.0
        %2099 = vmatpush1.xpose.msra.mxu0 0.0
        %2100 = vmatprep.subr.mxu0 0.0
        %2101 = vmatpush1.xpose.msra.mxu0 0.0
        %2102 = vmatprep.subr.mxu0 0.0
        %2103 = vmatpush1.xpose.msra.mxu0 0.0
        %2104 = vmatprep.subr.mxu0 0.0
        %2105 = vmatpush1.xpose.msra.mxu0 0.0
        %2106 = vmatprep.subr.mxu0 0.0
        %2107 = vmatpush1.xpose.msra.mxu0 0.0
        %2108 = vmatprep.subr.mxu0 0.0
        %2109 = vmatpush1.xpose.msra.mxu0 0.0
        %2110 = vmatprep.subr.mxu0 0.0
        %2111 = vmatpush1.xpose.msra.mxu0 0.0
        %2112 = vmatprep.subr.mxu0 0.0
        %2113 = vmatpush1.xpose.msra.mxu0 0.0
        %2114 = vmatprep.subr.mxu0 0.0
        %2115 = vmatpush1.xpose.msra.mxu0 0.0
        %2116 = vmatprep.subr.mxu0 0.0
        %2117 = vmatpush1.xpose.msra.mxu0 0.0
        %2118 = vmatprep.subr.mxu0 0.0
        %2119 = vmatpush1.xpose.msra.mxu0 0.0
        %2120 = vmatprep.subr.mxu0 0.0
        %2121 = vmatpush1.xpose.msra.mxu0 0.0
        %2122 = vmatprep.subr.mxu0 0.0
        %2123 = vmatpush1.xpose.msra.mxu0 0.0
        %2124 = vmatprep.subr.mxu0 0.0
        %2125 = vmatpush1.xpose.msra.mxu0 0.0
        %2126 = vmatprep.subr.mxu0 0.0
        %2127 = vmatpush1.xpose.msra.mxu0 0.0
        %2128 = vmatprep.subr.mxu0 0.0
        %2129 = vmatpush1.xpose.msra.mxu0 0.0
        %2130 = vmatprep.subr.mxu0 0.0
        %2131 = vmatpush1.xpose.msra.mxu0 0.0
        %2132 = vmatprep.subr.mxu0 0.0
        %2133 = vmatpush1.xpose.msra.mxu0 0.0
        %2134 = vmatprep.subr.mxu0 0.0
        %2135 = vmatpush1.xpose.msra.mxu0 0.0
        %2136 = vmatprep.mubr.f32.mxu0 0.0
        %2137 = vmatmul.mubr.f32.gmra.mrb[0].mxu0 %v2040
        %v2138 = vpop.f32.mrb[0].mxu0
        %v2139 = vadd.f32 0.0, %v2138
        %v2140 = vpop.f32.mrb[0].mxu0
        %2141 = vmatprep.mubr.f32.mxu0 0.0
        %2142 = vmatmul.mubr.f32.gmra.mrb[0].mxu0 %v2042
        %v2143 = vpop.f32.mrb[0].mxu0
        %v2144 = vadd.f32 0.0, %v2143
        %v2145 = vpop.f32.mrb[0].mxu0
        %2146 = vmatprep.mubr.f32.mxu0 0.0
        %2147 = vmatmul.mubr.f32.gmra.mrb[0].mxu0 %v2044
        %v2148 = vpop.f32.mrb[0].mxu0
        %v2149 = vadd.f32 0.0, %v2148
        %v2150 = vpop.f32.mrb[0].mxu0
        %2151 = vmatprep.mubr.f32.mxu0 0.0
        %2152 = vmatmul.mubr.f32.gmra.mrb[0].mxu0 %v2046
        %v2153 = vpop.f32.mrb[0].mxu0
        %v2154 = vadd.f32 0.0, %v2153
        %v2155 = vpop.f32.mrb[0].mxu0
        %2156 = vmatprep.mubr.f32.mxu0 0.0
        %2157 = vmatmul.mubr.f32.gmra.mrb[0].mxu0 %v2048
        %v2158 = vpop.f32.mrb[0].mxu0
        %v2159 = vadd.f32 0.0, %v2158
        %v2160 = vpop.f32.mrb[0].mxu0
        %2161 = vmatprep.mubr.f32.mxu0 0.0
        %2162 = vmatmul.mubr.f32.gmra.mrb[0].mxu0 %v2050
        %v2163 = vpop.f32.mrb[0].mxu0
        %v2164 = vadd.f32 0.0, %v2163
        %v2165 = vpop.f32.mrb[0].mxu0
        %2166 = vmatprep.mubr.f32.mxu0 0.0
        %2167 = vmatmul.mubr.f32.gmra.mrb[0].mxu0 %v2052
        %v2168 = vpop.f32.mrb[0].mxu0
        %v2169 = vadd.f32 0.0, %v2168
        %v2170 = vpop.f32.mrb[0].mxu0
        %2171 = vmatprep.mubr.f32.mxu0 0.0
        %2172 = vmatmul.mubr.f32.gmra.mrb[0].mxu0 %v2054
        %v2173 = vpop.f32.mrb[0].mxu0
        %v2174 = vadd.f32 0.0, %v2173
        %v2175 = vpop.f32.mrb[0].mxu0
        %2176 = vdwg.mxu0
        %2177 = vrot.lane.b32.xlu0 %v1148, 120
        %v2178 = vpop.permute.xlu0 %2177
        %2179 = vrot.lane.b32.xlu0 %v1153, 120
        %v2180 = vpop.permute.xlu0 %2179
        %2181 = vrot.lane.b32.xlu0 %v1158, 120
        %v2182 = vpop.permute.xlu0 %2181
        %2183 = vrot.lane.b32.xlu0 %v1163, 120
        %v2184 = vpop.permute.xlu0 %2183
        %2185 = vrot.lane.b32.xlu0 %v1168, 120
        %v2186 = vpop.permute.xlu0 %2185
        %2187 = vrot.lane.b32.xlu0 %v1173, 120
        %v2188 = vpop.permute.xlu0 %2187
        %2189 = vrot.lane.b32.xlu0 %v1178, 120
        %v2190 = vpop.permute.xlu0 %2189
        %2191 = vrot.lane.b32.xlu0 %v1183, 120
        %v2192 = vpop.permute.xlu0 %2191
        %2193 = vrot.lane.b32.xlu0 %v1148, 88
        %v2194 = vpop.permute.xlu0 %2193
        %2195 = vrot.lane.b32.xlu0 %v1153, 88
        %v2196 = vpop.permute.xlu0 %2195
        %2197 = vrot.lane.b32.xlu0 %v1158, 88
        %v2198 = vpop.permute.xlu0 %2197
        %2199 = vrot.lane.b32.xlu0 %v1163, 88
        %v2200 = vpop.permute.xlu0 %2199
        %2201 = vrot.lane.b32.xlu0 %v1168, 88
        %v2202 = vpop.permute.xlu0 %2201
        %2203 = vrot.lane.b32.xlu0 %v1173, 88
        %v2204 = vpop.permute.xlu0 %2203
        %2205 = vrot.lane.b32.xlu0 %v1178, 88
        %v2206 = vpop.permute.xlu0 %2205
        %2207 = vrot.lane.b32.xlu0 %v1183, 88
        %v2208 = vpop.permute.xlu0 %2207
        %v2209 = vsel %vm1210, %v2178, 0
        %v2211 = vsel %vm1210, %v2180, 0
        %v2213 = vsel %vm1210, %v2182, 0
        %v2215 = vsel %vm1210, %v2184, 0
        %v2217 = vsel %vm1210, %v2186, 0
        %v2219 = vsel %vm1210, %v2188, 0
        %v2221 = vsel %vm1210, %v2190, 0
        %v2223 = vsel %vm1210, %v2192, 0
        %v2225 = vsel %vm1210, %v2194, 0
        %v2227 = vsel %vm1210, %v2196, 0
        %v2229 = vsel %vm1210, %v2198, 0
        %v2231 = vsel %vm1210, %v2200, 0
        %v2233 = vsel %vm1210, %v2202, 0
        %v2235 = vsel %vm1210, %v2204, 0
        %v2237 = vsel %vm1210, %v2206, 0
        %v2239 = vsel %vm1210, %v2208, 0
        %2241 = vmatprep.subr.mxu0 0.0
        %2242 = vmatpush1.xpose.msra.mxu0 %v2225
        %2243 = vmatprep.subr.mxu0 0.0
        %2244 = vmatpush1.xpose.msra.mxu0 %v2227
        %2245 = vmatprep.subr.mxu0 0.0
        %2246 = vmatpush1.xpose.msra.mxu0 %v2229
        %2247 = vmatprep.subr.mxu0 0.0
        %2248 = vmatpush1.xpose.msra.mxu0 %v2231
        %2249 = vmatprep.subr.mxu0 0.0
        %2250 = vmatpush1.xpose.msra.mxu0 %v2233
        %2251 = vmatprep.subr.mxu0 0.0
        %2252 = vmatpush1.xpose.msra.mxu0 %v2235
        %2253 = vmatprep.subr.mxu0 0.0
        %2254 = vmatpush1.xpose.msra.mxu0 %v2237
        %2255 = vmatprep.subr.mxu0 0.0
        %2256 = vmatpush1.xpose.msra.mxu0 %v2239
        %2257 = vmatprep.subr.mxu0 0.0
        %2258 = vmatpush1.xpose.msra.mxu0 0.0
        %2259 = vmatprep.subr.mxu0 0.0
        %2260 = vmatpush1.xpose.msra.mxu0 0.0
        %2261 = vmatprep.subr.mxu0 0.0
        %2262 = vmatpush1.xpose.msra.mxu0 0.0
        %2263 = vmatprep.subr.mxu0 0.0
        %2264 = vmatpush1.xpose.msra.mxu0 0.0
        %2265 = vmatprep.subr.mxu0 0.0
        %2266 = vmatpush1.xpose.msra.mxu0 0.0
        %2267 = vmatprep.subr.mxu0 0.0
        %2268 = vmatpush1.xpose.msra.mxu0 0.0
        %2269 = vmatprep.subr.mxu0 0.0
        %2270 = vmatpush1.xpose.msra.mxu0 0.0
        %2271 = vmatprep.subr.mxu0 0.0
        %2272 = vmatpush1.xpose.msra.mxu0 0.0
        %2273 = vmatprep.subr.mxu0 0.0
        %2274 = vmatpush1.xpose.msra.mxu0 0.0
        %2275 = vmatprep.subr.mxu0 0.0
        %2276 = vmatpush1.xpose.msra.mxu0 0.0
        %2277 = vmatprep.subr.mxu0 0.0
        %2278 = vmatpush1.xpose.msra.mxu0 0.0
        %2279 = vmatprep.subr.mxu0 0.0
        %2280 = vmatpush1.xpose.msra.mxu0 0.0
        %2281 = vmatprep.subr.mxu0 0.0
        %2282 = vmatpush1.xpose.msra.mxu0 0.0
        %2283 = vmatprep.subr.mxu0 0.0
        %2284 = vmatpush1.xpose.msra.mxu0 0.0
        %2285 = vmatprep.subr.mxu0 0.0
        %2286 = vmatpush1.xpose.msra.mxu0 0.0
        %2287 = vmatprep.subr.mxu0 0.0
        %2288 = vmatpush1.xpose.msra.mxu0 0.0
        %2289 = vmatprep.subr.mxu0 0.0
        %2290 = vmatpush1.xpose.msra.mxu0 0.0
        %2291 = vmatprep.subr.mxu0 0.0
        %2292 = vmatpush1.xpose.msra.mxu0 0.0
        %2293 = vmatprep.subr.mxu0 0.0
        %2294 = vmatpush1.xpose.msra.mxu0 0.0
        %2295 = vmatprep.subr.mxu0 0.0
        %2296 = vmatpush1.xpose.msra.mxu0 0.0
        %2297 = vmatprep.subr.mxu0 0.0
        %2298 = vmatpush1.xpose.msra.mxu0 0.0
        %2299 = vmatprep.subr.mxu0 0.0
        %2300 = vmatpush1.xpose.msra.mxu0 0.0
        %2301 = vmatprep.subr.mxu0 0.0
        %2302 = vmatpush1.xpose.msra.mxu0 0.0
        %2303 = vmatprep.subr.mxu0 0.0
        %2304 = vmatpush1.xpose.msra.mxu0 0.0
        %2305 = vmatprep.mubr.f32.mxu0 0.0
        %2306 = vmatmul.mubr.f32.gmra.mrb[0].mxu0 %v2209
        %v2307 = vpop.f32.mrb[0].mxu0
        %v2308 = vadd.f32 0.0, %v2307
        %v2309 = vpop.f32.mrb[0].mxu0
        %2310 = vmatprep.mubr.f32.mxu0 0.0
        %2311 = vmatmul.mubr.f32.gmra.mrb[0].mxu0 %v2211
        %v2312 = vpop.f32.mrb[0].mxu0
        %v2313 = vadd.f32 0.0, %v2312
        %v2314 = vpop.f32.mrb[0].mxu0
        %2315 = vmatprep.mubr.f32.mxu0 0.0
        %2316 = vmatmul.mubr.f32.gmra.mrb[0].mxu0 %v2213
        %v2317 = vpop.f32.mrb[0].mxu0
        %v2318 = vadd.f32 0.0, %v2317
        %v2319 = vpop.f32.mrb[0].mxu0
        %2320 = vmatprep.mubr.f32.mxu0 0.0
        %2321 = vmatmul.mubr.f32.gmra.mrb[0].mxu0 %v2215
        %v2322 = vpop.f32.mrb[0].mxu0
        %v2323 = vadd.f32 0.0, %v2322
        %v2324 = vpop.f32.mrb[0].mxu0
        %2325 = vmatprep.mubr.f32.mxu0 0.0
        %2326 = vmatmul.mubr.f32.gmra.mrb[0].mxu0 %v2217
        %v2327 = vpop.f32.mrb[0].mxu0
        %v2328 = vadd.f32 0.0, %v2327
        %v2329 = vpop.f32.mrb[0].mxu0
        %2330 = vmatprep.mubr.f32.mxu0 0.0
        %2331 = vmatmul.mubr.f32.gmra.mrb[0].mxu0 %v2219
        %v2332 = vpop.f32.mrb[0].mxu0
        %v2333 = vadd.f32 0.0, %v2332
        %v2334 = vpop.f32.mrb[0].mxu0
        %2335 = vmatprep.mubr.f32.mxu0 0.0
        %2336 = vmatmul.mubr.f32.gmra.mrb[0].mxu0 %v2221
        %v2337 = vpop.f32.mrb[0].mxu0
        %v2338 = vadd.f32 0.0, %v2337
        %v2339 = vpop.f32.mrb[0].mxu0
        %2340 = vmatprep.mubr.f32.mxu0 0.0
        %2341 = vmatmul.mubr.f32.gmra.mrb[0].mxu0 %v2223
        %v2342 = vpop.f32.mrb[0].mxu0
        %v2343 = vadd.f32 0.0, %v2342
        %v2344 = vpop.f32.mrb[0].mxu0
        %2345 = vdwg.mxu0
        %v2346 = vsel %vm1509, %v2139, -inf
        %2347 = vmax.xlane.f32.xlu0 %v2346
        %v2348 = vpop.xlane.xlu0 %2347
        %v2349 = vsel %vm1509, %v2144, -inf
        %2350 = vmax.xlane.f32.xlu0 %v2349
        %v2351 = vpop.xlane.xlu0 %2350
        %v2352 = vsel %vm1509, %v2149, -inf
        %2353 = vmax.xlane.f32.xlu0 %v2352
        %v2354 = vpop.xlane.xlu0 %2353
        %v2355 = vsel %vm1509, %v2154, -inf
        %2356 = vmax.xlane.f32.xlu0 %v2355
        %v2357 = vpop.xlane.xlu0 %2356
        %v2358 = vsel %vm1509, %v2159, -inf
        %2359 = vmax.xlane.f32.xlu0 %v2358
        %v2360 = vpop.xlane.xlu0 %2359
        %v2361 = vsel %vm1509, %v2164, -inf
        %2362 = vmax.xlane.f32.xlu0 %v2361
        %v2363 = vpop.xlane.xlu0 %2362
        %v2364 = vsel %vm1509, %v2169, -inf
        %2365 = vmax.xlane.f32.xlu0 %v2364
        %v2366 = vpop.xlane.xlu0 %2365
        %v2367 = vsel %vm1509, %v2174, -inf
        %2368 = vmax.xlane.f32.xlu0 %v2367
        %v2369 = vpop.xlane.xlu0 %2368
        %v2370 = vsel %vm1509, %v2308, -inf
        %2371 = vmax.xlane.f32.xlu0 %v2370
        %v2372 = vpop.xlane.xlu0 %2371
        %v2373 = vsel %vm1509, %v2313, -inf
        %2374 = vmax.xlane.f32.xlu0 %v2373
        %v2375 = vpop.xlane.xlu0 %2374
        %v2376 = vsel %vm1509, %v2318, -inf
        %2377 = vmax.xlane.f32.xlu0 %v2376
        %v2378 = vpop.xlane.xlu0 %2377
        %v2379 = vsel %vm1509, %v2323, -inf
        %2380 = vmax.xlane.f32.xlu0 %v2379
        %v2381 = vpop.xlane.xlu0 %2380
        %v2382 = vsel %vm1509, %v2328, -inf
        %2383 = vmax.xlane.f32.xlu0 %v2382
        %v2384 = vpop.xlane.xlu0 %2383
        %v2385 = vsel %vm1509, %v2333, -inf
        %2386 = vmax.xlane.f32.xlu0 %v2385
        %v2387 = vpop.xlane.xlu0 %2386
        %v2388 = vsel %vm1509, %v2338, -inf
        %2389 = vmax.xlane.f32.xlu0 %v2388
        %v2390 = vpop.xlane.xlu0 %2389
        %v2391 = vsel %vm1509, %v2343, -inf
        %2392 = vmax.xlane.f32.xlu0 %v2391
        %v2393 = vpop.xlane.xlu0 %2392
        %v2394 = vsub.f32 %v2139, %v2348
        %v2395 = vsub.f32 %v2144, %v2351
        %v2396 = vsub.f32 %v2149, %v2354
        %v2397 = vsub.f32 %v2154, %v2357
        %v2398 = vsub.f32 %v2159, %v2360
        %v2399 = vsub.f32 %v2164, %v2363
        %v2400 = vsub.f32 %v2169, %v2366
        %v2401 = vsub.f32 %v2174, %v2369
        %v2402 = vsub.f32 %v2308, %v2372
        %v2403 = vsub.f32 %v2313, %v2375
        %v2404 = vsub.f32 %v2318, %v2378
        %v2405 = vsub.f32 %v2323, %v2381
        %v2406 = vsub.f32 %v2328, %v2384
        %v2407 = vsub.f32 %v2333, %v2387
        %v2408 = vsub.f32 %v2338, %v2390
        %v2409 = vsub.f32 %v2343, %v2393
        %v2410 = vmul.f32 %v2394, 1.442695
        %v2411 = vpow.pop %v2410
        %v2412 = vmul.f32 %v2395, 1.442695
        %v2413 = vpow.pop %v2412
        %v2414 = vmul.f32 %v2396, 1.442695
        %v2415 = vpow.pop %v2414
        %v2416 = vmul.f32 %v2397, 1.442695
        %v2417 = vpow.pop %v2416
        %v2418 = vmul.f32 %v2398, 1.442695
        %v2419 = vpow.pop %v2418
        %v2420 = vmul.f32 %v2399, 1.442695
        %v2421 = vpow.pop %v2420
        %v2422 = vmul.f32 %v2400, 1.442695
        %v2423 = vpow.pop %v2422
        %v2424 = vmul.f32 %v2401, 1.442695
        %v2425 = vpow.pop %v2424
        %v2426 = vmul.f32 %v2402, 1.442695
        %v2427 = vpow.pop %v2426
        %v2428 = vmul.f32 %v2403, 1.442695
        %v2429 = vpow.pop %v2428
        %v2430 = vmul.f32 %v2404, 1.442695
        %v2431 = vpow.pop %v2430
        %v2432 = vmul.f32 %v2405, 1.442695
        %v2433 = vpow.pop %v2432
        %v2434 = vmul.f32 %v2406, 1.442695
        %v2435 = vpow.pop %v2434
        %v2436 = vmul.f32 %v2407, 1.442695
        %v2437 = vpow.pop %v2436
        %v2438 = vmul.f32 %v2408, 1.442695
        %v2439 = vpow.pop %v2438
        %v2440 = vmul.f32 %v2409, 1.442695
        %v2441 = vpow.pop %v2440
        %v2442 = vsel %vm1509, %v2411, 0.0
        %2443 = vadd.xlane.f32.xlu0 %v2442
        %v2444 = vpop.xlane.xlu0 %2443
        %v2445 = vsel %vm1509, %v2413, 0.0
        %2446 = vadd.xlane.f32.xlu0 %v2445
        %v2447 = vpop.xlane.xlu0 %2446
        %v2448 = vsel %vm1509, %v2415, 0.0
        %2449 = vadd.xlane.f32.xlu0 %v2448
        %v2450 = vpop.xlane.xlu0 %2449
        %v2451 = vsel %vm1509, %v2417, 0.0
        %2452 = vadd.xlane.f32.xlu0 %v2451
        %v2453 = vpop.xlane.xlu0 %2452
        %v2454 = vsel %vm1509, %v2419, 0.0
        %2455 = vadd.xlane.f32.xlu0 %v2454
        %v2456 = vpop.xlane.xlu0 %2455
        %v2457 = vsel %vm1509, %v2421, 0.0
        %2458 = vadd.xlane.f32.xlu0 %v2457
        %v2459 = vpop.xlane.xlu0 %2458
        %v2460 = vsel %vm1509, %v2423, 0.0
        %2461 = vadd.xlane.f32.xlu0 %v2460
        %v2462 = vpop.xlane.xlu0 %2461
        %v2463 = vsel %vm1509, %v2425, 0.0
        %2464 = vadd.xlane.f32.xlu0 %v2463
        %v2465 = vpop.xlane.xlu0 %2464
        %v2466 = vsel %vm1509, %v2427, 0.0
        %2467 = vadd.xlane.f32.xlu0 %v2466
        %v2468 = vpop.xlane.xlu0 %2467
        %v2469 = vsel %vm1509, %v2429, 0.0
        %2470 = vadd.xlane.f32.xlu0 %v2469
        %v2471 = vpop.xlane.xlu0 %2470
        %v2472 = vsel %vm1509, %v2431, 0.0
        %2473 = vadd.xlane.f32.xlu0 %v2472
        %v2474 = vpop.xlane.xlu0 %2473
        %v2475 = vsel %vm1509, %v2433, 0.0
        %2476 = vadd.xlane.f32.xlu0 %v2475
        %v2477 = vpop.xlane.xlu0 %2476
        %v2478 = vsel %vm1509, %v2435, 0.0
        %2479 = vadd.xlane.f32.xlu0 %v2478
        %v2480 = vpop.xlane.xlu0 %2479
        %v2481 = vsel %vm1509, %v2437, 0.0
        %2482 = vadd.xlane.f32.xlu0 %v2481
        %v2483 = vpop.xlane.xlu0 %2482
        %v2484 = vsel %vm1509, %v2439, 0.0
        %2485 = vadd.xlane.f32.xlu0 %v2484
        %v2486 = vpop.xlane.xlu0 %2485
        %v2487 = vsel %vm1509, %v2441, 0.0
        %2488 = vadd.xlane.f32.xlu0 %v2487
        %v2489 = vpop.xlane.xlu0 %2488
        %v2490 = vrcp.pop %v2444
        %v2491 = vrcp.pop %v2447
        %v2492 = vrcp.pop %v2450
        %v2493 = vrcp.pop %v2453
        %v2494 = vrcp.pop %v2456
        %v2495 = vrcp.pop %v2459
        %v2496 = vrcp.pop %v2462
        %v2497 = vrcp.pop %v2465
        %v2498 = vrcp.pop %v2468
        %v2499 = vrcp.pop %v2471
        %v2500 = vrcp.pop %v2474
        %v2501 = vrcp.pop %v2477
        %v2502 = vrcp.pop %v2480
        %v2503 = vrcp.pop %v2483
        %v2504 = vrcp.pop %v2486
        %v2505 = vrcp.pop %v2489
        %v2506 = vmul.f32 %v2411, %v2490
        %v2507 = vmul.f32 %v2413, %v2491
        %v2508 = vmul.f32 %v2415, %v2492
        %v2509 = vmul.f32 %v2417, %v2493
        %v2510 = vmul.f32 %v2419, %v2494
        %v2511 = vmul.f32 %v2421, %v2495
        %v2512 = vmul.f32 %v2423, %v2496
        %v2513 = vmul.f32 %v2425, %v2497
        %v2514 = vmul.f32 %v2427, %v2498
        %v2515 = vmul.f32 %v2429, %v2499
        %v2516 = vmul.f32 %v2431, %v2500
        %v2517 = vmul.f32 %v2433, %v2501
        %v2518 = vmul.f32 %v2435, %v2502
        %v2519 = vmul.f32 %v2437, %v2503
        %v2520 = vmul.f32 %v2439, %v2504
        %v2521 = vmul.f32 %v2441, %v2505
        %2522 = vrot.lane.b32.xlu0 %v1108, 56
        %v2523 = vpop.permute.xlu0 %2522
        %2524 = vrot.lane.b32.xlu0 %v1113, 56
        %v2525 = vpop.permute.xlu0 %2524
        %2526 = vrot.lane.b32.xlu0 %v1118, 56
        %v2527 = vpop.permute.xlu0 %2526
        %2528 = vrot.lane.b32.xlu0 %v1123, 56
        %v2529 = vpop.permute.xlu0 %2528
        %2530 = vrot.lane.b32.xlu0 %v1128, 56
        %v2531 = vpop.permute.xlu0 %2530
        %2532 = vrot.lane.b32.xlu0 %v1133, 56
        %v2533 = vpop.permute.xlu0 %2532
        %2534 = vrot.lane.b32.xlu0 %v1138, 56
        %v2535 = vpop.permute.xlu0 %2534
        %2536 = vrot.lane.b32.xlu0 %v1143, 56
        %v2537 = vpop.permute.xlu0 %2536
        %v2547 = vsel %vm1509, %v2506, 0
        %v2550 = vsel %vm1509, %v2507, 0
        %v2553 = vsel %vm1509, %v2508, 0
        %v2556 = vsel %vm1509, %v2509, 0
        %v2559 = vsel %vm1509, %v2510, 0
        %v2562 = vsel %vm1509, %v2511, 0
        %v2565 = vsel %vm1509, %v2512, 0
        %v2568 = vsel %vm1509, %v2513, 0
        %2570 = vmatprep.subr.mxu0 0.0
        %2571 = vmatpush1.msra.mxu0 %v2523
        %2572 = vmatprep.subr.mxu0 0.0
        %2573 = vmatpush1.msra.mxu0 %v2525
        %2574 = vmatprep.subr.mxu0 0.0
        %2575 = vmatpush1.msra.mxu0 %v2527
        %2576 = vmatprep.subr.mxu0 0.0
        %2577 = vmatpush1.msra.mxu0 %v2529
        %2578 = vmatprep.subr.mxu0 0.0
        %2579 = vmatpush1.msra.mxu0 %v2531
        %2580 = vmatprep.subr.mxu0 0.0
        %2581 = vmatpush1.msra.mxu0 %v2533
        %2582 = vmatprep.subr.mxu0 0.0
        %2583 = vmatpush1.msra.mxu0 %v2535
        %2584 = vmatprep.subr.mxu0 0.0
        %2585 = vmatpush1.msra.mxu0 %v2537
        %2586 = vmatprep.subr.mxu0 0.0
        %2587 = vmatpush1.msra.mxu0 0.0
        %2588 = vmatprep.subr.mxu0 0.0
        %2589 = vmatpush1.msra.mxu0 0.0
        %2590 = vmatprep.subr.mxu0 0.0
        %2591 = vmatpush1.msra.mxu0 0.0
        %2592 = vmatprep.subr.mxu0 0.0
        %2593 = vmatpush1.msra.mxu0 0.0
        %2594 = vmatprep.subr.mxu0 0.0
        %2595 = vmatpush1.msra.mxu0 0.0
        %2596 = vmatprep.subr.mxu0 0.0
        %2597 = vmatpush1.msra.mxu0 0.0
        %2598 = vmatprep.subr.mxu0 0.0
        %2599 = vmatpush1.msra.mxu0 0.0
        %2600 = vmatprep.subr.mxu0 0.0
        %2601 = vmatpush1.msra.mxu0 0.0
        %2602 = vmatprep.subr.mxu0 0.0
        %2603 = vmatpush1.msra.mxu0 0.0
        %2604 = vmatprep.subr.mxu0 0.0
        %2605 = vmatpush1.msra.mxu0 0.0
        %2606 = vmatprep.subr.mxu0 0.0
        %2607 = vmatpush1.msra.mxu0 0.0
        %2608 = vmatprep.subr.mxu0 0.0
        %2609 = vmatpush1.msra.mxu0 0.0
        %2610 = vmatprep.subr.mxu0 0.0
        %2611 = vmatpush1.msra.mxu0 0.0
        %2612 = vmatprep.subr.mxu0 0.0
        %2613 = vmatpush1.msra.mxu0 0.0
        %2614 = vmatprep.subr.mxu0 0.0
        %2615 = vmatpush1.msra.mxu0 0.0
        %2616 = vmatprep.subr.mxu0 0.0
        %2617 = vmatpush1.msra.mxu0 0.0
        %2618 = vmatprep.subr.mxu0 0.0
        %2619 = vmatpush1.msra.mxu0 0.0
        %2620 = vmatprep.subr.mxu0 0.0
        %2621 = vmatpush1.msra.mxu0 0.0
        %2622 = vmatprep.subr.mxu0 0.0
        %2623 = vmatpush1.msra.mxu0 0.0
        %2624 = vmatprep.subr.mxu0 0.0
        %2625 = vmatpush1.msra.mxu0 0.0
        %2626 = vmatprep.subr.mxu0 0.0
        %2627 = vmatpush1.msra.mxu0 0.0
        %2628 = vmatprep.subr.mxu0 0.0
        %2629 = vmatpush1.msra.mxu0 0.0
        %2630 = vmatprep.subr.mxu0 0.0
        %2631 = vmatpush1.msra.mxu0 0.0
        %2632 = vmatprep.subr.mxu0 0.0
        %2633 = vmatpush1.msra.mxu0 0.0
        %2634 = vmatprep.mubr.f32.mxu0 0.0
        %2635 = vmatmul.mubr.f32.gmra.mrb[0].mxu0 %v2547
        %v2636 = vpop.f32.mrb[0].mxu0
        %v2637 = vadd.f32 0.0, %v2636
        %v2638 = vpop.f32.mrb[0].mxu0
        %2639 = vmatprep.mubr.f32.mxu0 0.0
        %2640 = vmatmul.mubr.f32.gmra.mrb[0].mxu0 %v2550
        %v2641 = vpop.f32.mrb[0].mxu0
        %v2642 = vadd.f32 0.0, %v2641
        %v2643 = vpop.f32.mrb[0].mxu0
        %2644 = vmatprep.mubr.f32.mxu0 0.0
        %2645 = vmatmul.mubr.f32.gmra.mrb[0].mxu0 %v2553
        %v2646 = vpop.f32.mrb[0].mxu0
        %v2647 = vadd.f32 0.0, %v2646
        %v2648 = vpop.f32.mrb[0].mxu0
        %2649 = vmatprep.mubr.f32.mxu0 0.0
        %2650 = vmatmul.mubr.f32.gmra.mrb[0].mxu0 %v2556
        %v2651 = vpop.f32.mrb[0].mxu0
        %v2652 = vadd.f32 0.0, %v2651
        %v2653 = vpop.f32.mrb[0].mxu0
        %2654 = vmatprep.mubr.f32.mxu0 0.0
        %2655 = vmatmul.mubr.f32.gmra.mrb[0].mxu0 %v2559
        %v2656 = vpop.f32.mrb[0].mxu0
        %v2657 = vadd.f32 0.0, %v2656
        %v2658 = vpop.f32.mrb[0].mxu0
        %2659 = vmatprep.mubr.f32.mxu0 0.0
        %2660 = vmatmul.mubr.f32.gmra.mrb[0].mxu0 %v2562
        %v2661 = vpop.f32.mrb[0].mxu0
        %v2662 = vadd.f32 0.0, %v2661
        %v2663 = vpop.f32.mrb[0].mxu0
        %2664 = vmatprep.mubr.f32.mxu0 0.0
        %2665 = vmatmul.mubr.f32.gmra.mrb[0].mxu0 %v2565
        %v2666 = vpop.f32.mrb[0].mxu0
        %v2667 = vadd.f32 0.0, %v2666
        %v2668 = vpop.f32.mrb[0].mxu0
        %2669 = vmatprep.mubr.f32.mxu0 0.0
        %2670 = vmatmul.mubr.f32.gmra.mrb[0].mxu0 %v2568
        %v2671 = vpop.f32.mrb[0].mxu0
        %v2672 = vadd.f32 0.0, %v2671
        %v2673 = vpop.f32.mrb[0].mxu0
        %2674 = vdwg.mxu0
        %2675 = vrot.lane.b32.xlu0 %v1148, 56
        %v2676 = vpop.permute.xlu0 %2675
        %2677 = vrot.lane.b32.xlu0 %v1153, 56
        %v2678 = vpop.permute.xlu0 %2677
        %2679 = vrot.lane.b32.xlu0 %v1158, 56
        %v2680 = vpop.permute.xlu0 %2679
        %2681 = vrot.lane.b32.xlu0 %v1163, 56
        %v2682 = vpop.permute.xlu0 %2681
        %2683 = vrot.lane.b32.xlu0 %v1168, 56
        %v2684 = vpop.permute.xlu0 %2683
        %2685 = vrot.lane.b32.xlu0 %v1173, 56
        %v2686 = vpop.permute.xlu0 %2685
        %2687 = vrot.lane.b32.xlu0 %v1178, 56
        %v2688 = vpop.permute.xlu0 %2687
        %2689 = vrot.lane.b32.xlu0 %v1183, 56
        %v2690 = vpop.permute.xlu0 %2689
        %v2700 = vsel %vm1509, %v2514, 0
        %v2703 = vsel %vm1509, %v2515, 0
        %v2706 = vsel %vm1509, %v2516, 0
        %v2709 = vsel %vm1509, %v2517, 0
        %v2712 = vsel %vm1509, %v2518, 0
        %v2715 = vsel %vm1509, %v2519, 0
        %v2718 = vsel %vm1509, %v2520, 0
        %v2721 = vsel %vm1509, %v2521, 0
        %2723 = vmatprep.subr.mxu0 0.0
        %2724 = vmatpush1.msra.mxu0 %v2676
        %2725 = vmatprep.subr.mxu0 0.0
        %2726 = vmatpush1.msra.mxu0 %v2678
        %2727 = vmatprep.subr.mxu0 0.0
        %2728 = vmatpush1.msra.mxu0 %v2680
        %2729 = vmatprep.subr.mxu0 0.0
        %2730 = vmatpush1.msra.mxu0 %v2682
        %2731 = vmatprep.subr.mxu0 0.0
        %2732 = vmatpush1.msra.mxu0 %v2684
        %2733 = vmatprep.subr.mxu0 0.0
        %2734 = vmatpush1.msra.mxu0 %v2686
        %2735 = vmatprep.subr.mxu0 0.0
        %2736 = vmatpush1.msra.mxu0 %v2688
        %2737 = vmatprep.subr.mxu0 0.0
        %2738 = vmatpush1.msra.mxu0 %v2690
        %2739 = vmatprep.subr.mxu0 0.0
        %2740 = vmatpush1.msra.mxu0 0.0
        %2741 = vmatprep.subr.mxu0 0.0
        %2742 = vmatpush1.msra.mxu0 0.0
        %2743 = vmatprep.subr.mxu0 0.0
        %2744 = vmatpush1.msra.mxu0 0.0
        %2745 = vmatprep.subr.mxu0 0.0
        %2746 = vmatpush1.msra.mxu0 0.0
        %2747 = vmatprep.subr.mxu0 0.0
        %2748 = vmatpush1.msra.mxu0 0.0
        %2749 = vmatprep.subr.mxu0 0.0
        %2750 = vmatpush1.msra.mxu0 0.0
        %2751 = vmatprep.subr.mxu0 0.0
        %2752 = vmatpush1.msra.mxu0 0.0
        %2753 = vmatprep.subr.mxu0 0.0
        %2754 = vmatpush1.msra.mxu0 0.0
        %2755 = vmatprep.subr.mxu0 0.0
        %2756 = vmatpush1.msra.mxu0 0.0
        %2757 = vmatprep.subr.mxu0 0.0
        %2758 = vmatpush1.msra.mxu0 0.0
        %2759 = vmatprep.subr.mxu0 0.0
        %2760 = vmatpush1.msra.mxu0 0.0
        %2761 = vmatprep.subr.mxu0 0.0
        %2762 = vmatpush1.msra.mxu0 0.0
        %2763 = vmatprep.subr.mxu0 0.0
        %2764 = vmatpush1.msra.mxu0 0.0
        %2765 = vmatprep.subr.mxu0 0.0
        %2766 = vmatpush1.msra.mxu0 0.0
        %2767 = vmatprep.subr.mxu0 0.0
        %2768 = vmatpush1.msra.mxu0 0.0
        %2769 = vmatprep.subr.mxu0 0.0
        %2770 = vmatpush1.msra.mxu0 0.0
        %2771 = vmatprep.subr.mxu0 0.0
        %2772 = vmatpush1.msra.mxu0 0.0
        %2773 = vmatprep.subr.mxu0 0.0
        %2774 = vmatpush1.msra.mxu0 0.0
        %2775 = vmatprep.subr.mxu0 0.0
        %2776 = vmatpush1.msra.mxu0 0.0
        %2777 = vmatprep.subr.mxu0 0.0
        %2778 = vmatpush1.msra.mxu0 0.0
        %2779 = vmatprep.subr.mxu0 0.0
        %2780 = vmatpush1.msra.mxu0 0.0
        %2781 = vmatprep.subr.mxu0 0.0
        %2782 = vmatpush1.msra.mxu0 0.0
        %2783 = vmatprep.subr.mxu0 0.0
        %2784 = vmatpush1.msra.mxu0 0.0
        %2785 = vmatprep.subr.mxu0 0.0
        %2786 = vmatpush1.msra.mxu0 0.0
        %2787 = vmatprep.mubr.f32.mxu0 0.0
        %2788 = vmatmul.mubr.f32.gmra.mrb[0].mxu0 %v2700
        %v2789 = vpop.f32.mrb[0].mxu0
        %v2790 = vadd.f32 0.0, %v2789
        %v2791 = vpop.f32.mrb[0].mxu0
        %2792 = vmatprep.mubr.f32.mxu0 0.0
        %2793 = vmatmul.mubr.f32.gmra.mrb[0].mxu0 %v2703
        %v2794 = vpop.f32.mrb[0].mxu0
        %v2795 = vadd.f32 0.0, %v2794
        %v2796 = vpop.f32.mrb[0].mxu0
        %2797 = vmatprep.mubr.f32.mxu0 0.0
        %2798 = vmatmul.mubr.f32.gmra.mrb[0].mxu0 %v2706
        %v2799 = vpop.f32.mrb[0].mxu0
        %v2800 = vadd.f32 0.0, %v2799
        %v2801 = vpop.f32.mrb[0].mxu0
        %2802 = vmatprep.mubr.f32.mxu0 0.0
        %2803 = vmatmul.mubr.f32.gmra.mrb[0].mxu0 %v2709
        %v2804 = vpop.f32.mrb[0].mxu0
        %v2805 = vadd.f32 0.0, %v2804
        %v2806 = vpop.f32.mrb[0].mxu0
        %2807 = vmatprep.mubr.f32.mxu0 0.0
        %2808 = vmatmul.mubr.f32.gmra.mrb[0].mxu0 %v2712
        %v2809 = vpop.f32.mrb[0].mxu0
        %v2810 = vadd.f32 0.0, %v2809
        %v2811 = vpop.f32.mrb[0].mxu0
        %2812 = vmatprep.mubr.f32.mxu0 0.0
        %2813 = vmatmul.mubr.f32.gmra.mrb[0].mxu0 %v2715
        %v2814 = vpop.f32.mrb[0].mxu0
        %v2815 = vadd.f32 0.0, %v2814
        %v2816 = vpop.f32.mrb[0].mxu0
        %2817 = vmatprep.mubr.f32.mxu0 0.0
        %2818 = vmatmul.mubr.f32.gmra.mrb[0].mxu0 %v2718
        %v2819 = vpop.f32.mrb[0].mxu0
        %v2820 = vadd.f32 0.0, %v2819
        %v2821 = vpop.f32.mrb[0].mxu0
        %2822 = vmatprep.mubr.f32.mxu0 0.0
        %2823 = vmatmul.mubr.f32.gmra.mrb[0].mxu0 %v2721
        %v2824 = vpop.f32.mrb[0].mxu0
        %v2825 = vadd.f32 0.0, %v2824
        %v2826 = vpop.f32.mrb[0].mxu0
        %2827 = vdwg.mxu0
        %2844 = vrot.lane.b32.xlu0 %v2637, 8
        %v2845 = vpop.permute.xlu0 %2844
        %2846 = vrot.lane.b32.xlu0 %v2642, 8
        %v2847 = vpop.permute.xlu0 %2846
        %2848 = vrot.lane.b32.xlu0 %v2647, 8
        %v2849 = vpop.permute.xlu0 %2848
        %2850 = vrot.lane.b32.xlu0 %v2652, 8
        %v2851 = vpop.permute.xlu0 %2850
        %2852 = vrot.lane.b32.xlu0 %v2657, 8
        %v2853 = vpop.permute.xlu0 %2852
        %2854 = vrot.lane.b32.xlu0 %v2662, 8
        %v2855 = vpop.permute.xlu0 %2854
        %2856 = vrot.lane.b32.xlu0 %v2667, 8
        %v2857 = vpop.permute.xlu0 %2856
        %2858 = vrot.lane.b32.xlu0 %v2672, 8
        %v2859 = vpop.permute.xlu0 %2858
        %2860 = vrot.lane.b32.xlu0 %v2790, 8
        %v2861 = vpop.permute.xlu0 %2860
        %2862 = vrot.lane.b32.xlu0 %v2795, 8
        %v2863 = vpop.permute.xlu0 %2862
        %2864 = vrot.lane.b32.xlu0 %v2800, 8
        %v2865 = vpop.permute.xlu0 %2864
        %2866 = vrot.lane.b32.xlu0 %v2805, 8
        %v2867 = vpop.permute.xlu0 %2866
        %2868 = vrot.lane.b32.xlu0 %v2810, 8
        %v2869 = vpop.permute.xlu0 %2868
        %2870 = vrot.lane.b32.xlu0 %v2815, 8
        %v2871 = vpop.permute.xlu0 %2870
        %2872 = vrot.lane.b32.xlu0 %v2820, 8
        %v2873 = vpop.permute.xlu0 %2872
        %2874 = vrot.lane.b32.xlu0 %v2825, 8
        %v2875 = vpop.permute.xlu0 %2874
        %vm2892 = vcmask 130112
        %2893 = vst.msk [vmem:[#allocation2] sm:$0xff] %vm2892, %v2845
        %2894 = vst.msk [vmem:[#allocation2 + $0x8] sm:$0xff] %vm2892, %v2847
        %2895 = vst.msk [vmem:[#allocation2 + $0x10] sm:$0xff] %vm2892, %v2849
        %2896 = vst.msk [vmem:[#allocation2 + $0x18] sm:$0xff] %vm2892, %v2851
        %2897 = vst.msk [vmem:[#allocation2 + $0x20] sm:$0xff] %vm2892, %v2853
        %2898 = vst.msk [vmem:[#allocation2 + $0x28] sm:$0xff] %vm2892, %v2855
        %2899 = vst.msk [vmem:[#allocation2 + $0x30] sm:$0xff] %vm2892, %v2857
        %2900 = vst.msk [vmem:[#allocation2 + $0x38] sm:$0xff] %vm2892, %v2859
        %2901 = vst.msk [vmem:[#allocation2 + $0x40] sm:$0xff] %vm2892, %v2861
        %2902 = vst.msk [vmem:[#allocation2 + $0x48] sm:$0xff] %vm2892, %v2863
        %2903 = vst.msk [vmem:[#allocation2 + $0x50] sm:$0xff] %vm2892, %v2865
        %2904 = vst.msk [vmem:[#allocation2 + $0x58] sm:$0xff] %vm2892, %v2867
        %2905 = vst.msk [vmem:[#allocation2 + $0x60] sm:$0xff] %vm2892, %v2869
        %2906 = vst.msk [vmem:[#allocation2 + $0x68] sm:$0xff] %vm2892, %v2871
        %2907 = vst.msk [vmem:[#allocation2 + $0x70] sm:$0xff] %vm2892, %v2873
        %2908 = vst.msk [vmem:[#allocation2 + $0x78] sm:$0xff] %vm2892, %v2875
        %2909 = vrot.lane.b32.xlu0 %v1108, 112
        %v2910 = vpop.permute.xlu0 %2909
        %2911 = vrot.lane.b32.xlu0 %v1113, 112
        %v2912 = vpop.permute.xlu0 %2911
        %2913 = vrot.lane.b32.xlu0 %v1118, 112
        %v2914 = vpop.permute.xlu0 %2913
        %2915 = vrot.lane.b32.xlu0 %v1123, 112
        %v2916 = vpop.permute.xlu0 %2915
        %2917 = vrot.lane.b32.xlu0 %v1128, 112
        %v2918 = vpop.permute.xlu0 %2917
        %2919 = vrot.lane.b32.xlu0 %v1133, 112
        %v2920 = vpop.permute.xlu0 %2919
        %2921 = vrot.lane.b32.xlu0 %v1138, 112
        %v2922 = vpop.permute.xlu0 %2921
        %2923 = vrot.lane.b32.xlu0 %v1143, 112
        %v2924 = vpop.permute.xlu0 %2923
        %2925 = vrot.lane.b32.xlu0 %v1108, 80
        %v2926 = vpop.permute.xlu0 %2925
        %2927 = vrot.lane.b32.xlu0 %v1113, 80
        %v2928 = vpop.permute.xlu0 %2927
        %2929 = vrot.lane.b32.xlu0 %v1118, 80
        %v2930 = vpop.permute.xlu0 %2929
        %2931 = vrot.lane.b32.xlu0 %v1123, 80
        %v2932 = vpop.permute.xlu0 %2931
        %2933 = vrot.lane.b32.xlu0 %v1128, 80
        %v2934 = vpop.permute.xlu0 %2933
        %2935 = vrot.lane.b32.xlu0 %v1133, 80
        %v2936 = vpop.permute.xlu0 %2935
        %2937 = vrot.lane.b32.xlu0 %v1138, 80
        %v2938 = vpop.permute.xlu0 %2937
        %2939 = vrot.lane.b32.xlu0 %v1143, 80
        %v2940 = vpop.permute.xlu0 %2939
        %v2941 = vsel %vm1210, %v2910, 0
        %v2943 = vsel %vm1210, %v2912, 0
        %v2945 = vsel %vm1210, %v2914, 0
        %v2947 = vsel %vm1210, %v2916, 0
        %v2949 = vsel %vm1210, %v2918, 0
        %v2951 = vsel %vm1210, %v2920, 0
        %v2953 = vsel %vm1210, %v2922, 0
        %v2955 = vsel %vm1210, %v2924, 0
        %v2957 = vsel %vm1210, %v2926, 0
        %v2959 = vsel %vm1210, %v2928, 0
        %v2961 = vsel %vm1210, %v2930, 0
        %v2963 = vsel %vm1210, %v2932, 0
        %v2965 = vsel %vm1210, %v2934, 0
        %v2967 = vsel %vm1210, %v2936, 0
        %v2969 = vsel %vm1210, %v2938, 0
        %v2971 = vsel %vm1210, %v2940, 0
        %2973 = vmatprep.subr.mxu0 0.0
        %2974 = vmatpush1.xpose.msra.mxu0 %v2957
        %2975 = vmatprep.subr.mxu0 0.0
        %2976 = vmatpush1.xpose.msra.mxu0 %v2959
        %2977 = vmatprep.subr.mxu0 0.0
        %2978 = vmatpush1.xpose.msra.mxu0 %v2961
        %2979 = vmatprep.subr.mxu0 0.0
        %2980 = vmatpush1.xpose.msra.mxu0 %v2963
        %2981 = vmatprep.subr.mxu0 0.0
        %2982 = vmatpush1.xpose.msra.mxu0 %v2965
        %2983 = vmatprep.subr.mxu0 0.0
        %2984 = vmatpush1.xpose.msra.mxu0 %v2967
        %2985 = vmatprep.subr.mxu0 0.0
        %2986 = vmatpush1.xpose.msra.mxu0 %v2969
        %2987 = vmatprep.subr.mxu0 0.0
        %2988 = vmatpush1.xpose.msra.mxu0 %v2971
        %2989 = vmatprep.subr.mxu0 0.0
        %2990 = vmatpush1.xpose.msra.mxu0 0.0
        %2991 = vmatprep.subr.mxu0 0.0
        %2992 = vmatpush1.xpose.msra.mxu0 0.0
        %2993 = vmatprep.subr.mxu0 0.0
        %2994 = vmatpush1.xpose.msra.mxu0 0.0
        %2995 = vmatprep.subr.mxu0 0.0
        %2996 = vmatpush1.xpose.msra.mxu0 0.0
        %2997 = vmatprep.subr.mxu0 0.0
        %2998 = vmatpush1.xpose.msra.mxu0 0.0
        %2999 = vmatprep.subr.mxu0 0.0
        %3000 = vmatpush1.xpose.msra.mxu0 0.0
        %3001 = vmatprep.subr.mxu0 0.0
        %3002 = vmatpush1.xpose.msra.mxu0 0.0
        %3003 = vmatprep.subr.mxu0 0.0
        %3004 = vmatpush1.xpose.msra.mxu0 0.0
        %3005 = vmatprep.subr.mxu0 0.0
        %3006 = vmatpush1.xpose.msra.mxu0 0.0
        %3007 = vmatprep.subr.mxu0 0.0
        %3008 = vmatpush1.xpose.msra.mxu0 0.0
        %3009 = vmatprep.subr.mxu0 0.0
        %3010 = vmatpush1.xpose.msra.mxu0 0.0
        %3011 = vmatprep.subr.mxu0 0.0
        %3012 = vmatpush1.xpose.msra.mxu0 0.0
        %3013 = vmatprep.subr.mxu0 0.0
        %3014 = vmatpush1.xpose.msra.mxu0 0.0
        %3015 = vmatprep.subr.mxu0 0.0
        %3016 = vmatpush1.xpose.msra.mxu0 0.0
        %3017 = vmatprep.subr.mxu0 0.0
        %3018 = vmatpush1.xpose.msra.mxu0 0.0
        %3019 = vmatprep.subr.mxu0 0.0
        %3020 = vmatpush1.xpose.msra.mxu0 0.0
        %3021 = vmatprep.subr.mxu0 0.0
        %3022 = vmatpush1.xpose.msra.mxu0 0.0
        %3023 = vmatprep.subr.mxu0 0.0
        %3024 = vmatpush1.xpose.msra.mxu0 0.0
        %3025 = vmatprep.subr.mxu0 0.0
        %3026 = vmatpush1.xpose.msra.mxu0 0.0
        %3027 = vmatprep.subr.mxu0 0.0
        %3028 = vmatpush1.xpose.msra.mxu0 0.0
        %3029 = vmatprep.subr.mxu0 0.0
        %3030 = vmatpush1.xpose.msra.mxu0 0.0
        %3031 = vmatprep.subr.mxu0 0.0
        %3032 = vmatpush1.xpose.msra.mxu0 0.0
        %3033 = vmatprep.subr.mxu0 0.0
        %3034 = vmatpush1.xpose.msra.mxu0 0.0
        %3035 = vmatprep.subr.mxu0 0.0
        %3036 = vmatpush1.xpose.msra.mxu0 0.0
        %3037 = vmatprep.mubr.f32.mxu0 0.0
        %3038 = vmatmul.mubr.f32.gmra.mrb[0].mxu0 %v2941
        %v3039 = vpop.f32.mrb[0].mxu0
        %v3040 = vadd.f32 0.0, %v3039
        %v3041 = vpop.f32.mrb[0].mxu0
        %3042 = vmatprep.mubr.f32.mxu0 0.0
        %3043 = vmatmul.mubr.f32.gmra.mrb[0].mxu0 %v2943
        %v3044 = vpop.f32.mrb[0].mxu0
        %v3045 = vadd.f32 0.0, %v3044
        %v3046 = vpop.f32.mrb[0].mxu0
        %3047 = vmatprep.mubr.f32.mxu0 0.0
        %3048 = vmatmul.mubr.f32.gmra.mrb[0].mxu0 %v2945
        %v3049 = vpop.f32.mrb[0].mxu0
        %v3050 = vadd.f32 0.0, %v3049
        %v3051 = vpop.f32.mrb[0].mxu0
        %3052 = vmatprep.mubr.f32.mxu0 0.0
        %3053 = vmatmul.mubr.f32.gmra.mrb[0].mxu0 %v2947
        %v3054 = vpop.f32.mrb[0].mxu0
        %v3055 = vadd.f32 0.0, %v3054
        %v3056 = vpop.f32.mrb[0].mxu0
        %3057 = vmatprep.mubr.f32.mxu0 0.0
        %3058 = vmatmul.mubr.f32.gmra.mrb[0].mxu0 %v2949
        %v3059 = vpop.f32.mrb[0].mxu0
        %v3060 = vadd.f32 0.0, %v3059
        %v3061 = vpop.f32.mrb[0].mxu0
        %3062 = vmatprep.mubr.f32.mxu0 0.0
        %3063 = vmatmul.mubr.f32.gmra.mrb[0].mxu0 %v2951
        %v3064 = vpop.f32.mrb[0].mxu0
        %v3065 = vadd.f32 0.0, %v3064
        %v3066 = vpop.f32.mrb[0].mxu0
        %3067 = vmatprep.mubr.f32.mxu0 0.0
        %3068 = vmatmul.mubr.f32.gmra.mrb[0].mxu0 %v2953
        %v3069 = vpop.f32.mrb[0].mxu0
        %v3070 = vadd.f32 0.0, %v3069
        %v3071 = vpop.f32.mrb[0].mxu0
        %3072 = vmatprep.mubr.f32.mxu0 0.0
        %3073 = vmatmul.mubr.f32.gmra.mrb[0].mxu0 %v2955
        %v3074 = vpop.f32.mrb[0].mxu0
        %v3075 = vadd.f32 0.0, %v3074
        %v3076 = vpop.f32.mrb[0].mxu0
        %3077 = vdwg.mxu0
        %3078 = vrot.lane.b32.xlu0 %v1148, 112
        %v3079 = vpop.permute.xlu0 %3078
        %3080 = vrot.lane.b32.xlu0 %v1153, 112
        %v3081 = vpop.permute.xlu0 %3080
        %3082 = vrot.lane.b32.xlu0 %v1158, 112
        %v3083 = vpop.permute.xlu0 %3082
        %3084 = vrot.lane.b32.xlu0 %v1163, 112
        %v3085 = vpop.permute.xlu0 %3084
        %3086 = vrot.lane.b32.xlu0 %v1168, 112
        %v3087 = vpop.permute.xlu0 %3086
        %3088 = vrot.lane.b32.xlu0 %v1173, 112
        %v3089 = vpop.permute.xlu0 %3088
        %3090 = vrot.lane.b32.xlu0 %v1178, 112
        %v3091 = vpop.permute.xlu0 %3090
        %3092 = vrot.lane.b32.xlu0 %v1183, 112
        %v3093 = vpop.permute.xlu0 %3092
        %3094 = vrot.lane.b32.xlu0 %v1148, 80
        %v3095 = vpop.permute.xlu0 %3094
        %3096 = vrot.lane.b32.xlu0 %v1153, 80
        %v3097 = vpop.permute.xlu0 %3096
        %3098 = vrot.lane.b32.xlu0 %v1158, 80
        %v3099 = vpop.permute.xlu0 %3098
        %3100 = vrot.lane.b32.xlu0 %v1163, 80
        %v3101 = vpop.permute.xlu0 %3100
        %3102 = vrot.lane.b32.xlu0 %v1168, 80
        %v3103 = vpop.permute.xlu0 %3102
        %3104 = vrot.lane.b32.xlu0 %v1173, 80
        %v3105 = vpop.permute.xlu0 %3104
        %3106 = vrot.lane.b32.xlu0 %v1178, 80
        %v3107 = vpop.permute.xlu0 %3106
        %3108 = vrot.lane.b32.xlu0 %v1183, 80
        %v3109 = vpop.permute.xlu0 %3108
        %v3110 = vsel %vm1210, %v3079, 0
        %v3112 = vsel %vm1210, %v3081, 0
        %v3114 = vsel %vm1210, %v3083, 0
        %v3116 = vsel %vm1210, %v3085, 0
        %v3118 = vsel %vm1210, %v3087, 0
        %v3120 = vsel %vm1210, %v3089, 0
        %v3122 = vsel %vm1210, %v3091, 0
        %v3124 = vsel %vm1210, %v3093, 0
        %v3126 = vsel %vm1210, %v3095, 0
        %v3128 = vsel %vm1210, %v3097, 0
        %v3130 = vsel %vm1210, %v3099, 0
        %v3132 = vsel %vm1210, %v3101, 0
        %v3134 = vsel %vm1210, %v3103, 0
        %v3136 = vsel %vm1210, %v3105, 0
        %v3138 = vsel %vm1210, %v3107, 0
        %v3140 = vsel %vm1210, %v3109, 0
        %3142 = vmatprep.subr.mxu0 0.0
        %3143 = vmatpush1.xpose.msra.mxu0 %v3126
        %3144 = vmatprep.subr.mxu0 0.0
        %3145 = vmatpush1.xpose.msra.mxu0 %v3128
        %3146 = vmatprep.subr.mxu0 0.0
        %3147 = vmatpush1.xpose.msra.mxu0 %v3130
        %3148 = vmatprep.subr.mxu0 0.0
        %3149 = vmatpush1.xpose.msra.mxu0 %v3132
        %3150 = vmatprep.subr.mxu0 0.0
        %3151 = vmatpush1.xpose.msra.mxu0 %v3134
        %3152 = vmatprep.subr.mxu0 0.0
        %3153 = vmatpush1.xpose.msra.mxu0 %v3136
        %3154 = vmatprep.subr.mxu0 0.0
        %3155 = vmatpush1.xpose.msra.mxu0 %v3138
        %3156 = vmatprep.subr.mxu0 0.0
        %3157 = vmatpush1.xpose.msra.mxu0 %v3140
        %3158 = vmatprep.subr.mxu0 0.0
        %3159 = vmatpush1.xpose.msra.mxu0 0.0
        %3160 = vmatprep.subr.mxu0 0.0
        %3161 = vmatpush1.xpose.msra.mxu0 0.0
        %3162 = vmatprep.subr.mxu0 0.0
        %3163 = vmatpush1.xpose.msra.mxu0 0.0
        %3164 = vmatprep.subr.mxu0 0.0
        %3165 = vmatpush1.xpose.msra.mxu0 0.0
        %3166 = vmatprep.subr.mxu0 0.0
        %3167 = vmatpush1.xpose.msra.mxu0 0.0
        %3168 = vmatprep.subr.mxu0 0.0
        %3169 = vmatpush1.xpose.msra.mxu0 0.0
        %3170 = vmatprep.subr.mxu0 0.0
        %3171 = vmatpush1.xpose.msra.mxu0 0.0
        %3172 = vmatprep.subr.mxu0 0.0
        %3173 = vmatpush1.xpose.msra.mxu0 0.0
        %3174 = vmatprep.subr.mxu0 0.0
        %3175 = vmatpush1.xpose.msra.mxu0 0.0
        %3176 = vmatprep.subr.mxu0 0.0
        %3177 = vmatpush1.xpose.msra.mxu0 0.0
        %3178 = vmatprep.subr.mxu0 0.0
        %3179 = vmatpush1.xpose.msra.mxu0 0.0
        %3180 = vmatprep.subr.mxu0 0.0
        %3181 = vmatpush1.xpose.msra.mxu0 0.0
        %3182 = vmatprep.subr.mxu0 0.0
        %3183 = vmatpush1.xpose.msra.mxu0 0.0
        %3184 = vmatprep.subr.mxu0 0.0
        %3185 = vmatpush1.xpose.msra.mxu0 0.0
        %3186 = vmatprep.subr.mxu0 0.0
        %3187 = vmatpush1.xpose.msra.mxu0 0.0
        %3188 = vmatprep.subr.mxu0 0.0
        %3189 = vmatpush1.xpose.msra.mxu0 0.0
        %3190 = vmatprep.subr.mxu0 0.0
        %3191 = vmatpush1.xpose.msra.mxu0 0.0
        %3192 = vmatprep.subr.mxu0 0.0
        %3193 = vmatpush1.xpose.msra.mxu0 0.0
        %3194 = vmatprep.subr.mxu0 0.0
        %3195 = vmatpush1.xpose.msra.mxu0 0.0
        %3196 = vmatprep.subr.mxu0 0.0
        %3197 = vmatpush1.xpose.msra.mxu0 0.0
        %3198 = vmatprep.subr.mxu0 0.0
        %3199 = vmatpush1.xpose.msra.mxu0 0.0
        %3200 = vmatprep.subr.mxu0 0.0
        %3201 = vmatpush1.xpose.msra.mxu0 0.0
        %3202 = vmatprep.subr.mxu0 0.0
        %3203 = vmatpush1.xpose.msra.mxu0 0.0
        %3204 = vmatprep.subr.mxu0 0.0
        %3205 = vmatpush1.xpose.msra.mxu0 0.0
        %3206 = vmatprep.mubr.f32.mxu0 0.0
        %3207 = vmatmul.mubr.f32.gmra.mrb[0].mxu0 %v3110
        %v3208 = vpop.f32.mrb[0].mxu0
        %v3209 = vadd.f32 0.0, %v3208
        %v3210 = vpop.f32.mrb[0].mxu0
        %3211 = vmatprep.mubr.f32.mxu0 0.0
        %3212 = vmatmul.mubr.f32.gmra.mrb[0].mxu0 %v3112
        %v3213 = vpop.f32.mrb[0].mxu0
        %v3214 = vadd.f32 0.0, %v3213
        %v3215 = vpop.f32.mrb[0].mxu0
        %3216 = vmatprep.mubr.f32.mxu0 0.0
        %3217 = vmatmul.mubr.f32.gmra.mrb[0].mxu0 %v3114
        %v3218 = vpop.f32.mrb[0].mxu0
        %v3219 = vadd.f32 0.0, %v3218
        %v3220 = vpop.f32.mrb[0].mxu0
        %3221 = vmatprep.mubr.f32.mxu0 0.0
        %3222 = vmatmul.mubr.f32.gmra.mrb[0].mxu0 %v3116
        %v3223 = vpop.f32.mrb[0].mxu0
        %v3224 = vadd.f32 0.0, %v3223
        %v3225 = vpop.f32.mrb[0].mxu0
        %3226 = vmatprep.mubr.f32.mxu0 0.0
        %3227 = vmatmul.mubr.f32.gmra.mrb[0].mxu0 %v3118
        %v3228 = vpop.f32.mrb[0].mxu0
        %v3229 = vadd.f32 0.0, %v3228
        %v3230 = vpop.f32.mrb[0].mxu0
        %3231 = vmatprep.mubr.f32.mxu0 0.0
        %3232 = vmatmul.mubr.f32.gmra.mrb[0].mxu0 %v3120
        %v3233 = vpop.f32.mrb[0].mxu0
        %v3234 = vadd.f32 0.0, %v3233
        %v3235 = vpop.f32.mrb[0].mxu0
        %3236 = vmatprep.mubr.f32.mxu0 0.0
        %3237 = vmatmul.mubr.f32.gmra.mrb[0].mxu0 %v3122
        %v3238 = vpop.f32.mrb[0].mxu0
        %v3239 = vadd.f32 0.0, %v3238
        %v3240 = vpop.f32.mrb[0].mxu0
        %3241 = vmatprep.mubr.f32.mxu0 0.0
        %3242 = vmatmul.mubr.f32.gmra.mrb[0].mxu0 %v3124
        %v3243 = vpop.f32.mrb[0].mxu0
        %v3244 = vadd.f32 0.0, %v3243
        %v3245 = vpop.f32.mrb[0].mxu0
        %3246 = vdwg.mxu0
        %v3247 = vsel %vm1509, %v3040, -inf
        %3248 = vmax.xlane.f32.xlu0 %v3247
        %v3249 = vpop.xlane.xlu0 %3248
        %v3250 = vsel %vm1509, %v3045, -inf
        %3251 = vmax.xlane.f32.xlu0 %v3250
        %v3252 = vpop.xlane.xlu0 %3251
        %v3253 = vsel %vm1509, %v3050, -inf
        %3254 = vmax.xlane.f32.xlu0 %v3253
        %v3255 = vpop.xlane.xlu0 %3254
        %v3256 = vsel %vm1509, %v3055, -inf
        %3257 = vmax.xlane.f32.xlu0 %v3256
        %v3258 = vpop.xlane.xlu0 %3257
        %v3259 = vsel %vm1509, %v3060, -inf
        %3260 = vmax.xlane.f32.xlu0 %v3259
        %v3261 = vpop.xlane.xlu0 %3260
        %v3262 = vsel %vm1509, %v3065, -inf
        %3263 = vmax.xlane.f32.xlu0 %v3262
        %v3264 = vpop.xlane.xlu0 %3263
        %v3265 = vsel %vm1509, %v3070, -inf
        %3266 = vmax.xlane.f32.xlu0 %v3265
        %v3267 = vpop.xlane.xlu0 %3266
        %v3268 = vsel %vm1509, %v3075, -inf
        %3269 = vmax.xlane.f32.xlu0 %v3268
        %v3270 = vpop.xlane.xlu0 %3269
        %v3271 = vsel %vm1509, %v3209, -inf
        %3272 = vmax.xlane.f32.xlu0 %v3271
        %v3273 = vpop.xlane.xlu0 %3272
        %v3274 = vsel %vm1509, %v3214, -inf
        %3275 = vmax.xlane.f32.xlu0 %v3274
        %v3276 = vpop.xlane.xlu0 %3275
        %v3277 = vsel %vm1509, %v3219, -inf
        %3278 = vmax.xlane.f32.xlu0 %v3277
        %v3279 = vpop.xlane.xlu0 %3278
        %v3280 = vsel %vm1509, %v3224, -inf
        %3281 = vmax.xlane.f32.xlu0 %v3280
        %v3282 = vpop.xlane.xlu0 %3281
        %v3283 = vsel %vm1509, %v3229, -inf
        %3284 = vmax.xlane.f32.xlu0 %v3283
        %v3285 = vpop.xlane.xlu0 %3284
        %v3286 = vsel %vm1509, %v3234, -inf
        %3287 = vmax.xlane.f32.xlu0 %v3286
        %v3288 = vpop.xlane.xlu0 %3287
        %v3289 = vsel %vm1509, %v3239, -inf
        %3290 = vmax.xlane.f32.xlu0 %v3289
        %v3291 = vpop.xlane.xlu0 %3290
        %v3292 = vsel %vm1509, %v3244, -inf
        %3293 = vmax.xlane.f32.xlu0 %v3292
        %v3294 = vpop.xlane.xlu0 %3293
        %v3295 = vsub.f32 %v3040, %v3249
        %v3296 = vsub.f32 %v3045, %v3252
        %v3297 = vsub.f32 %v3050, %v3255
        %v3298 = vsub.f32 %v3055, %v3258
        %v3299 = vsub.f32 %v3060, %v3261
        %v3300 = vsub.f32 %v3065, %v3264
        %v3301 = vsub.f32 %v3070, %v3267
        %v3302 = vsub.f32 %v3075, %v3270
        %v3303 = vsub.f32 %v3209, %v3273
        %v3304 = vsub.f32 %v3214, %v3276
        %v3305 = vsub.f32 %v3219, %v3279
        %v3306 = vsub.f32 %v3224, %v3282
        %v3307 = vsub.f32 %v3229, %v3285
        %v3308 = vsub.f32 %v3234, %v3288
        %v3309 = vsub.f32 %v3239, %v3291
        %v3310 = vsub.f32 %v3244, %v3294
        %v3311 = vmul.f32 %v3295, 1.442695
        %v3312 = vpow.pop %v3311
        %v3313 = vmul.f32 %v3296, 1.442695
        %v3314 = vpow.pop %v3313
        %v3315 = vmul.f32 %v3297, 1.442695
        %v3316 = vpow.pop %v3315
        %v3317 = vmul.f32 %v3298, 1.442695
        %v3318 = vpow.pop %v3317
        %v3319 = vmul.f32 %v3299, 1.442695
        %v3320 = vpow.pop %v3319
        %v3321 = vmul.f32 %v3300, 1.442695
        %v3322 = vpow.pop %v3321
        %v3323 = vmul.f32 %v3301, 1.442695
        %v3324 = vpow.pop %v3323
        %v3325 = vmul.f32 %v3302, 1.442695
        %v3326 = vpow.pop %v3325
        %v3327 = vmul.f32 %v3303, 1.442695
        %v3328 = vpow.pop %v3327
        %v3329 = vmul.f32 %v3304, 1.442695
        %v3330 = vpow.pop %v3329
        %v3331 = vmul.f32 %v3305, 1.442695
        %v3332 = vpow.pop %v3331
        %v3333 = vmul.f32 %v3306, 1.442695
        %v3334 = vpow.pop %v3333
        %v3335 = vmul.f32 %v3307, 1.442695
        %v3336 = vpow.pop %v3335
        %v3337 = vmul.f32 %v3308, 1.442695
        %v3338 = vpow.pop %v3337
        %v3339 = vmul.f32 %v3309, 1.442695
        %v3340 = vpow.pop %v3339
        %v3341 = vmul.f32 %v3310, 1.442695
        %v3342 = vpow.pop %v3341
        %v3343 = vsel %vm1509, %v3312, 0.0
        %3344 = vadd.xlane.f32.xlu0 %v3343
        %v3345 = vpop.xlane.xlu0 %3344
        %v3346 = vsel %vm1509, %v3314, 0.0
        %3347 = vadd.xlane.f32.xlu0 %v3346
        %v3348 = vpop.xlane.xlu0 %3347
        %v3349 = vsel %vm1509, %v3316, 0.0
        %3350 = vadd.xlane.f32.xlu0 %v3349
        %v3351 = vpop.xlane.xlu0 %3350
        %v3352 = vsel %vm1509, %v3318, 0.0
        %3353 = vadd.xlane.f32.xlu0 %v3352
        %v3354 = vpop.xlane.xlu0 %3353
        %v3355 = vsel %vm1509, %v3320, 0.0
        %3356 = vadd.xlane.f32.xlu0 %v3355
        %v3357 = vpop.xlane.xlu0 %3356
        %v3358 = vsel %vm1509, %v3322, 0.0
        %3359 = vadd.xlane.f32.xlu0 %v3358
        %v3360 = vpop.xlane.xlu0 %3359
        %v3361 = vsel %vm1509, %v3324, 0.0
        %3362 = vadd.xlane.f32.xlu0 %v3361
        %v3363 = vpop.xlane.xlu0 %3362
        %v3364 = vsel %vm1509, %v3326, 0.0
        %3365 = vadd.xlane.f32.xlu0 %v3364
        %v3366 = vpop.xlane.xlu0 %3365
        %v3367 = vsel %vm1509, %v3328, 0.0
        %3368 = vadd.xlane.f32.xlu0 %v3367
        %v3369 = vpop.xlane.xlu0 %3368
        %v3370 = vsel %vm1509, %v3330, 0.0
        %3371 = vadd.xlane.f32.xlu0 %v3370
        %v3372 = vpop.xlane.xlu0 %3371
        %v3373 = vsel %vm1509, %v3332, 0.0
        %3374 = vadd.xlane.f32.xlu0 %v3373
        %v3375 = vpop.xlane.xlu0 %3374
        %v3376 = vsel %vm1509, %v3334, 0.0
        %3377 = vadd.xlane.f32.xlu0 %v3376
        %v3378 = vpop.xlane.xlu0 %3377
        %v3379 = vsel %vm1509, %v3336, 0.0
        %3380 = vadd.xlane.f32.xlu0 %v3379
        %v3381 = vpop.xlane.xlu0 %3380
        %v3382 = vsel %vm1509, %v3338, 0.0
        %3383 = vadd.xlane.f32.xlu0 %v3382
        %v3384 = vpop.xlane.xlu0 %3383
        %v3385 = vsel %vm1509, %v3340, 0.0
        %3386 = vadd.xlane.f32.xlu0 %v3385
        %v3387 = vpop.xlane.xlu0 %3386
        %v3388 = vsel %vm1509, %v3342, 0.0
        %3389 = vadd.xlane.f32.xlu0 %v3388
        %v3390 = vpop.xlane.xlu0 %3389
        %v3391 = vrcp.pop %v3345
        %v3392 = vrcp.pop %v3348
        %v3393 = vrcp.pop %v3351
        %v3394 = vrcp.pop %v3354
        %v3395 = vrcp.pop %v3357
        %v3396 = vrcp.pop %v3360
        %v3397 = vrcp.pop %v3363
        %v3398 = vrcp.pop %v3366
        %v3399 = vrcp.pop %v3369
        %v3400 = vrcp.pop %v3372
        %v3401 = vrcp.pop %v3375
        %v3402 = vrcp.pop %v3378
        %v3403 = vrcp.pop %v3381
        %v3404 = vrcp.pop %v3384
        %v3405 = vrcp.pop %v3387
        %v3406 = vrcp.pop %v3390
        %v3407 = vmul.f32 %v3312, %v3391
        %v3408 = vmul.f32 %v3314, %v3392
        %v3409 = vmul.f32 %v3316, %v3393
        %v3410 = vmul.f32 %v3318, %v3394
        %v3411 = vmul.f32 %v3320, %v3395
        %v3412 = vmul.f32 %v3322, %v3396
        %v3413 = vmul.f32 %v3324, %v3397
        %v3414 = vmul.f32 %v3326, %v3398
        %v3415 = vmul.f32 %v3328, %v3399
        %v3416 = vmul.f32 %v3330, %v3400
        %v3417 = vmul.f32 %v3332, %v3401
        %v3418 = vmul.f32 %v3334, %v3402
        %v3419 = vmul.f32 %v3336, %v3403
        %v3420 = vmul.f32 %v3338, %v3404
        %v3421 = vmul.f32 %v3340, %v3405
        %v3422 = vmul.f32 %v3342, %v3406
        %3423 = vrot.lane.b32.xlu0 %v1108, 48
        %v3424 = vpop.permute.xlu0 %3423
        %3425 = vrot.lane.b32.xlu0 %v1113, 48
        %v3426 = vpop.permute.xlu0 %3425
        %3427 = vrot.lane.b32.xlu0 %v1118, 48
        %v3428 = vpop.permute.xlu0 %3427
        %3429 = vrot.lane.b32.xlu0 %v1123, 48
        %v3430 = vpop.permute.xlu0 %3429
        %3431 = vrot.lane.b32.xlu0 %v1128, 48
        %v3432 = vpop.permute.xlu0 %3431
        %3433 = vrot.lane.b32.xlu0 %v1133, 48
        %v3434 = vpop.permute.xlu0 %3433
        %3435 = vrot.lane.b32.xlu0 %v1138, 48
        %v3436 = vpop.permute.xlu0 %3435
        %3437 = vrot.lane.b32.xlu0 %v1143, 48
        %v3438 = vpop.permute.xlu0 %3437
        %v3448 = vsel %vm1509, %v3407, 0
        %v3451 = vsel %vm1509, %v3408, 0
        %v3454 = vsel %vm1509, %v3409, 0
        %v3457 = vsel %vm1509, %v3410, 0
        %v3460 = vsel %vm1509, %v3411, 0
        %v3463 = vsel %vm1509, %v3412, 0
        %v3466 = vsel %vm1509, %v3413, 0
        %v3469 = vsel %vm1509, %v3414, 0
        %3471 = vmatprep.subr.mxu0 0.0
        %3472 = vmatpush1.msra.mxu0 %v3424
        %3473 = vmatprep.subr.mxu0 0.0
        %3474 = vmatpush1.msra.mxu0 %v3426
        %3475 = vmatprep.subr.mxu0 0.0
        %3476 = vmatpush1.msra.mxu0 %v3428
        %3477 = vmatprep.subr.mxu0 0.0
        %3478 = vmatpush1.msra.mxu0 %v3430
        %3479 = vmatprep.subr.mxu0 0.0
        %3480 = vmatpush1.msra.mxu0 %v3432
        %3481 = vmatprep.subr.mxu0 0.0
        %3482 = vmatpush1.msra.mxu0 %v3434
        %3483 = vmatprep.subr.mxu0 0.0
        %3484 = vmatpush1.msra.mxu0 %v3436
        %3485 = vmatprep.subr.mxu0 0.0
        %3486 = vmatpush1.msra.mxu0 %v3438
        %3487 = vmatprep.subr.mxu0 0.0
        %3488 = vmatpush1.msra.mxu0 0.0
        %3489 = vmatprep.subr.mxu0 0.0
        %3490 = vmatpush1.msra.mxu0 0.0
        %3491 = vmatprep.subr.mxu0 0.0
        %3492 = vmatpush1.msra.mxu0 0.0
        %3493 = vmatprep.subr.mxu0 0.0
        %3494 = vmatpush1.msra.mxu0 0.0
        %3495 = vmatprep.subr.mxu0 0.0
        %3496 = vmatpush1.msra.mxu0 0.0
        %3497 = vmatprep.subr.mxu0 0.0
        %3498 = vmatpush1.msra.mxu0 0.0
        %3499 = vmatprep.subr.mxu0 0.0
        %3500 = vmatpush1.msra.mxu0 0.0
        %3501 = vmatprep.subr.mxu0 0.0
        %3502 = vmatpush1.msra.mxu0 0.0
        %3503 = vmatprep.subr.mxu0 0.0
        %3504 = vmatpush1.msra.mxu0 0.0
        %3505 = vmatprep.subr.mxu0 0.0
        %3506 = vmatpush1.msra.mxu0 0.0
        %3507 = vmatprep.subr.mxu0 0.0
        %3508 = vmatpush1.msra.mxu0 0.0
        %3509 = vmatprep.subr.mxu0 0.0
        %3510 = vmatpush1.msra.mxu0 0.0
        %3511 = vmatprep.subr.mxu0 0.0
        %3512 = vmatpush1.msra.mxu0 0.0
        %3513 = vmatprep.subr.mxu0 0.0
        %3514 = vmatpush1.msra.mxu0 0.0
        %3515 = vmatprep.subr.mxu0 0.0
        %3516 = vmatpush1.msra.mxu0 0.0
        %3517 = vmatprep.subr.mxu0 0.0
        %3518 = vmatpush1.msra.mxu0 0.0
        %3519 = vmatprep.subr.mxu0 0.0
        %3520 = vmatpush1.msra.mxu0 0.0
        %3521 = vmatprep.subr.mxu0 0.0
        %3522 = vmatpush1.msra.mxu0 0.0
        %3523 = vmatprep.subr.mxu0 0.0
        %3524 = vmatpush1.msra.mxu0 0.0
        %3525 = vmatprep.subr.mxu0 0.0
        %3526 = vmatpush1.msra.mxu0 0.0
        %3527 = vmatprep.subr.mxu0 0.0
        %3528 = vmatpush1.msra.mxu0 0.0
        %3529 = vmatprep.subr.mxu0 0.0
        %3530 = vmatpush1.msra.mxu0 0.0
        %3531 = vmatprep.subr.mxu0 0.0
        %3532 = vmatpush1.msra.mxu0 0.0
        %3533 = vmatprep.subr.mxu0 0.0
        %3534 = vmatpush1.msra.mxu0 0.0
        %3535 = vmatprep.mubr.f32.mxu0 0.0
        %3536 = vmatmul.mubr.f32.gmra.mrb[0].mxu0 %v3448
        %v3537 = vpop.f32.mrb[0].mxu0
        %v3538 = vadd.f32 0.0, %v3537
        %v3539 = vpop.f32.mrb[0].mxu0
        %3540 = vmatprep.mubr.f32.mxu0 0.0
        %3541 = vmatmul.mubr.f32.gmra.mrb[0].mxu0 %v3451
        %v3542 = vpop.f32.mrb[0].mxu0
        %v3543 = vadd.f32 0.0, %v3542
        %v3544 = vpop.f32.mrb[0].mxu0
        %3545 = vmatprep.mubr.f32.mxu0 0.0
        %3546 = vmatmul.mubr.f32.gmra.mrb[0].mxu0 %v3454
        %v3547 = vpop.f32.mrb[0].mxu0
        %v3548 = vadd.f32 0.0, %v3547
        %v3549 = vpop.f32.mrb[0].mxu0
        %3550 = vmatprep.mubr.f32.mxu0 0.0
        %3551 = vmatmul.mubr.f32.gmra.mrb[0].mxu0 %v3457
        %v3552 = vpop.f32.mrb[0].mxu0
        %v3553 = vadd.f32 0.0, %v3552
        %v3554 = vpop.f32.mrb[0].mxu0
        %3555 = vmatprep.mubr.f32.mxu0 0.0
        %3556 = vmatmul.mubr.f32.gmra.mrb[0].mxu0 %v3460
        %v3557 = vpop.f32.mrb[0].mxu0
        %v3558 = vadd.f32 0.0, %v3557
        %v3559 = vpop.f32.mrb[0].mxu0
        %3560 = vmatprep.mubr.f32.mxu0 0.0
        %3561 = vmatmul.mubr.f32.gmra.mrb[0].mxu0 %v3463
        %v3562 = vpop.f32.mrb[0].mxu0
        %v3563 = vadd.f32 0.0, %v3562
        %v3564 = vpop.f32.mrb[0].mxu0
        %3565 = vmatprep.mubr.f32.mxu0 0.0
        %3566 = vmatmul.mubr.f32.gmra.mrb[0].mxu0 %v3466
        %v3567 = vpop.f32.mrb[0].mxu0
        %v3568 = vadd.f32 0.0, %v3567
        %v3569 = vpop.f32.mrb[0].mxu0
        %3570 = vmatprep.mubr.f32.mxu0 0.0
        %3571 = vmatmul.mubr.f32.gmra.mrb[0].mxu0 %v3469
        %v3572 = vpop.f32.mrb[0].mxu0
        %v3573 = vadd.f32 0.0, %v3572
        %v3574 = vpop.f32.mrb[0].mxu0
        %3575 = vdwg.mxu0
        %3576 = vrot.lane.b32.xlu0 %v1148, 48
        %v3577 = vpop.permute.xlu0 %3576
        %3578 = vrot.lane.b32.xlu0 %v1153, 48
        %v3579 = vpop.permute.xlu0 %3578
        %3580 = vrot.lane.b32.xlu0 %v1158, 48
        %v3581 = vpop.permute.xlu0 %3580
        %3582 = vrot.lane.b32.xlu0 %v1163, 48
        %v3583 = vpop.permute.xlu0 %3582
        %3584 = vrot.lane.b32.xlu0 %v1168, 48
        %v3585 = vpop.permute.xlu0 %3584
        %3586 = vrot.lane.b32.xlu0 %v1173, 48
        %v3587 = vpop.permute.xlu0 %3586
        %3588 = vrot.lane.b32.xlu0 %v1178, 48
        %v3589 = vpop.permute.xlu0 %3588
        %3590 = vrot.lane.b32.xlu0 %v1183, 48
        %v3591 = vpop.permute.xlu0 %3590
        %v3601 = vsel %vm1509, %v3415, 0
        %v3604 = vsel %vm1509, %v3416, 0
        %v3607 = vsel %vm1509, %v3417, 0
        %v3610 = vsel %vm1509, %v3418, 0
        %v3613 = vsel %vm1509, %v3419, 0
        %v3616 = vsel %vm1509, %v3420, 0
        %v3619 = vsel %vm1509, %v3421, 0
        %v3622 = vsel %vm1509, %v3422, 0
        %3624 = vmatprep.subr.mxu0 0.0
        %3625 = vmatpush1.msra.mxu0 %v3577
        %3626 = vmatprep.subr.mxu0 0.0
        %3627 = vmatpush1.msra.mxu0 %v3579
        %3628 = vmatprep.subr.mxu0 0.0
        %3629 = vmatpush1.msra.mxu0 %v3581
        %3630 = vmatprep.subr.mxu0 0.0
        %3631 = vmatpush1.msra.mxu0 %v3583
        %3632 = vmatprep.subr.mxu0 0.0
        %3633 = vmatpush1.msra.mxu0 %v3585
        %3634 = vmatprep.subr.mxu0 0.0
        %3635 = vmatpush1.msra.mxu0 %v3587
        %3636 = vmatprep.subr.mxu0 0.0
        %3637 = vmatpush1.msra.mxu0 %v3589
        %3638 = vmatprep.subr.mxu0 0.0
        %3639 = vmatpush1.msra.mxu0 %v3591
        %3640 = vmatprep.subr.mxu0 0.0
        %3641 = vmatpush1.msra.mxu0 0.0
        %3642 = vmatprep.subr.mxu0 0.0
        %3643 = vmatpush1.msra.mxu0 0.0
        %3644 = vmatprep.subr.mxu0 0.0
        %3645 = vmatpush1.msra.mxu0 0.0
        %3646 = vmatprep.subr.mxu0 0.0
        %3647 = vmatpush1.msra.mxu0 0.0
        %3648 = vmatprep.subr.mxu0 0.0
        %3649 = vmatpush1.msra.mxu0 0.0
        %3650 = vmatprep.subr.mxu0 0.0
        %3651 = vmatpush1.msra.mxu0 0.0
        %3652 = vmatprep.subr.mxu0 0.0
        %3653 = vmatpush1.msra.mxu0 0.0
        %3654 = vmatprep.subr.mxu0 0.0
        %3655 = vmatpush1.msra.mxu0 0.0
        %3656 = vmatprep.subr.mxu0 0.0
        %3657 = vmatpush1.msra.mxu0 0.0
        %3658 = vmatprep.subr.mxu0 0.0
        %3659 = vmatpush1.msra.mxu0 0.0
        %3660 = vmatprep.subr.mxu0 0.0
        %3661 = vmatpush1.msra.mxu0 0.0
        %3662 = vmatprep.subr.mxu0 0.0
        %3663 = vmatpush1.msra.mxu0 0.0
        %3664 = vmatprep.subr.mxu0 0.0
        %3665 = vmatpush1.msra.mxu0 0.0
        %3666 = vmatprep.subr.mxu0 0.0
        %3667 = vmatpush1.msra.mxu0 0.0
        %3668 = vmatprep.subr.mxu0 0.0
        %3669 = vmatpush1.msra.mxu0 0.0
        %3670 = vmatprep.subr.mxu0 0.0
        %3671 = vmatpush1.msra.mxu0 0.0
        %3672 = vmatprep.subr.mxu0 0.0
        %3673 = vmatpush1.msra.mxu0 0.0
        %3674 = vmatprep.subr.mxu0 0.0
        %3675 = vmatpush1.msra.mxu0 0.0
        %3676 = vmatprep.subr.mxu0 0.0
        %3677 = vmatpush1.msra.mxu0 0.0
        %3678 = vmatprep.subr.mxu0 0.0
        %3679 = vmatpush1.msra.mxu0 0.0
        %3680 = vmatprep.subr.mxu0 0.0
        %3681 = vmatpush1.msra.mxu0 0.0
        %3682 = vmatprep.subr.mxu0 0.0
        %3683 = vmatpush1.msra.mxu0 0.0
        %3684 = vmatprep.subr.mxu0 0.0
        %3685 = vmatpush1.msra.mxu0 0.0
        %3686 = vmatprep.subr.mxu0 0.0
        %3687 = vmatpush1.msra.mxu0 0.0
        %3688 = vmatprep.mubr.f32.mxu0 0.0
        %3689 = vmatmul.mubr.f32.gmra.mrb[0].mxu0 %v3601
        %v3690 = vpop.f32.mrb[0].mxu0
        %v3691 = vadd.f32 0.0, %v3690
        %v3692 = vpop.f32.mrb[0].mxu0
        %3693 = vmatprep.mubr.f32.mxu0 0.0
        %3694 = vmatmul.mubr.f32.gmra.mrb[0].mxu0 %v3604
        %v3695 = vpop.f32.mrb[0].mxu0
        %v3696 = vadd.f32 0.0, %v3695
        %v3697 = vpop.f32.mrb[0].mxu0
        %3698 = vmatprep.mubr.f32.mxu0 0.0
        %3699 = vmatmul.mubr.f32.gmra.mrb[0].mxu0 %v3607
        %v3700 = vpop.f32.mrb[0].mxu0
        %v3701 = vadd.f32 0.0, %v3700
        %v3702 = vpop.f32.mrb[0].mxu0
        %3703 = vmatprep.mubr.f32.mxu0 0.0
        %3704 = vmatmul.mubr.f32.gmra.mrb[0].mxu0 %v3610
        %v3705 = vpop.f32.mrb[0].mxu0
        %v3706 = vadd.f32 0.0, %v3705
        %v3707 = vpop.f32.mrb[0].mxu0
        %3708 = vmatprep.mubr.f32.mxu0 0.0
        %3709 = vmatmul.mubr.f32.gmra.mrb[0].mxu0 %v3613
        %v3710 = vpop.f32.mrb[0].mxu0
        %v3711 = vadd.f32 0.0, %v3710
        %v3712 = vpop.f32.mrb[0].mxu0
        %3713 = vmatprep.mubr.f32.mxu0 0.0
        %3714 = vmatmul.mubr.f32.gmra.mrb[0].mxu0 %v3616
        %v3715 = vpop.f32.mrb[0].mxu0
        %v3716 = vadd.f32 0.0, %v3715
        %v3717 = vpop.f32.mrb[0].mxu0
        %3718 = vmatprep.mubr.f32.mxu0 0.0
        %3719 = vmatmul.mubr.f32.gmra.mrb[0].mxu0 %v3619
        %v3720 = vpop.f32.mrb[0].mxu0
        %v3721 = vadd.f32 0.0, %v3720
        %v3722 = vpop.f32.mrb[0].mxu0
        %3723 = vmatprep.mubr.f32.mxu0 0.0
        %3724 = vmatmul.mubr.f32.gmra.mrb[0].mxu0 %v3622
        %v3725 = vpop.f32.mrb[0].mxu0
        %v3726 = vadd.f32 0.0, %v3725
        %v3727 = vpop.f32.mrb[0].mxu0
        %3728 = vdwg.mxu0
        %3745 = vrot.lane.b32.xlu0 %v3538, 16
        %v3746 = vpop.permute.xlu0 %3745
        %3747 = vrot.lane.b32.xlu0 %v3543, 16
        %v3748 = vpop.permute.xlu0 %3747
        %3749 = vrot.lane.b32.xlu0 %v3548, 16
        %v3750 = vpop.permute.xlu0 %3749
        %3751 = vrot.lane.b32.xlu0 %v3553, 16
        %v3752 = vpop.permute.xlu0 %3751
        %3753 = vrot.lane.b32.xlu0 %v3558, 16
        %v3754 = vpop.permute.xlu0 %3753
        %3755 = vrot.lane.b32.xlu0 %v3563, 16
        %v3756 = vpop.permute.xlu0 %3755
        %3757 = vrot.lane.b32.xlu0 %v3568, 16
        %v3758 = vpop.permute.xlu0 %3757
        %3759 = vrot.lane.b32.xlu0 %v3573, 16
        %v3760 = vpop.permute.xlu0 %3759
        %3761 = vrot.lane.b32.xlu0 %v3691, 16
        %v3762 = vpop.permute.xlu0 %3761
        %3763 = vrot.lane.b32.xlu0 %v3696, 16
        %v3764 = vpop.permute.xlu0 %3763
        %3765 = vrot.lane.b32.xlu0 %v3701, 16
        %v3766 = vpop.permute.xlu0 %3765
        %3767 = vrot.lane.b32.xlu0 %v3706, 16
        %v3768 = vpop.permute.xlu0 %3767
        %3769 = vrot.lane.b32.xlu0 %v3711, 16
        %v3770 = vpop.permute.xlu0 %3769
        %3771 = vrot.lane.b32.xlu0 %v3716, 16
        %v3772 = vpop.permute.xlu0 %3771
        %3773 = vrot.lane.b32.xlu0 %v3721, 16
        %v3774 = vpop.permute.xlu0 %3773
        %3775 = vrot.lane.b32.xlu0 %v3726, 16
        %v3776 = vpop.permute.xlu0 %3775
        %vm3793 = vcmask 195712
        %3794 = vst.msk [vmem:[#allocation2] sm:$0xff] %vm3793, %v3746
        %3795 = vst.msk [vmem:[#allocation2 + $0x8] sm:$0xff] %vm3793, %v3748
        %3796 = vst.msk [vmem:[#allocation2 + $0x10] sm:$0xff] %vm3793, %v3750
        %3797 = vst.msk [vmem:[#allocation2 + $0x18] sm:$0xff] %vm3793, %v3752
        %3798 = vst.msk [vmem:[#allocation2 + $0x20] sm:$0xff] %vm3793, %v3754
        %3799 = vst.msk [vmem:[#allocation2 + $0x28] sm:$0xff] %vm3793, %v3756
        %3800 = vst.msk [vmem:[#allocation2 + $0x30] sm:$0xff] %vm3793, %v3758
        %3801 = vst.msk [vmem:[#allocation2 + $0x38] sm:$0xff] %vm3793, %v3760
        %3802 = vst.msk [vmem:[#allocation2 + $0x40] sm:$0xff] %vm3793, %v3762
        %3803 = vst.msk [vmem:[#allocation2 + $0x48] sm:$0xff] %vm3793, %v3764
        %3804 = vst.msk [vmem:[#allocation2 + $0x50] sm:$0xff] %vm3793, %v3766
        %3805 = vst.msk [vmem:[#allocation2 + $0x58] sm:$0xff] %vm3793, %v3768
        %3806 = vst.msk [vmem:[#allocation2 + $0x60] sm:$0xff] %vm3793, %v3770
        %3807 = vst.msk [vmem:[#allocation2 + $0x68] sm:$0xff] %vm3793, %v3772
        %3808 = vst.msk [vmem:[#allocation2 + $0x70] sm:$0xff] %vm3793, %v3774
        %3809 = vst.msk [vmem:[#allocation2 + $0x78] sm:$0xff] %vm3793, %v3776
        %3810 = vrot.lane.b32.xlu0 %v1108, 104
        %v3811 = vpop.permute.xlu0 %3810
        %3812 = vrot.lane.b32.xlu0 %v1113, 104
        %v3813 = vpop.permute.xlu0 %3812
        %3814 = vrot.lane.b32.xlu0 %v1118, 104
        %v3815 = vpop.permute.xlu0 %3814
        %3816 = vrot.lane.b32.xlu0 %v1123, 104
        %v3817 = vpop.permute.xlu0 %3816
        %3818 = vrot.lane.b32.xlu0 %v1128, 104
        %v3819 = vpop.permute.xlu0 %3818
        %3820 = vrot.lane.b32.xlu0 %v1133, 104
        %v3821 = vpop.permute.xlu0 %3820
        %3822 = vrot.lane.b32.xlu0 %v1138, 104
        %v3823 = vpop.permute.xlu0 %3822
        %3824 = vrot.lane.b32.xlu0 %v1143, 104
        %v3825 = vpop.permute.xlu0 %3824
        %3826 = vrot.lane.b32.xlu0 %v1108, 72
        %v3827 = vpop.permute.xlu0 %3826
        %3828 = vrot.lane.b32.xlu0 %v1113, 72
        %v3829 = vpop.permute.xlu0 %3828
        %3830 = vrot.lane.b32.xlu0 %v1118, 72
        %v3831 = vpop.permute.xlu0 %3830
        %3832 = vrot.lane.b32.xlu0 %v1123, 72
        %v3833 = vpop.permute.xlu0 %3832
        %3834 = vrot.lane.b32.xlu0 %v1128, 72
        %v3835 = vpop.permute.xlu0 %3834
        %3836 = vrot.lane.b32.xlu0 %v1133, 72
        %v3837 = vpop.permute.xlu0 %3836
        %3838 = vrot.lane.b32.xlu0 %v1138, 72
        %v3839 = vpop.permute.xlu0 %3838
        %3840 = vrot.lane.b32.xlu0 %v1143, 72
        %v3841 = vpop.permute.xlu0 %3840
        %v3842 = vsel %vm1210, %v3811, 0
        %v3844 = vsel %vm1210, %v3813, 0
        %v3846 = vsel %vm1210, %v3815, 0
        %v3848 = vsel %vm1210, %v3817, 0
        %v3850 = vsel %vm1210, %v3819, 0
        %v3852 = vsel %vm1210, %v3821, 0
        %v3854 = vsel %vm1210, %v3823, 0
        %v3856 = vsel %vm1210, %v3825, 0
        %v3858 = vsel %vm1210, %v3827, 0
        %v3860 = vsel %vm1210, %v3829, 0
        %v3862 = vsel %vm1210, %v3831, 0
        %v3864 = vsel %vm1210, %v3833, 0
        %v3866 = vsel %vm1210, %v3835, 0
        %v3868 = vsel %vm1210, %v3837, 0
        %v3870 = vsel %vm1210, %v3839, 0
        %v3872 = vsel %vm1210, %v3841, 0
        %3874 = vmatprep.subr.mxu0 0.0
        %3875 = vmatpush1.xpose.msra.mxu0 %v3858
        %3876 = vmatprep.subr.mxu0 0.0
        %3877 = vmatpush1.xpose.msra.mxu0 %v3860
        %3878 = vmatprep.subr.mxu0 0.0
        %3879 = vmatpush1.xpose.msra.mxu0 %v3862
        %3880 = vmatprep.subr.mxu0 0.0
        %3881 = vmatpush1.xpose.msra.mxu0 %v3864
        %3882 = vmatprep.subr.mxu0 0.0
        %3883 = vmatpush1.xpose.msra.mxu0 %v3866
        %3884 = vmatprep.subr.mxu0 0.0
        %3885 = vmatpush1.xpose.msra.mxu0 %v3868
        %3886 = vmatprep.subr.mxu0 0.0
        %3887 = vmatpush1.xpose.msra.mxu0 %v3870
        %3888 = vmatprep.subr.mxu0 0.0
        %3889 = vmatpush1.xpose.msra.mxu0 %v3872
        %3890 = vmatprep.subr.mxu0 0.0
        %3891 = vmatpush1.xpose.msra.mxu0 0.0
        %3892 = vmatprep.subr.mxu0 0.0
        %3893 = vmatpush1.xpose.msra.mxu0 0.0
        %3894 = vmatprep.subr.mxu0 0.0
        %3895 = vmatpush1.xpose.msra.mxu0 0.0
        %3896 = vmatprep.subr.mxu0 0.0
        %3897 = vmatpush1.xpose.msra.mxu0 0.0
        %3898 = vmatprep.subr.mxu0 0.0
        %3899 = vmatpush1.xpose.msra.mxu0 0.0
        %3900 = vmatprep.subr.mxu0 0.0
        %3901 = vmatpush1.xpose.msra.mxu0 0.0
        %3902 = vmatprep.subr.mxu0 0.0
        %3903 = vmatpush1.xpose.msra.mxu0 0.0
        %3904 = vmatprep.subr.mxu0 0.0
        %3905 = vmatpush1.xpose.msra.mxu0 0.0
        %3906 = vmatprep.subr.mxu0 0.0
        %3907 = vmatpush1.xpose.msra.mxu0 0.0
        %3908 = vmatprep.subr.mxu0 0.0
        %3909 = vmatpush1.xpose.msra.mxu0 0.0
        %3910 = vmatprep.subr.mxu0 0.0
        %3911 = vmatpush1.xpose.msra.mxu0 0.0
        %3912 = vmatprep.subr.mxu0 0.0
        %3913 = vmatpush1.xpose.msra.mxu0 0.0
        %3914 = vmatprep.subr.mxu0 0.0
        %3915 = vmatpush1.xpose.msra.mxu0 0.0
        %3916 = vmatprep.subr.mxu0 0.0
        %3917 = vmatpush1.xpose.msra.mxu0 0.0
        %3918 = vmatprep.subr.mxu0 0.0
        %3919 = vmatpush1.xpose.msra.mxu0 0.0
        %3920 = vmatprep.subr.mxu0 0.0
        %3921 = vmatpush1.xpose.msra.mxu0 0.0
        %3922 = vmatprep.subr.mxu0 0.0
        %3923 = vmatpush1.xpose.msra.mxu0 0.0
        %3924 = vmatprep.subr.mxu0 0.0
        %3925 = vmatpush1.xpose.msra.mxu0 0.0
        %3926 = vmatprep.subr.mxu0 0.0
        %3927 = vmatpush1.xpose.msra.mxu0 0.0
        %3928 = vmatprep.subr.mxu0 0.0
        %3929 = vmatpush1.xpose.msra.mxu0 0.0
        %3930 = vmatprep.subr.mxu0 0.0
        %3931 = vmatpush1.xpose.msra.mxu0 0.0
        %3932 = vmatprep.subr.mxu0 0.0
        %3933 = vmatpush1.xpose.msra.mxu0 0.0
        %3934 = vmatprep.subr.mxu0 0.0
        %3935 = vmatpush1.xpose.msra.mxu0 0.0
        %3936 = vmatprep.subr.mxu0 0.0
        %3937 = vmatpush1.xpose.msra.mxu0 0.0
        %3938 = vmatprep.mubr.f32.mxu0 0.0
        %3939 = vmatmul.mubr.f32.gmra.mrb[0].mxu0 %v3842
        %v3940 = vpop.f32.mrb[0].mxu0
        %v3941 = vadd.f32 0.0, %v3940
        %v3942 = vpop.f32.mrb[0].mxu0
        %3943 = vmatprep.mubr.f32.mxu0 0.0
        %3944 = vmatmul.mubr.f32.gmra.mrb[0].mxu0 %v3844
        %v3945 = vpop.f32.mrb[0].mxu0
        %v3946 = vadd.f32 0.0, %v3945
        %v3947 = vpop.f32.mrb[0].mxu0
        %3948 = vmatprep.mubr.f32.mxu0 0.0
        %3949 = vmatmul.mubr.f32.gmra.mrb[0].mxu0 %v3846
        %v3950 = vpop.f32.mrb[0].mxu0
        %v3951 = vadd.f32 0.0, %v3950
        %v3952 = vpop.f32.mrb[0].mxu0
        %3953 = vmatprep.mubr.f32.mxu0 0.0
        %3954 = vmatmul.mubr.f32.gmra.mrb[0].mxu0 %v3848
        %v3955 = vpop.f32.mrb[0].mxu0
        %v3956 = vadd.f32 0.0, %v3955
        %v3957 = vpop.f32.mrb[0].mxu0
        %3958 = vmatprep.mubr.f32.mxu0 0.0
        %3959 = vmatmul.mubr.f32.gmra.mrb[0].mxu0 %v3850
        %v3960 = vpop.f32.mrb[0].mxu0
        %v3961 = vadd.f32 0.0, %v3960
        %v3962 = vpop.f32.mrb[0].mxu0
        %3963 = vmatprep.mubr.f32.mxu0 0.0
        %3964 = vmatmul.mubr.f32.gmra.mrb[0].mxu0 %v3852
        %v3965 = vpop.f32.mrb[0].mxu0
        %v3966 = vadd.f32 0.0, %v3965
        %v3967 = vpop.f32.mrb[0].mxu0
        %3968 = vmatprep.mubr.f32.mxu0 0.0
        %3969 = vmatmul.mubr.f32.gmra.mrb[0].mxu0 %v3854
        %v3970 = vpop.f32.mrb[0].mxu0
        %v3971 = vadd.f32 0.0, %v3970
        %v3972 = vpop.f32.mrb[0].mxu0
        %3973 = vmatprep.mubr.f32.mxu0 0.0
        %3974 = vmatmul.mubr.f32.gmra.mrb[0].mxu0 %v3856
        %v3975 = vpop.f32.mrb[0].mxu0
        %v3976 = vadd.f32 0.0, %v3975
        %v3977 = vpop.f32.mrb[0].mxu0
        %3978 = vdwg.mxu0
        %3979 = vrot.lane.b32.xlu0 %v1148, 104
        %v3980 = vpop.permute.xlu0 %3979
        %3981 = vrot.lane.b32.xlu0 %v1153, 104
        %v3982 = vpop.permute.xlu0 %3981
        %3983 = vrot.lane.b32.xlu0 %v1158, 104
        %v3984 = vpop.permute.xlu0 %3983
        %3985 = vrot.lane.b32.xlu0 %v1163, 104
        %v3986 = vpop.permute.xlu0 %3985
        %3987 = vrot.lane.b32.xlu0 %v1168, 104
        %v3988 = vpop.permute.xlu0 %3987
        %3989 = vrot.lane.b32.xlu0 %v1173, 104
        %v3990 = vpop.permute.xlu0 %3989
        %3991 = vrot.lane.b32.xlu0 %v1178, 104
        %v3992 = vpop.permute.xlu0 %3991
        %3993 = vrot.lane.b32.xlu0 %v1183, 104
        %v3994 = vpop.permute.xlu0 %3993
        %3995 = vrot.lane.b32.xlu0 %v1148, 72
        %v3996 = vpop.permute.xlu0 %3995
        %3997 = vrot.lane.b32.xlu0 %v1153, 72
        %v3998 = vpop.permute.xlu0 %3997
        %3999 = vrot.lane.b32.xlu0 %v1158, 72
        %v4000 = vpop.permute.xlu0 %3999
        %4001 = vrot.lane.b32.xlu0 %v1163, 72
        %v4002 = vpop.permute.xlu0 %4001
        %4003 = vrot.lane.b32.xlu0 %v1168, 72
        %v4004 = vpop.permute.xlu0 %4003
        %4005 = vrot.lane.b32.xlu0 %v1173, 72
        %v4006 = vpop.permute.xlu0 %4005
        %4007 = vrot.lane.b32.xlu0 %v1178, 72
        %v4008 = vpop.permute.xlu0 %4007
        %4009 = vrot.lane.b32.xlu0 %v1183, 72
        %v4010 = vpop.permute.xlu0 %4009
        %v4011 = vsel %vm1210, %v3980, 0
        %v4013 = vsel %vm1210, %v3982, 0
        %v4015 = vsel %vm1210, %v3984, 0
        %v4017 = vsel %vm1210, %v3986, 0
        %v4019 = vsel %vm1210, %v3988, 0
        %v4021 = vsel %vm1210, %v3990, 0
        %v4023 = vsel %vm1210, %v3992, 0
        %v4025 = vsel %vm1210, %v3994, 0
        %v4027 = vsel %vm1210, %v3996, 0
        %v4029 = vsel %vm1210, %v3998, 0
        %v4031 = vsel %vm1210, %v4000, 0
        %v4033 = vsel %vm1210, %v4002, 0
        %v4035 = vsel %vm1210, %v4004, 0
        %v4037 = vsel %vm1210, %v4006, 0
        %v4039 = vsel %vm1210, %v4008, 0
        %v4041 = vsel %vm1210, %v4010, 0
        %4043 = vmatprep.subr.mxu0 0.0
        %4044 = vmatpush1.xpose.msra.mxu0 %v4027
        %4045 = vmatprep.subr.mxu0 0.0
        %4046 = vmatpush1.xpose.msra.mxu0 %v4029
        %4047 = vmatprep.subr.mxu0 0.0
        %4048 = vmatpush1.xpose.msra.mxu0 %v4031
        %4049 = vmatprep.subr.mxu0 0.0
        %4050 = vmatpush1.xpose.msra.mxu0 %v4033
        %4051 = vmatprep.subr.mxu0 0.0
        %4052 = vmatpush1.xpose.msra.mxu0 %v4035
        %4053 = vmatprep.subr.mxu0 0.0
        %4054 = vmatpush1.xpose.msra.mxu0 %v4037
        %4055 = vmatprep.subr.mxu0 0.0
        %4056 = vmatpush1.xpose.msra.mxu0 %v4039
        %4057 = vmatprep.subr.mxu0 0.0
        %4058 = vmatpush1.xpose.msra.mxu0 %v4041
        %4059 = vmatprep.subr.mxu0 0.0
        %4060 = vmatpush1.xpose.msra.mxu0 0.0
        %4061 = vmatprep.subr.mxu0 0.0
        %4062 = vmatpush1.xpose.msra.mxu0 0.0
        %4063 = vmatprep.subr.mxu0 0.0
        %4064 = vmatpush1.xpose.msra.mxu0 0.0
        %4065 = vmatprep.subr.mxu0 0.0
        %4066 = vmatpush1.xpose.msra.mxu0 0.0
        %4067 = vmatprep.subr.mxu0 0.0
        %4068 = vmatpush1.xpose.msra.mxu0 0.0
        %4069 = vmatprep.subr.mxu0 0.0
        %4070 = vmatpush1.xpose.msra.mxu0 0.0
        %4071 = vmatprep.subr.mxu0 0.0
        %4072 = vmatpush1.xpose.msra.mxu0 0.0
        %4073 = vmatprep.subr.mxu0 0.0
        %4074 = vmatpush1.xpose.msra.mxu0 0.0
        %4075 = vmatprep.subr.mxu0 0.0
        %4076 = vmatpush1.xpose.msra.mxu0 0.0
        %4077 = vmatprep.subr.mxu0 0.0
        %4078 = vmatpush1.xpose.msra.mxu0 0.0
        %4079 = vmatprep.subr.mxu0 0.0
        %4080 = vmatpush1.xpose.msra.mxu0 0.0
        %4081 = vmatprep.subr.mxu0 0.0
        %4082 = vmatpush1.xpose.msra.mxu0 0.0
        %4083 = vmatprep.subr.mxu0 0.0
        %4084 = vmatpush1.xpose.msra.mxu0 0.0
        %4085 = vmatprep.subr.mxu0 0.0
        %4086 = vmatpush1.xpose.msra.mxu0 0.0
        %4087 = vmatprep.subr.mxu0 0.0
        %4088 = vmatpush1.xpose.msra.mxu0 0.0
        %4089 = vmatprep.subr.mxu0 0.0
        %4090 = vmatpush1.xpose.msra.mxu0 0.0
        %4091 = vmatprep.subr.mxu0 0.0
        %4092 = vmatpush1.xpose.msra.mxu0 0.0
        %4093 = vmatprep.subr.mxu0 0.0
        %4094 = vmatpush1.xpose.msra.mxu0 0.0
        %4095 = vmatprep.subr.mxu0 0.0
        %4096 = vmatpush1.xpose.msra.mxu0 0.0
        %4097 = vmatprep.subr.mxu0 0.0
        %4098 = vmatpush1.xpose.msra.mxu0 0.0
        %4099 = vmatprep.subr.mxu0 0.0
        %4100 = vmatpush1.xpose.msra.mxu0 0.0
        %4101 = vmatprep.subr.mxu0 0.0
        %4102 = vmatpush1.xpose.msra.mxu0 0.0
        %4103 = vmatprep.subr.mxu0 0.0
        %4104 = vmatpush1.xpose.msra.mxu0 0.0
        %4105 = vmatprep.subr.mxu0 0.0
        %4106 = vmatpush1.xpose.msra.mxu0 0.0
        %4107 = vmatprep.mubr.f32.mxu0 0.0
        %4108 = vmatmul.mubr.f32.gmra.mrb[0].mxu0 %v4011
        %v4109 = vpop.f32.mrb[0].mxu0
        %v4110 = vadd.f32 0.0, %v4109
        %v4111 = vpop.f32.mrb[0].mxu0
        %4112 = vmatprep.mubr.f32.mxu0 0.0
        %4113 = vmatmul.mubr.f32.gmra.mrb[0].mxu0 %v4013
        %v4114 = vpop.f32.mrb[0].mxu0
        %v4115 = vadd.f32 0.0, %v4114
        %v4116 = vpop.f32.mrb[0].mxu0
        %4117 = vmatprep.mubr.f32.mxu0 0.0
        %4118 = vmatmul.mubr.f32.gmra.mrb[0].mxu0 %v4015
        %v4119 = vpop.f32.mrb[0].mxu0
        %v4120 = vadd.f32 0.0, %v4119
        %v4121 = vpop.f32.mrb[0].mxu0
        %4122 = vmatprep.mubr.f32.mxu0 0.0
        %4123 = vmatmul.mubr.f32.gmra.mrb[0].mxu0 %v4017
        %v4124 = vpop.f32.mrb[0].mxu0
        %v4125 = vadd.f32 0.0, %v4124
        %v4126 = vpop.f32.mrb[0].mxu0
        %4127 = vmatprep.mubr.f32.mxu0 0.0
        %4128 = vmatmul.mubr.f32.gmra.mrb[0].mxu0 %v4019
        %v4129 = vpop.f32.mrb[0].mxu0
        %v4130 = vadd.f32 0.0, %v4129
        %v4131 = vpop.f32.mrb[0].mxu0
        %4132 = vmatprep.mubr.f32.mxu0 0.0
        %4133 = vmatmul.mubr.f32.gmra.mrb[0].mxu0 %v4021
        %v4134 = vpop.f32.mrb[0].mxu0
        %v4135 = vadd.f32 0.0, %v4134
        %v4136 = vpop.f32.mrb[0].mxu0
        %4137 = vmatprep.mubr.f32.mxu0 0.0
        %4138 = vmatmul.mubr.f32.gmra.mrb[0].mxu0 %v4023
        %v4139 = vpop.f32.mrb[0].mxu0
        %v4140 = vadd.f32 0.0, %v4139
        %v4141 = vpop.f32.mrb[0].mxu0
        %4142 = vmatprep.mubr.f32.mxu0 0.0
        %4143 = vmatmul.mubr.f32.gmra.mrb[0].mxu0 %v4025
        %v4144 = vpop.f32.mrb[0].mxu0
        %v4145 = vadd.f32 0.0, %v4144
        %v4146 = vpop.f32.mrb[0].mxu0
        %4147 = vdwg.mxu0
        %v4148 = vsel %vm1509, %v3941, -inf
        %4149 = vmax.xlane.f32.xlu0 %v4148
        %v4150 = vpop.xlane.xlu0 %4149
        %v4151 = vsel %vm1509, %v3946, -inf
        %4152 = vmax.xlane.f32.xlu0 %v4151
        %v4153 = vpop.xlane.xlu0 %4152
        %v4154 = vsel %vm1509, %v3951, -inf
        %4155 = vmax.xlane.f32.xlu0 %v4154
        %v4156 = vpop.xlane.xlu0 %4155
        %v4157 = vsel %vm1509, %v3956, -inf
        %4158 = vmax.xlane.f32.xlu0 %v4157
        %v4159 = vpop.xlane.xlu0 %4158
        %v4160 = vsel %vm1509, %v3961, -inf
        %4161 = vmax.xlane.f32.xlu0 %v4160
        %v4162 = vpop.xlane.xlu0 %4161
        %v4163 = vsel %vm1509, %v3966, -inf
        %4164 = vmax.xlane.f32.xlu0 %v4163
        %v4165 = vpop.xlane.xlu0 %4164
        %v4166 = vsel %vm1509, %v3971, -inf
        %4167 = vmax.xlane.f32.xlu0 %v4166
        %v4168 = vpop.xlane.xlu0 %4167
        %v4169 = vsel %vm1509, %v3976, -inf
        %4170 = vmax.xlane.f32.xlu0 %v4169
        %v4171 = vpop.xlane.xlu0 %4170
        %v4172 = vsel %vm1509, %v4110, -inf
        %4173 = vmax.xlane.f32.xlu0 %v4172
        %v4174 = vpop.xlane.xlu0 %4173
        %v4175 = vsel %vm1509, %v4115, -inf
        %4176 = vmax.xlane.f32.xlu0 %v4175
        %v4177 = vpop.xlane.xlu0 %4176
        %v4178 = vsel %vm1509, %v4120, -inf
        %4179 = vmax.xlane.f32.xlu0 %v4178
        %v4180 = vpop.xlane.xlu0 %4179
        %v4181 = vsel %vm1509, %v4125, -inf
        %4182 = vmax.xlane.f32.xlu0 %v4181
        %v4183 = vpop.xlane.xlu0 %4182
        %v4184 = vsel %vm1509, %v4130, -inf
        %4185 = vmax.xlane.f32.xlu0 %v4184
        %v4186 = vpop.xlane.xlu0 %4185
        %v4187 = vsel %vm1509, %v4135, -inf
        %4188 = vmax.xlane.f32.xlu0 %v4187
        %v4189 = vpop.xlane.xlu0 %4188
        %v4190 = vsel %vm1509, %v4140, -inf
        %4191 = vmax.xlane.f32.xlu0 %v4190
        %v4192 = vpop.xlane.xlu0 %4191
        %v4193 = vsel %vm1509, %v4145, -inf
        %4194 = vmax.xlane.f32.xlu0 %v4193
        %v4195 = vpop.xlane.xlu0 %4194
        %v4196 = vsub.f32 %v3941, %v4150
        %v4197 = vsub.f32 %v3946, %v4153
        %v4198 = vsub.f32 %v3951, %v4156
        %v4199 = vsub.f32 %v3956, %v4159
        %v4200 = vsub.f32 %v3961, %v4162
        %v4201 = vsub.f32 %v3966, %v4165
        %v4202 = vsub.f32 %v3971, %v4168
        %v4203 = vsub.f32 %v3976, %v4171
        %v4204 = vsub.f32 %v4110, %v4174
        %v4205 = vsub.f32 %v4115, %v4177
        %v4206 = vsub.f32 %v4120, %v4180
        %v4207 = vsub.f32 %v4125, %v4183
        %v4208 = vsub.f32 %v4130, %v4186
        %v4209 = vsub.f32 %v4135, %v4189
        %v4210 = vsub.f32 %v4140, %v4192
        %v4211 = vsub.f32 %v4145, %v4195
        %v4212 = vmul.f32 %v4196, 1.442695
        %v4213 = vpow.pop %v4212
        %v4214 = vmul.f32 %v4197, 1.442695
        %v4215 = vpow.pop %v4214
        %v4216 = vmul.f32 %v4198, 1.442695
        %v4217 = vpow.pop %v4216
        %v4218 = vmul.f32 %v4199, 1.442695
        %v4219 = vpow.pop %v4218
        %v4220 = vmul.f32 %v4200, 1.442695
        %v4221 = vpow.pop %v4220
        %v4222 = vmul.f32 %v4201, 1.442695
        %v4223 = vpow.pop %v4222
        %v4224 = vmul.f32 %v4202, 1.442695
        %v4225 = vpow.pop %v4224
        %v4226 = vmul.f32 %v4203, 1.442695
        %v4227 = vpow.pop %v4226
        %v4228 = vmul.f32 %v4204, 1.442695
        %v4229 = vpow.pop %v4228
        %v4230 = vmul.f32 %v4205, 1.442695
        %v4231 = vpow.pop %v4230
        %v4232 = vmul.f32 %v4206, 1.442695
        %v4233 = vpow.pop %v4232
        %v4234 = vmul.f32 %v4207, 1.442695
        %v4235 = vpow.pop %v4234
        %v4236 = vmul.f32 %v4208, 1.442695
        %v4237 = vpow.pop %v4236
        %v4238 = vmul.f32 %v4209, 1.442695
        %v4239 = vpow.pop %v4238
        %v4240 = vmul.f32 %v4210, 1.442695
        %v4241 = vpow.pop %v4240
        %v4242 = vmul.f32 %v4211, 1.442695
        %v4243 = vpow.pop %v4242
        %v4244 = vsel %vm1509, %v4213, 0.0
        %4245 = vadd.xlane.f32.xlu0 %v4244
        %v4246 = vpop.xlane.xlu0 %4245
        %v4247 = vsel %vm1509, %v4215, 0.0
        %4248 = vadd.xlane.f32.xlu0 %v4247
        %v4249 = vpop.xlane.xlu0 %4248
        %v4250 = vsel %vm1509, %v4217, 0.0
        %4251 = vadd.xlane.f32.xlu0 %v4250
        %v4252 = vpop.xlane.xlu0 %4251
        %v4253 = vsel %vm1509, %v4219, 0.0
        %4254 = vadd.xlane.f32.xlu0 %v4253
        %v4255 = vpop.xlane.xlu0 %4254
        %v4256 = vsel %vm1509, %v4221, 0.0
        %4257 = vadd.xlane.f32.xlu0 %v4256
        %v4258 = vpop.xlane.xlu0 %4257
        %v4259 = vsel %vm1509, %v4223, 0.0
        %4260 = vadd.xlane.f32.xlu0 %v4259
        %v4261 = vpop.xlane.xlu0 %4260
        %v4262 = vsel %vm1509, %v4225, 0.0
        %4263 = vadd.xlane.f32.xlu0 %v4262
        %v4264 = vpop.xlane.xlu0 %4263
        %v4265 = vsel %vm1509, %v4227, 0.0
        %4266 = vadd.xlane.f32.xlu0 %v4265
        %v4267 = vpop.xlane.xlu0 %4266
        %v4268 = vsel %vm1509, %v4229, 0.0
        %4269 = vadd.xlane.f32.xlu0 %v4268
        %v4270 = vpop.xlane.xlu0 %4269
        %v4271 = vsel %vm1509, %v4231, 0.0
        %4272 = vadd.xlane.f32.xlu0 %v4271
        %v4273 = vpop.xlane.xlu0 %4272
        %v4274 = vsel %vm1509, %v4233, 0.0
        %4275 = vadd.xlane.f32.xlu0 %v4274
        %v4276 = vpop.xlane.xlu0 %4275
        %v4277 = vsel %vm1509, %v4235, 0.0
        %4278 = vadd.xlane.f32.xlu0 %v4277
        %v4279 = vpop.xlane.xlu0 %4278
        %v4280 = vsel %vm1509, %v4237, 0.0
        %4281 = vadd.xlane.f32.xlu0 %v4280
        %v4282 = vpop.xlane.xlu0 %4281
        %v4283 = vsel %vm1509, %v4239, 0.0
        %4284 = vadd.xlane.f32.xlu0 %v4283
        %v4285 = vpop.xlane.xlu0 %4284
        %v4286 = vsel %vm1509, %v4241, 0.0
        %4287 = vadd.xlane.f32.xlu0 %v4286
        %v4288 = vpop.xlane.xlu0 %4287
        %v4289 = vsel %vm1509, %v4243, 0.0
        %4290 = vadd.xlane.f32.xlu0 %v4289
        %v4291 = vpop.xlane.xlu0 %4290
        %v4292 = vrcp.pop %v4246
        %v4293 = vrcp.pop %v4249
        %v4294 = vrcp.pop %v4252
        %v4295 = vrcp.pop %v4255
        %v4296 = vrcp.pop %v4258
        %v4297 = vrcp.pop %v4261
        %v4298 = vrcp.pop %v4264
        %v4299 = vrcp.pop %v4267
        %v4300 = vrcp.pop %v4270
        %v4301 = vrcp.pop %v4273
        %v4302 = vrcp.pop %v4276
        %v4303 = vrcp.pop %v4279
        %v4304 = vrcp.pop %v4282
        %v4305 = vrcp.pop %v4285
        %v4306 = vrcp.pop %v4288
        %v4307 = vrcp.pop %v4291
        %v4308 = vmul.f32 %v4213, %v4292
        %v4309 = vmul.f32 %v4215, %v4293
        %v4310 = vmul.f32 %v4217, %v4294
        %v4311 = vmul.f32 %v4219, %v4295
        %v4312 = vmul.f32 %v4221, %v4296
        %v4313 = vmul.f32 %v4223, %v4297
        %v4314 = vmul.f32 %v4225, %v4298
        %v4315 = vmul.f32 %v4227, %v4299
        %v4316 = vmul.f32 %v4229, %v4300
        %v4317 = vmul.f32 %v4231, %v4301
        %v4318 = vmul.f32 %v4233, %v4302
        %v4319 = vmul.f32 %v4235, %v4303
        %v4320 = vmul.f32 %v4237, %v4304
        %v4321 = vmul.f32 %v4239, %v4305
        %v4322 = vmul.f32 %v4241, %v4306
        %v4323 = vmul.f32 %v4243, %v4307
        %4324 = vrot.lane.b32.xlu0 %v1108, 40
        %v4325 = vpop.permute.xlu0 %4324
        %4326 = vrot.lane.b32.xlu0 %v1113, 40
        %v4327 = vpop.permute.xlu0 %4326
        %4328 = vrot.lane.b32.xlu0 %v1118, 40
        %v4329 = vpop.permute.xlu0 %4328
        %4330 = vrot.lane.b32.xlu0 %v1123, 40
        %v4331 = vpop.permute.xlu0 %4330
        %4332 = vrot.lane.b32.xlu0 %v1128, 40
        %v4333 = vpop.permute.xlu0 %4332
        %4334 = vrot.lane.b32.xlu0 %v1133, 40
        %v4335 = vpop.permute.xlu0 %4334
        %4336 = vrot.lane.b32.xlu0 %v1138, 40
        %v4337 = vpop.permute.xlu0 %4336
        %4338 = vrot.lane.b32.xlu0 %v1143, 40
        %v4339 = vpop.permute.xlu0 %4338
        %v4349 = vsel %vm1509, %v4308, 0
        %v4352 = vsel %vm1509, %v4309, 0
        %v4355 = vsel %vm1509, %v4310, 0
        %v4358 = vsel %vm1509, %v4311, 0
        %v4361 = vsel %vm1509, %v4312, 0
        %v4364 = vsel %vm1509, %v4313, 0
        %v4367 = vsel %vm1509, %v4314, 0
        %v4370 = vsel %vm1509, %v4315, 0
        %4372 = vmatprep.subr.mxu0 0.0
        %4373 = vmatpush1.msra.mxu0 %v4325
        %4374 = vmatprep.subr.mxu0 0.0
        %4375 = vmatpush1.msra.mxu0 %v4327
        %4376 = vmatprep.subr.mxu0 0.0
        %4377 = vmatpush1.msra.mxu0 %v4329
        %4378 = vmatprep.subr.mxu0 0.0
        %4379 = vmatpush1.msra.mxu0 %v4331
        %4380 = vmatprep.subr.mxu0 0.0
        %4381 = vmatpush1.msra.mxu0 %v4333
        %4382 = vmatprep.subr.mxu0 0.0
        %4383 = vmatpush1.msra.mxu0 %v4335
        %4384 = vmatprep.subr.mxu0 0.0
        %4385 = vmatpush1.msra.mxu0 %v4337
        %4386 = vmatprep.subr.mxu0 0.0
        %4387 = vmatpush1.msra.mxu0 %v4339
        %4388 = vmatprep.subr.mxu0 0.0
        %4389 = vmatpush1.msra.mxu0 0.0
        %4390 = vmatprep.subr.mxu0 0.0
        %4391 = vmatpush1.msra.mxu0 0.0
        %4392 = vmatprep.subr.mxu0 0.0
        %4393 = vmatpush1.msra.mxu0 0.0
        %4394 = vmatprep.subr.mxu0 0.0
        %4395 = vmatpush1.msra.mxu0 0.0
        %4396 = vmatprep.subr.mxu0 0.0
        %4397 = vmatpush1.msra.mxu0 0.0
        %4398 = vmatprep.subr.mxu0 0.0
        %4399 = vmatpush1.msra.mxu0 0.0
        %4400 = vmatprep.subr.mxu0 0.0
        %4401 = vmatpush1.msra.mxu0 0.0
        %4402 = vmatprep.subr.mxu0 0.0
        %4403 = vmatpush1.msra.mxu0 0.0
        %4404 = vmatprep.subr.mxu0 0.0
        %4405 = vmatpush1.msra.mxu0 0.0
        %4406 = vmatprep.subr.mxu0 0.0
        %4407 = vmatpush1.msra.mxu0 0.0
        %4408 = vmatprep.subr.mxu0 0.0
        %4409 = vmatpush1.msra.mxu0 0.0
        %4410 = vmatprep.subr.mxu0 0.0
        %4411 = vmatpush1.msra.mxu0 0.0
        %4412 = vmatprep.subr.mxu0 0.0
        %4413 = vmatpush1.msra.mxu0 0.0
        %4414 = vmatprep.subr.mxu0 0.0
        %4415 = vmatpush1.msra.mxu0 0.0
        %4416 = vmatprep.subr.mxu0 0.0
        %4417 = vmatpush1.msra.mxu0 0.0
        %4418 = vmatprep.subr.mxu0 0.0
        %4419 = vmatpush1.msra.mxu0 0.0
        %4420 = vmatprep.subr.mxu0 0.0
        %4421 = vmatpush1.msra.mxu0 0.0
        %4422 = vmatprep.subr.mxu0 0.0
        %4423 = vmatpush1.msra.mxu0 0.0
        %4424 = vmatprep.subr.mxu0 0.0
        %4425 = vmatpush1.msra.mxu0 0.0
        %4426 = vmatprep.subr.mxu0 0.0
        %4427 = vmatpush1.msra.mxu0 0.0
        %4428 = vmatprep.subr.mxu0 0.0
        %4429 = vmatpush1.msra.mxu0 0.0
        %4430 = vmatprep.subr.mxu0 0.0
        %4431 = vmatpush1.msra.mxu0 0.0
        %4432 = vmatprep.subr.mxu0 0.0
        %4433 = vmatpush1.msra.mxu0 0.0
        %4434 = vmatprep.subr.mxu0 0.0
        %4435 = vmatpush1.msra.mxu0 0.0
        %4436 = vmatprep.mubr.f32.mxu0 0.0
        %4437 = vmatmul.mubr.f32.gmra.mrb[0].mxu0 %v4349
        %v4438 = vpop.f32.mrb[0].mxu0
        %v4439 = vadd.f32 0.0, %v4438
        %v4440 = vpop.f32.mrb[0].mxu0
        %4441 = vmatprep.mubr.f32.mxu0 0.0
        %4442 = vmatmul.mubr.f32.gmra.mrb[0].mxu0 %v4352
        %v4443 = vpop.f32.mrb[0].mxu0
        %v4444 = vadd.f32 0.0, %v4443
        %v4445 = vpop.f32.mrb[0].mxu0
        %4446 = vmatprep.mubr.f32.mxu0 0.0
        %4447 = vmatmul.mubr.f32.gmra.mrb[0].mxu0 %v4355
        %v4448 = vpop.f32.mrb[0].mxu0
        %v4449 = vadd.f32 0.0, %v4448
        %v4450 = vpop.f32.mrb[0].mxu0
        %4451 = vmatprep.mubr.f32.mxu0 0.0
        %4452 = vmatmul.mubr.f32.gmra.mrb[0].mxu0 %v4358
        %v4453 = vpop.f32.mrb[0].mxu0
        %v4454 = vadd.f32 0.0, %v4453
        %v4455 = vpop.f32.mrb[0].mxu0
        %4456 = vmatprep.mubr.f32.mxu0 0.0
        %4457 = vmatmul.mubr.f32.gmra.mrb[0].mxu0 %v4361
        %v4458 = vpop.f32.mrb[0].mxu0
        %v4459 = vadd.f32 0.0, %v4458
        %v4460 = vpop.f32.mrb[0].mxu0
        %4461 = vmatprep.mubr.f32.mxu0 0.0
        %4462 = vmatmul.mubr.f32.gmra.mrb[0].mxu0 %v4364
        %v4463 = vpop.f32.mrb[0].mxu0
        %v4464 = vadd.f32 0.0, %v4463
        %v4465 = vpop.f32.mrb[0].mxu0
        %4466 = vmatprep.mubr.f32.mxu0 0.0
        %4467 = vmatmul.mubr.f32.gmra.mrb[0].mxu0 %v4367
        %v4468 = vpop.f32.mrb[0].mxu0
        %v4469 = vadd.f32 0.0, %v4468
        %v4470 = vpop.f32.mrb[0].mxu0
        %4471 = vmatprep.mubr.f32.mxu0 0.0
        %4472 = vmatmul.mubr.f32.gmra.mrb[0].mxu0 %v4370
        %v4473 = vpop.f32.mrb[0].mxu0
        %v4474 = vadd.f32 0.0, %v4473
        %v4475 = vpop.f32.mrb[0].mxu0
        %4476 = vdwg.mxu0
        %4477 = vrot.lane.b32.xlu0 %v1148, 40
        %v4478 = vpop.permute.xlu0 %4477
        %4479 = vrot.lane.b32.xlu0 %v1153, 40
        %v4480 = vpop.permute.xlu0 %4479
        %4481 = vrot.lane.b32.xlu0 %v1158, 40
        %v4482 = vpop.permute.xlu0 %4481
        %4483 = vrot.lane.b32.xlu0 %v1163, 40
        %v4484 = vpop.permute.xlu0 %4483
        %4485 = vrot.lane.b32.xlu0 %v1168, 40
        %v4486 = vpop.permute.xlu0 %4485
        %4487 = vrot.lane.b32.xlu0 %v1173, 40
        %v4488 = vpop.permute.xlu0 %4487
        %4489 = vrot.lane.b32.xlu0 %v1178, 40
        %v4490 = vpop.permute.xlu0 %4489
        %4491 = vrot.lane.b32.xlu0 %v1183, 40
        %v4492 = vpop.permute.xlu0 %4491
        %v4502 = vsel %vm1509, %v4316, 0
        %v4505 = vsel %vm1509, %v4317, 0
        %v4508 = vsel %vm1509, %v4318, 0
        %v4511 = vsel %vm1509, %v4319, 0
        %v4514 = vsel %vm1509, %v4320, 0
        %v4517 = vsel %vm1509, %v4321, 0
        %v4520 = vsel %vm1509, %v4322, 0
        %v4523 = vsel %vm1509, %v4323, 0
        %4525 = vmatprep.subr.mxu0 0.0
        %4526 = vmatpush1.msra.mxu0 %v4478
        %4527 = vmatprep.subr.mxu0 0.0
        %4528 = vmatpush1.msra.mxu0 %v4480
        %4529 = vmatprep.subr.mxu0 0.0
        %4530 = vmatpush1.msra.mxu0 %v4482
        %4531 = vmatprep.subr.mxu0 0.0
        %4532 = vmatpush1.msra.mxu0 %v4484
        %4533 = vmatprep.subr.mxu0 0.0
        %4534 = vmatpush1.msra.mxu0 %v4486
        %4535 = vmatprep.subr.mxu0 0.0
        %4536 = vmatpush1.msra.mxu0 %v4488
        %4537 = vmatprep.subr.mxu0 0.0
        %4538 = vmatpush1.msra.mxu0 %v4490
        %4539 = vmatprep.subr.mxu0 0.0
        %4540 = vmatpush1.msra.mxu0 %v4492
        %4541 = vmatprep.subr.mxu0 0.0
        %4542 = vmatpush1.msra.mxu0 0.0
        %4543 = vmatprep.subr.mxu0 0.0
        %4544 = vmatpush1.msra.mxu0 0.0
        %4545 = vmatprep.subr.mxu0 0.0
        %4546 = vmatpush1.msra.mxu0 0.0
        %4547 = vmatprep.subr.mxu0 0.0
        %4548 = vmatpush1.msra.mxu0 0.0
        %4549 = vmatprep.subr.mxu0 0.0
        %4550 = vmatpush1.msra.mxu0 0.0
        %4551 = vmatprep.subr.mxu0 0.0
        %4552 = vmatpush1.msra.mxu0 0.0
        %4553 = vmatprep.subr.mxu0 0.0
        %4554 = vmatpush1.msra.mxu0 0.0
        %4555 = vmatprep.subr.mxu0 0.0
        %4556 = vmatpush1.msra.mxu0 0.0
        %4557 = vmatprep.subr.mxu0 0.0
        %4558 = vmatpush1.msra.mxu0 0.0
        %4559 = vmatprep.subr.mxu0 0.0
        %4560 = vmatpush1.msra.mxu0 0.0
        %4561 = vmatprep.subr.mxu0 0.0
        %4562 = vmatpush1.msra.mxu0 0.0
        %4563 = vmatprep.subr.mxu0 0.0
        %4564 = vmatpush1.msra.mxu0 0.0
        %4565 = vmatprep.subr.mxu0 0.0
        %4566 = vmatpush1.msra.mxu0 0.0
        %4567 = vmatprep.subr.mxu0 0.0
        %4568 = vmatpush1.msra.mxu0 0.0
        %4569 = vmatprep.subr.mxu0 0.0
        %4570 = vmatpush1.msra.mxu0 0.0
        %4571 = vmatprep.subr.mxu0 0.0
        %4572 = vmatpush1.msra.mxu0 0.0
        %4573 = vmatprep.subr.mxu0 0.0
        %4574 = vmatpush1.msra.mxu0 0.0
        %4575 = vmatprep.subr.mxu0 0.0
        %4576 = vmatpush1.msra.mxu0 0.0
        %4577 = vmatprep.subr.mxu0 0.0
        %4578 = vmatpush1.msra.mxu0 0.0
        %4579 = vmatprep.subr.mxu0 0.0
        %4580 = vmatpush1.msra.mxu0 0.0
        %4581 = vmatprep.subr.mxu0 0.0
        %4582 = vmatpush1.msra.mxu0 0.0
        %4583 = vmatprep.subr.mxu0 0.0
        %4584 = vmatpush1.msra.mxu0 0.0
        %4585 = vmatprep.subr.mxu0 0.0
        %4586 = vmatpush1.msra.mxu0 0.0
        %4587 = vmatprep.subr.mxu0 0.0
        %4588 = vmatpush1.msra.mxu0 0.0
        %4589 = vmatprep.mubr.f32.mxu0 0.0
        %4590 = vmatmul.mubr.f32.gmra.mrb[0].mxu0 %v4502
        %v4591 = vpop.f32.mrb[0].mxu0
        %v4592 = vadd.f32 0.0, %v4591
        %v4593 = vpop.f32.mrb[0].mxu0
        %4594 = vmatprep.mubr.f32.mxu0 0.0
        %4595 = vmatmul.mubr.f32.gmra.mrb[0].mxu0 %v4505
        %v4596 = vpop.f32.mrb[0].mxu0
        %v4597 = vadd.f32 0.0, %v4596
        %v4598 = vpop.f32.mrb[0].mxu0
        %4599 = vmatprep.mubr.f32.mxu0 0.0
        %4600 = vmatmul.mubr.f32.gmra.mrb[0].mxu0 %v4508
        %v4601 = vpop.f32.mrb[0].mxu0
        %v4602 = vadd.f32 0.0, %v4601
        %v4603 = vpop.f32.mrb[0].mxu0
        %4604 = vmatprep.mubr.f32.mxu0 0.0
        %4605 = vmatmul.mubr.f32.gmra.mrb[0].mxu0 %v4511
        %v4606 = vpop.f32.mrb[0].mxu0
        %v4607 = vadd.f32 0.0, %v4606
        %v4608 = vpop.f32.mrb[0].mxu0
        %4609 = vmatprep.mubr.f32.mxu0 0.0
        %4610 = vmatmul.mubr.f32.gmra.mrb[0].mxu0 %v4514
        %v4611 = vpop.f32.mrb[0].mxu0
        %v4612 = vadd.f32 0.0, %v4611
        %v4613 = vpop.f32.mrb[0].mxu0
        %4614 = vmatprep.mubr.f32.mxu0 0.0
        %4615 = vmatmul.mubr.f32.gmra.mrb[0].mxu0 %v4517
        %v4616 = vpop.f32.mrb[0].mxu0
        %v4617 = vadd.f32 0.0, %v4616
        %v4618 = vpop.f32.mrb[0].mxu0
        %4619 = vmatprep.mubr.f32.mxu0 0.0
        %4620 = vmatmul.mubr.f32.gmra.mrb[0].mxu0 %v4520
        %v4621 = vpop.f32.mrb[0].mxu0
        %v4622 = vadd.f32 0.0, %v4621
        %v4623 = vpop.f32.mrb[0].mxu0
        %4624 = vmatprep.mubr.f32.mxu0 0.0
        %4625 = vmatmul.mubr.f32.gmra.mrb[0].mxu0 %v4523
        %v4626 = vpop.f32.mrb[0].mxu0
        %v4627 = vadd.f32 0.0, %v4626
        %v4628 = vpop.f32.mrb[0].mxu0
        %4629 = vdwg.mxu0
        %4646 = vrot.lane.b32.xlu0 %v4439, 24
        %v4647 = vpop.permute.xlu0 %4646
        %4648 = vrot.lane.b32.xlu0 %v4444, 24
        %v4649 = vpop.permute.xlu0 %4648
        %4650 = vrot.lane.b32.xlu0 %v4449, 24
        %v4651 = vpop.permute.xlu0 %4650
        %4652 = vrot.lane.b32.xlu0 %v4454, 24
        %v4653 = vpop.permute.xlu0 %4652
        %4654 = vrot.lane.b32.xlu0 %v4459, 24
        %v4655 = vpop.permute.xlu0 %4654
        %4656 = vrot.lane.b32.xlu0 %v4464, 24
        %v4657 = vpop.permute.xlu0 %4656
        %4658 = vrot.lane.b32.xlu0 %v4469, 24
        %v4659 = vpop.permute.xlu0 %4658
        %4660 = vrot.lane.b32.xlu0 %v4474, 24
        %v4661 = vpop.permute.xlu0 %4660
        %4662 = vrot.lane.b32.xlu0 %v4592, 24
        %v4663 = vpop.permute.xlu0 %4662
        %4664 = vrot.lane.b32.xlu0 %v4597, 24
        %v4665 = vpop.permute.xlu0 %4664
        %4666 = vrot.lane.b32.xlu0 %v4602, 24
        %v4667 = vpop.permute.xlu0 %4666
        %4668 = vrot.lane.b32.xlu0 %v4607, 24
        %v4669 = vpop.permute.xlu0 %4668
        %4670 = vrot.lane.b32.xlu0 %v4612, 24
        %v4671 = vpop.permute.xlu0 %4670
        %4672 = vrot.lane.b32.xlu0 %v4617, 24
        %v4673 = vpop.permute.xlu0 %4672
        %4674 = vrot.lane.b32.xlu0 %v4622, 24
        %v4675 = vpop.permute.xlu0 %4674
        %4676 = vrot.lane.b32.xlu0 %v4627, 24
        %v4677 = vpop.permute.xlu0 %4676
        %vm4694 = vcmask 261312
        %4695 = vst.msk [vmem:[#allocation2] sm:$0xff] %vm4694, %v4647
        %4696 = vst.msk [vmem:[#allocation2 + $0x8] sm:$0xff] %vm4694, %v4649
        %4697 = vst.msk [vmem:[#allocation2 + $0x10] sm:$0xff] %vm4694, %v4651
        %4698 = vst.msk [vmem:[#allocation2 + $0x18] sm:$0xff] %vm4694, %v4653
        %4699 = vst.msk [vmem:[#allocation2 + $0x20] sm:$0xff] %vm4694, %v4655
        %4700 = vst.msk [vmem:[#allocation2 + $0x28] sm:$0xff] %vm4694, %v4657
        %4701 = vst.msk [vmem:[#allocation2 + $0x30] sm:$0xff] %vm4694, %v4659
        %4702 = vst.msk [vmem:[#allocation2 + $0x38] sm:$0xff] %vm4694, %v4661
        %4703 = vst.msk [vmem:[#allocation2 + $0x40] sm:$0xff] %vm4694, %v4663
        %4704 = vst.msk [vmem:[#allocation2 + $0x48] sm:$0xff] %vm4694, %v4665
        %4705 = vst.msk [vmem:[#allocation2 + $0x50] sm:$0xff] %vm4694, %v4667
        %4706 = vst.msk [vmem:[#allocation2 + $0x58] sm:$0xff] %vm4694, %v4669
        %4707 = vst.msk [vmem:[#allocation2 + $0x60] sm:$0xff] %vm4694, %v4671
        %4708 = vst.msk [vmem:[#allocation2 + $0x68] sm:$0xff] %vm4694, %v4673
        %4709 = vst.msk [vmem:[#allocation2 + $0x70] sm:$0xff] %vm4694, %v4675
        %4710 = vst.msk [vmem:[#allocation2 + $0x78] sm:$0xff] %vm4694, %v4677
        %v4711 = vld [vmem:[#allocation2] sm:$0xff]
        %v4712 = vld [vmem:[#allocation2 + $0x8] sm:$0xff]
        %v4713 = vld [vmem:[#allocation2 + $0x10] sm:$0xff]
        %v4714 = vld [vmem:[#allocation2 + $0x18] sm:$0xff]
        %v4715 = vld [vmem:[#allocation2 + $0x20] sm:$0xff]
        %v4716 = vld [vmem:[#allocation2 + $0x28] sm:$0xff]
        %v4717 = vld [vmem:[#allocation2 + $0x30] sm:$0xff]
        %v4718 = vld [vmem:[#allocation2 + $0x38] sm:$0xff]
        %v4719 = vld [vmem:[#allocation2 + $0x40] sm:$0xff]
        %v4720 = vld [vmem:[#allocation2 + $0x48] sm:$0xff]
        %v4721 = vld [vmem:[#allocation2 + $0x50] sm:$0xff]
        %v4722 = vld [vmem:[#allocation2 + $0x58] sm:$0xff]
        %v4723 = vld [vmem:[#allocation2 + $0x60] sm:$0xff]
        %v4724 = vld [vmem:[#allocation2 + $0x68] sm:$0xff]
        %v4725 = vld [vmem:[#allocation2 + $0x70] sm:$0xff]
        %v4726 = vld [vmem:[#allocation2 + $0x78] sm:$0xff]
        %v4727 = vld [vmem:[#allocation14] sm:$0xff]
        %v4728 = vld [vmem:[#allocation14 + $0x8] sm:$0xff]
        %v4729 = vld [vmem:[#allocation14 + $0x10] sm:$0xff]
        %v4730 = vld [vmem:[#allocation14 + $0x18] sm:$0xff]
        %v4732 = vlaneseq
        %v4733 = vshrl.u32 %v4732, 7
        %v4734 = vsub.s32 0, %v4733
        %v4735 = vrot.slane %v694, %v4734
        %v4738 = vsel %vm729, %v4711, 0
        %v4741 = vsel %vm729, %v4712, 0
        %v4744 = vsel %vm729, %v4713, 0
        %v4747 = vsel %vm729, %v4714, 0
        %v4750 = vsel %vm729, %v4715, 0
        %v4753 = vsel %vm729, %v4716, 0
        %v4756 = vsel %vm729, %v4717, 0
        %v4759 = vsel %vm729, %v4718, 0
        %v4762 = vsel %vm729, %v4719, 0
        %v4765 = vsel %vm729, %v4720, 0
        %v4768 = vsel %vm729, %v4721, 0
        %v4771 = vsel %vm729, %v4722, 0
        %v4774 = vsel %vm729, %v4723, 0
        %v4777 = vsel %vm729, %v4724, 0
        %v4780 = vsel %vm729, %v4725, 0
        %v4783 = vsel %vm729, %v4726, 0
        %4785 = vmatprep.subr.mxu0 0.0
        %4786 = vmatpush1.msra.mxu0 %v4727
        %4787 = vmatprep.subr.mxu0 0.0
        %4788 = vmatpush1.msra.mxu0 %v4728
        %4789 = vmatprep.subr.mxu0 0.0
        %4790 = vmatpush1.msra.mxu0 %v4729
        %4791 = vmatprep.subr.mxu0 0.0
        %4792 = vmatpush1.msra.mxu0 %v4730
        %4793 = vmatprep.subr.mxu0 0.0
        %4794 = vmatpush1.msra.mxu0 0.0
        %4795 = vmatprep.subr.mxu0 0.0
        %4796 = vmatpush1.msra.mxu0 0.0
        %4797 = vmatprep.subr.mxu0 0.0
        %4798 = vmatpush1.msra.mxu0 0.0
        %4799 = vmatprep.subr.mxu0 0.0
        %4800 = vmatpush1.msra.mxu0 0.0
        %4801 = vmatprep.subr.mxu0 0.0
        %4802 = vmatpush1.msra.mxu0 0.0
        %4803 = vmatprep.subr.mxu0 0.0
        %4804 = vmatpush1.msra.mxu0 0.0
        %4805 = vmatprep.subr.mxu0 0.0
        %4806 = vmatpush1.msra.mxu0 0.0
        %4807 = vmatprep.subr.mxu0 0.0
        %4808 = vmatpush1.msra.mxu0 0.0
        %4809 = vmatprep.subr.mxu0 0.0
        %4810 = vmatpush1.msra.mxu0 0.0
        %4811 = vmatprep.subr.mxu0 0.0
        %4812 = vmatpush1.msra.mxu0 0.0
        %4813 = vmatprep.subr.mxu0 0.0
        %4814 = vmatpush1.msra.mxu0 0.0
        %4815 = vmatprep.subr.mxu0 0.0
        %4816 = vmatpush1.msra.mxu0 0.0
        %4817 = vmatprep.subr.mxu0 0.0
        %4818 = vmatpush1.msra.mxu0 0.0
        %4819 = vmatprep.subr.mxu0 0.0
        %4820 = vmatpush1.msra.mxu0 0.0
        %4821 = vmatprep.subr.mxu0 0.0
        %4822 = vmatpush1.msra.mxu0 0.0
        %4823 = vmatprep.subr.mxu0 0.0
        %4824 = vmatpush1.msra.mxu0 0.0
        %4825 = vmatprep.subr.mxu0 0.0
        %4826 = vmatpush1.msra.mxu0 0.0
        %4827 = vmatprep.subr.mxu0 0.0
        %4828 = vmatpush1.msra.mxu0 0.0
        %4829 = vmatprep.subr.mxu0 0.0
        %4830 = vmatpush1.msra.mxu0 0.0
        %4831 = vmatprep.subr.mxu0 0.0
        %4832 = vmatpush1.msra.mxu0 0.0
        %4833 = vmatprep.subr.mxu0 0.0
        %4834 = vmatpush1.msra.mxu0 0.0
        %4835 = vmatprep.subr.mxu0 0.0
        %4836 = vmatpush1.msra.mxu0 0.0
        %4837 = vmatprep.subr.mxu0 0.0
        %4838 = vmatpush1.msra.mxu0 0.0
        %4839 = vmatprep.subr.mxu0 0.0
        %4840 = vmatpush1.msra.mxu0 0.0
        %4841 = vmatprep.subr.mxu0 0.0
        %4842 = vmatpush1.msra.mxu0 0.0
        %4843 = vmatprep.subr.mxu0 0.0
        %4844 = vmatpush1.msra.mxu0 0.0
        %4845 = vmatprep.subr.mxu0 0.0
        %4846 = vmatpush1.msra.mxu0 0.0
        %4847 = vmatprep.subr.mxu0 0.0
        %4848 = vmatpush1.msra.mxu0 0.0
        %4849 = vmatprep.mubr.f32.mxu0 0.0
        %4850 = vmatmul.mubr.f32.gmra.mrb[0].mxu0 %v4738
        %v4851 = vpop.f32.mrb[0].mxu0
        %v4852 = vadd.f32 %v4735, %v4851
        %v4853 = vpop.f32.mrb[0].mxu0
        %4854 = vmatprep.mubr.f32.mxu0 0.0
        %4855 = vmatmul.mubr.f32.gmra.mrb[0].mxu0 %v4741
        %v4856 = vpop.f32.mrb[0].mxu0
        %v4857 = vadd.f32 %v4735, %v4856
        %v4858 = vpop.f32.mrb[0].mxu0
        %4859 = vmatprep.mubr.f32.mxu0 0.0
        %4860 = vmatmul.mubr.f32.gmra.mrb[0].mxu0 %v4744
        %v4861 = vpop.f32.mrb[0].mxu0
        %v4862 = vadd.f32 %v4735, %v4861
        %v4863 = vpop.f32.mrb[0].mxu0
        %4864 = vmatprep.mubr.f32.mxu0 0.0
        %4865 = vmatmul.mubr.f32.gmra.mrb[0].mxu0 %v4747
        %v4866 = vpop.f32.mrb[0].mxu0
        %v4867 = vadd.f32 %v4735, %v4866
        %v4868 = vpop.f32.mrb[0].mxu0
        %4869 = vmatprep.mubr.f32.mxu0 0.0
        %4870 = vmatmul.mubr.f32.gmra.mrb[0].mxu0 %v4750
        %v4871 = vpop.f32.mrb[0].mxu0
        %v4872 = vadd.f32 %v4735, %v4871
        %v4873 = vpop.f32.mrb[0].mxu0
        %4874 = vmatprep.mubr.f32.mxu0 0.0
        %4875 = vmatmul.mubr.f32.gmra.mrb[0].mxu0 %v4753
        %v4876 = vpop.f32.mrb[0].mxu0
        %v4877 = vadd.f32 %v4735, %v4876
        %v4878 = vpop.f32.mrb[0].mxu0
        %4879 = vmatprep.mubr.f32.mxu0 0.0
        %4880 = vmatmul.mubr.f32.gmra.mrb[0].mxu0 %v4756
        %v4881 = vpop.f32.mrb[0].mxu0
        %v4882 = vadd.f32 %v4735, %v4881
        %v4883 = vpop.f32.mrb[0].mxu0
        %4884 = vmatprep.mubr.f32.mxu0 0.0
        %4885 = vmatmul.mubr.f32.gmra.mrb[0].mxu0 %v4759
        %v4886 = vpop.f32.mrb[0].mxu0
        %v4887 = vadd.f32 %v4735, %v4886
        %v4888 = vpop.f32.mrb[0].mxu0
        %4889 = vmatprep.mubr.f32.mxu0 0.0
        %4890 = vmatmul.mubr.f32.gmra.mrb[0].mxu0 %v4762
        %v4891 = vpop.f32.mrb[0].mxu0
        %v4892 = vadd.f32 %v4735, %v4891
        %v4893 = vpop.f32.mrb[0].mxu0
        %4894 = vmatprep.mubr.f32.mxu0 0.0
        %4895 = vmatmul.mubr.f32.gmra.mrb[0].mxu0 %v4765
        %v4896 = vpop.f32.mrb[0].mxu0
        %v4897 = vadd.f32 %v4735, %v4896
        %v4898 = vpop.f32.mrb[0].mxu0
        %4899 = vmatprep.mubr.f32.mxu0 0.0
        %4900 = vmatmul.mubr.f32.gmra.mrb[0].mxu0 %v4768
        %v4901 = vpop.f32.mrb[0].mxu0
        %v4902 = vadd.f32 %v4735, %v4901
        %v4903 = vpop.f32.mrb[0].mxu0
        %4904 = vmatprep.mubr.f32.mxu0 0.0
        %4905 = vmatmul.mubr.f32.gmra.mrb[0].mxu0 %v4771
        %v4906 = vpop.f32.mrb[0].mxu0
        %v4907 = vadd.f32 %v4735, %v4906
        %v4908 = vpop.f32.mrb[0].mxu0
        %4909 = vmatprep.mubr.f32.mxu0 0.0
        %4910 = vmatmul.mubr.f32.gmra.mrb[0].mxu0 %v4774
        %v4911 = vpop.f32.mrb[0].mxu0
        %v4912 = vadd.f32 %v4735, %v4911
        %v4913 = vpop.f32.mrb[0].mxu0
        %4914 = vmatprep.mubr.f32.mxu0 0.0
        %4915 = vmatmul.mubr.f32.gmra.mrb[0].mxu0 %v4777
        %v4916 = vpop.f32.mrb[0].mxu0
        %v4917 = vadd.f32 %v4735, %v4916
        %v4918 = vpop.f32.mrb[0].mxu0
        %4919 = vmatprep.mubr.f32.mxu0 0.0
        %4920 = vmatmul.mubr.f32.gmra.mrb[0].mxu0 %v4780
        %v4921 = vpop.f32.mrb[0].mxu0
        %v4922 = vadd.f32 %v4735, %v4921
        %v4923 = vpop.f32.mrb[0].mxu0
        %4924 = vmatprep.mubr.f32.mxu0 0.0
        %4925 = vmatmul.mubr.f32.gmra.mrb[0].mxu0 %v4783
        %v4926 = vpop.f32.mrb[0].mxu0
        %v4927 = vadd.f32 %v4735, %v4926
        %v4928 = vpop.f32.mrb[0].mxu0
        %4929 = vdwg.mxu0
        %v4930 = vadd.f32 %v713, %v4852
        %v4931 = vadd.f32 %v714, %v4857
        %v4932 = vadd.f32 %v715, %v4862
        %v4933 = vadd.f32 %v716, %v4867
        %v4934 = vadd.f32 %v717, %v4872
        %v4935 = vadd.f32 %v718, %v4877
        %v4936 = vadd.f32 %v719, %v4882
        %v4937 = vadd.f32 %v720, %v4887
        %v4938 = vadd.f32 %v721, %v4892
        %v4939 = vadd.f32 %v722, %v4897
        %v4940 = vadd.f32 %v723, %v4902
        %v4941 = vadd.f32 %v724, %v4907
        %v4942 = vadd.f32 %v725, %v4912
        %v4943 = vadd.f32 %v726, %v4917
        %v4944 = vadd.f32 %v727, %v4922
        %v4945 = vadd.f32 %v728, %v4927
        %v4946 = vsel %vm729, %v4930, 0.0
        %4947 = vadd.xlane.f32.xlu0 %v4946
        %v4948 = vpop.xlane.xlu0 %4947
        %v4949 = vsel %vm729, %v4931, 0.0
        %4950 = vadd.xlane.f32.xlu0 %v4949
        %v4951 = vpop.xlane.xlu0 %4950
        %v4952 = vsel %vm729, %v4932, 0.0
        %4953 = vadd.xlane.f32.xlu0 %v4952
        %v4954 = vpop.xlane.xlu0 %4953
        %v4955 = vsel %vm729, %v4933, 0.0
        %4956 = vadd.xlane.f32.xlu0 %v4955
        %v4957 = vpop.xlane.xlu0 %4956
        %v4958 = vsel %vm729, %v4934, 0.0
        %4959 = vadd.xlane.f32.xlu0 %v4958
        %v4960 = vpop.xlane.xlu0 %4959
        %v4961 = vsel %vm729, %v4935, 0.0
        %4962 = vadd.xlane.f32.xlu0 %v4961
        %v4963 = vpop.xlane.xlu0 %4962
        %v4964 = vsel %vm729, %v4936, 0.0
        %4965 = vadd.xlane.f32.xlu0 %v4964
        %v4966 = vpop.xlane.xlu0 %4965
        %v4967 = vsel %vm729, %v4937, 0.0
        %4968 = vadd.xlane.f32.xlu0 %v4967
        %v4969 = vpop.xlane.xlu0 %4968
        %v4970 = vsel %vm729, %v4938, 0.0
        %4971 = vadd.xlane.f32.xlu0 %v4970
        %v4972 = vpop.xlane.xlu0 %4971
        %v4973 = vsel %vm729, %v4939, 0.0
        %4974 = vadd.xlane.f32.xlu0 %v4973
        %v4975 = vpop.xlane.xlu0 %4974
        %v4976 = vsel %vm729, %v4940, 0.0
        %4977 = vadd.xlane.f32.xlu0 %v4976
        %v4978 = vpop.xlane.xlu0 %4977
        %v4979 = vsel %vm729, %v4941, 0.0
        %4980 = vadd.xlane.f32.xlu0 %v4979
        %v4981 = vpop.xlane.xlu0 %4980
        %v4982 = vsel %vm729, %v4942, 0.0
        %4983 = vadd.xlane.f32.xlu0 %v4982
        %v4984 = vpop.xlane.xlu0 %4983
        %v4985 = vsel %vm729, %v4943, 0.0
        %4986 = vadd.xlane.f32.xlu0 %v4985
        %v4987 = vpop.xlane.xlu0 %4986
        %v4988 = vsel %vm729, %v4944, 0.0
        %4989 = vadd.xlane.f32.xlu0 %v4988
        %v4990 = vpop.xlane.xlu0 %4989
        %v4991 = vsel %vm729, %v4945, 0.0
        %4992 = vadd.xlane.f32.xlu0 %v4991
        %v4993 = vpop.xlane.xlu0 %4992
        %v4994 = vmul.f32 %v4948, %v778
        %v4995 = vmul.f32 %v4951, %v778
        %v4996 = vmul.f32 %v4954, %v778
        %v4997 = vmul.f32 %v4957, %v778
        %v4998 = vmul.f32 %v4960, %v778
        %v4999 = vmul.f32 %v4963, %v778
        %v5000 = vmul.f32 %v4966, %v778
        %v5001 = vmul.f32 %v4969, %v778
        %v5002 = vmul.f32 %v4972, %v778
        %v5003 = vmul.f32 %v4975, %v778
        %v5004 = vmul.f32 %v4978, %v778
        %v5005 = vmul.f32 %v4981, %v778
        %v5006 = vmul.f32 %v4984, %v778
        %v5007 = vmul.f32 %v4987, %v778
        %v5008 = vmul.f32 %v4990, %v778
        %v5009 = vmul.f32 %v4993, %v778
        %v5010 = vsub.f32 %v4930, %v4994
        %v5011 = vsub.f32 %v4931, %v4995
        %v5012 = vsub.f32 %v4932, %v4996
        %v5013 = vsub.f32 %v4933, %v4997
        %v5014 = vsub.f32 %v4934, %v4998
        %v5015 = vsub.f32 %v4935, %v4999
        %v5016 = vsub.f32 %v4936, %v5000
        %v5017 = vsub.f32 %v4937, %v5001
        %v5018 = vsub.f32 %v4938, %v5002
        %v5019 = vsub.f32 %v4939, %v5003
        %v5020 = vsub.f32 %v4940, %v5004
        %v5021 = vsub.f32 %v4941, %v5005
        %v5022 = vsub.f32 %v4942, %v5006
        %v5023 = vsub.f32 %v4943, %v5007
        %v5024 = vsub.f32 %v4944, %v5008
        %v5025 = vsub.f32 %v4945, %v5009
        %v5026 = vmul.f32 %v5010, %v5010
        %v5027 = vmul.f32 %v5011, %v5011
        %v5028 = vmul.f32 %v5012, %v5012
        %v5029 = vmul.f32 %v5013, %v5013
        %v5030 = vmul.f32 %v5014, %v5014
        %v5031 = vmul.f32 %v5015, %v5015
        %v5032 = vmul.f32 %v5016, %v5016
        %v5033 = vmul.f32 %v5017, %v5017
        %v5034 = vmul.f32 %v5018, %v5018
        %v5035 = vmul.f32 %v5019, %v5019
        %v5036 = vmul.f32 %v5020, %v5020
        %v5037 = vmul.f32 %v5021, %v5021
        %v5038 = vmul.f32 %v5022, %v5022
        %v5039 = vmul.f32 %v5023, %v5023
        %v5040 = vmul.f32 %v5024, %v5024
        %v5041 = vmul.f32 %v5025, %v5025
        %v5042 = vsel %vm729, %v5026, 0.0
        %5043 = vadd.xlane.f32.xlu0 %v5042
        %v5044 = vpop.xlane.xlu0 %5043
        %v5045 = vsel %vm729, %v5027, 0.0
        %5046 = vadd.xlane.f32.xlu0 %v5045
        %v5047 = vpop.xlane.xlu0 %5046
        %v5048 = vsel %vm729, %v5028, 0.0
        %5049 = vadd.xlane.f32.xlu0 %v5048
        %v5050 = vpop.xlane.xlu0 %5049
        %v5051 = vsel %vm729, %v5029, 0.0
        %5052 = vadd.xlane.f32.xlu0 %v5051
        %v5053 = vpop.xlane.xlu0 %5052
        %v5054 = vsel %vm729, %v5030, 0.0
        %5055 = vadd.xlane.f32.xlu0 %v5054
        %v5056 = vpop.xlane.xlu0 %5055
        %v5057 = vsel %vm729, %v5031, 0.0
        %5058 = vadd.xlane.f32.xlu0 %v5057
        %v5059 = vpop.xlane.xlu0 %5058
        %v5060 = vsel %vm729, %v5032, 0.0
        %5061 = vadd.xlane.f32.xlu0 %v5060
        %v5062 = vpop.xlane.xlu0 %5061
        %v5063 = vsel %vm729, %v5033, 0.0
        %5064 = vadd.xlane.f32.xlu0 %v5063
        %v5065 = vpop.xlane.xlu0 %5064
        %v5066 = vsel %vm729, %v5034, 0.0
        %5067 = vadd.xlane.f32.xlu0 %v5066
        %v5068 = vpop.xlane.xlu0 %5067
        %v5069 = vsel %vm729, %v5035, 0.0
        %5070 = vadd.xlane.f32.xlu0 %v5069
        %v5071 = vpop.xlane.xlu0 %5070
        %v5072 = vsel %vm729, %v5036, 0.0
        %5073 = vadd.xlane.f32.xlu0 %v5072
        %v5074 = vpop.xlane.xlu0 %5073
        %v5075 = vsel %vm729, %v5037, 0.0
        %5076 = vadd.xlane.f32.xlu0 %v5075
        %v5077 = vpop.xlane.xlu0 %5076
        %v5078 = vsel %vm729, %v5038, 0.0
        %5079 = vadd.xlane.f32.xlu0 %v5078
        %v5080 = vpop.xlane.xlu0 %5079
        %v5081 = vsel %vm729, %v5039, 0.0
        %5082 = vadd.xlane.f32.xlu0 %v5081
        %v5083 = vpop.xlane.xlu0 %5082
        %v5084 = vsel %vm729, %v5040, 0.0
        %5085 = vadd.xlane.f32.xlu0 %v5084
        %v5086 = vpop.xlane.xlu0 %5085
        %v5087 = vsel %vm729, %v5041, 0.0
        %5088 = vadd.xlane.f32.xlu0 %v5087
        %v5089 = vpop.xlane.xlu0 %5088
        %v5090 = vmul.f32 %v5044, %v778
        %v5091 = vmul.f32 %v5047, %v778
        %v5092 = vmul.f32 %v5050, %v778
        %v5093 = vmul.f32 %v5053, %v778
        %v5094 = vmul.f32 %v5056, %v778
        %v5095 = vmul.f32 %v5059, %v778
        %v5096 = vmul.f32 %v5062, %v778
        %v5097 = vmul.f32 %v5065, %v778
        %v5098 = vmul.f32 %v5068, %v778
        %v5099 = vmul.f32 %v5071, %v778
        %v5100 = vmul.f32 %v5074, %v778
        %v5101 = vmul.f32 %v5077, %v778
        %v5102 = vmul.f32 %v5080, %v778
        %v5103 = vmul.f32 %v5083, %v778
        %v5104 = vmul.f32 %v5086, %v778
        %v5105 = vmul.f32 %v5089, %v778
        %v5106 = vadd.f32 %v5090, 1e-05
        %v5107 = vadd.f32 %v5091, 1e-05
        %v5108 = vadd.f32 %v5092, 1e-05
        %v5109 = vadd.f32 %v5093, 1e-05
        %v5110 = vadd.f32 %v5094, 1e-05
        %v5111 = vadd.f32 %v5095, 1e-05
        %v5112 = vadd.f32 %v5096, 1e-05
        %v5113 = vadd.f32 %v5097, 1e-05
        %v5114 = vadd.f32 %v5098, 1e-05
        %v5115 = vadd.f32 %v5099, 1e-05
        %v5116 = vadd.f32 %v5100, 1e-05
        %v5117 = vadd.f32 %v5101, 1e-05
        %v5118 = vadd.f32 %v5102, 1e-05
        %v5119 = vadd.f32 %v5103, 1e-05
        %v5120 = vadd.f32 %v5104, 1e-05
        %v5121 = vadd.f32 %v5105, 1e-05
        %v5122 = vrsqrt.pop %v5106
        %v5123 = vrsqrt.pop %v5107
        %v5124 = vrsqrt.pop %v5108
        %v5125 = vrsqrt.pop %v5109
        %v5126 = vrsqrt.pop %v5110
        %v5127 = vrsqrt.pop %v5111
        %v5128 = vrsqrt.pop %v5112
        %v5129 = vrsqrt.pop %v5113
        %v5130 = vrsqrt.pop %v5114
        %v5131 = vrsqrt.pop %v5115
        %v5132 = vrsqrt.pop %v5116
        %v5133 = vrsqrt.pop %v5117
        %v5134 = vrsqrt.pop %v5118
        %v5135 = vrsqrt.pop %v5119
        %v5136 = vrsqrt.pop %v5120
        %v5137 = vrsqrt.pop %v5121
        %v5138 = vmul.f32 %v5010, %v5122
        %v5139 = vmul.f32 %v5011, %v5123
        %v5140 = vmul.f32 %v5012, %v5124
        %v5141 = vmul.f32 %v5013, %v5125
        %v5142 = vmul.f32 %v5014, %v5126
        %v5143 = vmul.f32 %v5015, %v5127
        %v5144 = vmul.f32 %v5016, %v5128
        %v5145 = vmul.f32 %v5017, %v5129
        %v5146 = vmul.f32 %v5018, %v5130
        %v5147 = vmul.f32 %v5019, %v5131
        %v5148 = vmul.f32 %v5020, %v5132
        %v5149 = vmul.f32 %v5021, %v5133
        %v5150 = vmul.f32 %v5022, %v5134
        %v5151 = vmul.f32 %v5023, %v5135
        %v5152 = vmul.f32 %v5024, %v5136
        %v5153 = vmul.f32 %v5025, %v5137
        %v5155 = vlaneseq
        %v5156 = vshrl.u32 %v5155, 7
        %v5157 = vsub.s32 0, %v5156
        %v5158 = vrot.slane %v691, %v5157
        %v5160 = vmul.f32 %v5138, %v5158
        %v5161 = vmul.f32 %v5139, %v5158
        %v5162 = vmul.f32 %v5140, %v5158
        %v5163 = vmul.f32 %v5141, %v5158
        %v5164 = vmul.f32 %v5142, %v5158
        %v5165 = vmul.f32 %v5143, %v5158
        %v5166 = vmul.f32 %v5144, %v5158
        %v5167 = vmul.f32 %v5145, %v5158
        %v5168 = vmul.f32 %v5146, %v5158
        %v5169 = vmul.f32 %v5147, %v5158
        %v5170 = vmul.f32 %v5148, %v5158
        %v5171 = vmul.f32 %v5149, %v5158
        %v5172 = vmul.f32 %v5150, %v5158
        %v5173 = vmul.f32 %v5151, %v5158
        %v5174 = vmul.f32 %v5152, %v5158
        %v5175 = vmul.f32 %v5153, %v5158
        %v5177 = vlaneseq
        %v5178 = vshrl.u32 %v5177, 7
        %v5179 = vsub.s32 0, %v5178
        %v5180 = vrot.slane %v692, %v5179
        %v5182 = vadd.f32 %v5160, %v5180
        %v5183 = vadd.f32 %v5161, %v5180
        %v5184 = vadd.f32 %v5162, %v5180
        %v5185 = vadd.f32 %v5163, %v5180
        %v5186 = vadd.f32 %v5164, %v5180
        %v5187 = vadd.f32 %v5165, %v5180
        %v5188 = vadd.f32 %v5166, %v5180
        %v5189 = vadd.f32 %v5167, %v5180
        %v5190 = vadd.f32 %v5168, %v5180
        %v5191 = vadd.f32 %v5169, %v5180
        %v5192 = vadd.f32 %v5170, %v5180
        %v5193 = vadd.f32 %v5171, %v5180
        %v5194 = vadd.f32 %v5172, %v5180
        %v5195 = vadd.f32 %v5173, %v5180
        %v5196 = vadd.f32 %v5174, %v5180
        %v5197 = vadd.f32 %v5175, %v5180
        %v5198 = vld [vmem:[#allocation20] sm:$0xff]
        %v5199 = vld [vmem:[#allocation20 + $0x8] sm:$0xff]
        %v5200 = vld [vmem:[#allocation20 + $0x10] sm:$0xff]
        %v5201 = vld [vmem:[#allocation20 + $0x18] sm:$0xff]
        %v5203 = vlaneseq
        %v5204 = vshrl.u32 %v5203, 7
        %v5205 = vsub.s32 0, %v5204
        %v5206 = vrot.slane %v695, %v5205
        %v5209 = vsel %vm729, %v5182, 0
        %v5212 = vsel %vm729, %v5183, 0
        %v5215 = vsel %vm729, %v5184, 0
        %v5218 = vsel %vm729, %v5185, 0
        %v5221 = vsel %vm729, %v5186, 0
        %v5224 = vsel %vm729, %v5187, 0
        %v5227 = vsel %vm729, %v5188, 0
        %v5230 = vsel %vm729, %v5189, 0
        %v5233 = vsel %vm729, %v5190, 0
        %v5236 = vsel %vm729, %v5191, 0
        %v5239 = vsel %vm729, %v5192, 0
        %v5242 = vsel %vm729, %v5193, 0
        %v5245 = vsel %vm729, %v5194, 0
        %v5248 = vsel %vm729, %v5195, 0
        %v5251 = vsel %vm729, %v5196, 0
        %v5254 = vsel %vm729, %v5197, 0
        %5256 = vmatprep.subr.mxu0 0.0
        %5257 = vmatpush1.msra.mxu0 %v5198
        %5258 = vmatprep.subr.mxu0 0.0
        %5259 = vmatpush1.msra.mxu0 %v5199
        %5260 = vmatprep.subr.mxu0 0.0
        %5261 = vmatpush1.msra.mxu0 %v5200
        %5262 = vmatprep.subr.mxu0 0.0
        %5263 = vmatpush1.msra.mxu0 %v5201
        %5264 = vmatprep.subr.mxu0 0.0
        %5265 = vmatpush1.msra.mxu0 0.0
        %5266 = vmatprep.subr.mxu0 0.0
        %5267 = vmatpush1.msra.mxu0 0.0
        %5268 = vmatprep.subr.mxu0 0.0
        %5269 = vmatpush1.msra.mxu0 0.0
        %5270 = vmatprep.subr.mxu0 0.0
        %5271 = vmatpush1.msra.mxu0 0.0
        %5272 = vmatprep.subr.mxu0 0.0
        %5273 = vmatpush1.msra.mxu0 0.0
        %5274 = vmatprep.subr.mxu0 0.0
        %5275 = vmatpush1.msra.mxu0 0.0
        %5276 = vmatprep.subr.mxu0 0.0
        %5277 = vmatpush1.msra.mxu0 0.0
        %5278 = vmatprep.subr.mxu0 0.0
        %5279 = vmatpush1.msra.mxu0 0.0
        %5280 = vmatprep.subr.mxu0 0.0
        %5281 = vmatpush1.msra.mxu0 0.0
        %5282 = vmatprep.subr.mxu0 0.0
        %5283 = vmatpush1.msra.mxu0 0.0
        %5284 = vmatprep.subr.mxu0 0.0
        %5285 = vmatpush1.msra.mxu0 0.0
        %5286 = vmatprep.subr.mxu0 0.0
        %5287 = vmatpush1.msra.mxu0 0.0
        %5288 = vmatprep.subr.mxu0 0.0
        %5289 = vmatpush1.msra.mxu0 0.0
        %5290 = vmatprep.subr.mxu0 0.0
        %5291 = vmatpush1.msra.mxu0 0.0
        %5292 = vmatprep.subr.mxu0 0.0
        %5293 = vmatpush1.msra.mxu0 0.0
        %5294 = vmatprep.subr.mxu0 0.0
        %5295 = vmatpush1.msra.mxu0 0.0
        %5296 = vmatprep.subr.mxu0 0.0
        %5297 = vmatpush1.msra.mxu0 0.0
        %5298 = vmatprep.subr.mxu0 0.0
        %5299 = vmatpush1.msra.mxu0 0.0
        %5300 = vmatprep.subr.mxu0 0.0
        %5301 = vmatpush1.msra.mxu0 0.0
        %5302 = vmatprep.subr.mxu0 0.0
        %5303 = vmatpush1.msra.mxu0 0.0
        %5304 = vmatprep.subr.mxu0 0.0
        %5305 = vmatpush1.msra.mxu0 0.0
        %5306 = vmatprep.subr.mxu0 0.0
        %5307 = vmatpush1.msra.mxu0 0.0
        %5308 = vmatprep.subr.mxu0 0.0
        %5309 = vmatpush1.msra.mxu0 0.0
        %5310 = vmatprep.subr.mxu0 0.0
        %5311 = vmatpush1.msra.mxu0 0.0
        %5312 = vmatprep.subr.mxu0 0.0
        %5313 = vmatpush1.msra.mxu0 0.0
        %5314 = vmatprep.subr.mxu0 0.0
        %5315 = vmatpush1.msra.mxu0 0.0
        %5316 = vmatprep.subr.mxu0 0.0
        %5317 = vmatpush1.msra.mxu0 0.0
        %5318 = vmatprep.subr.mxu0 0.0
        %5319 = vmatpush1.msra.mxu0 0.0
        %5320 = vmatprep.mubr.f32.mxu0 0.0
        %5321 = vmatmul.mubr.f32.gmra.mrb[0].mxu0 %v5209
        %v5322 = vpop.f32.mrb[0].mxu0
        %v5323 = vadd.f32 %v5206, %v5322
        %v5324 = vpop.f32.mrb[0].mxu0
        %5325 = vmatprep.mubr.f32.mxu0 0.0
        %5326 = vmatmul.mubr.f32.gmra.mrb[0].mxu0 %v5212
        %v5327 = vpop.f32.mrb[0].mxu0
        %v5328 = vadd.f32 %v5206, %v5327
        %v5329 = vpop.f32.mrb[0].mxu0
        %5330 = vmatprep.mubr.f32.mxu0 0.0
        %5331 = vmatmul.mubr.f32.gmra.mrb[0].mxu0 %v5215
        %v5332 = vpop.f32.mrb[0].mxu0
        %v5333 = vadd.f32 %v5206, %v5332
        %v5334 = vpop.f32.mrb[0].mxu0
        %5335 = vmatprep.mubr.f32.mxu0 0.0
        %5336 = vmatmul.mubr.f32.gmra.mrb[0].mxu0 %v5218
        %v5337 = vpop.f32.mrb[0].mxu0
        %v5338 = vadd.f32 %v5206, %v5337
        %v5339 = vpop.f32.mrb[0].mxu0
        %5340 = vmatprep.mubr.f32.mxu0 0.0
        %5341 = vmatmul.mubr.f32.gmra.mrb[0].mxu0 %v5221
        %v5342 = vpop.f32.mrb[0].mxu0
        %v5343 = vadd.f32 %v5206, %v5342
        %v5344 = vpop.f32.mrb[0].mxu0
        %5345 = vmatprep.mubr.f32.mxu0 0.0
        %5346 = vmatmul.mubr.f32.gmra.mrb[0].mxu0 %v5224
        %v5347 = vpop.f32.mrb[0].mxu0
        %v5348 = vadd.f32 %v5206, %v5347
        %v5349 = vpop.f32.mrb[0].mxu0
        %5350 = vmatprep.mubr.f32.mxu0 0.0
        %5351 = vmatmul.mubr.f32.gmra.mrb[0].mxu0 %v5227
        %v5352 = vpop.f32.mrb[0].mxu0
        %v5353 = vadd.f32 %v5206, %v5352
        %v5354 = vpop.f32.mrb[0].mxu0
        %5355 = vmatprep.mubr.f32.mxu0 0.0
        %5356 = vmatmul.mubr.f32.gmra.mrb[0].mxu0 %v5230
        %v5357 = vpop.f32.mrb[0].mxu0
        %v5358 = vadd.f32 %v5206, %v5357
        %v5359 = vpop.f32.mrb[0].mxu0
        %5360 = vmatprep.mubr.f32.mxu0 0.0
        %5361 = vmatmul.mubr.f32.gmra.mrb[0].mxu0 %v5233
        %v5362 = vpop.f32.mrb[0].mxu0
        %v5363 = vadd.f32 %v5206, %v5362
        %v5364 = vpop.f32.mrb[0].mxu0
        %5365 = vmatprep.mubr.f32.mxu0 0.0
        %5366 = vmatmul.mubr.f32.gmra.mrb[0].mxu0 %v5236
        %v5367 = vpop.f32.mrb[0].mxu0
        %v5368 = vadd.f32 %v5206, %v5367
        %v5369 = vpop.f32.mrb[0].mxu0
        %5370 = vmatprep.mubr.f32.mxu0 0.0
        %5371 = vmatmul.mubr.f32.gmra.mrb[0].mxu0 %v5239
        %v5372 = vpop.f32.mrb[0].mxu0
        %v5373 = vadd.f32 %v5206, %v5372
        %v5374 = vpop.f32.mrb[0].mxu0
        %5375 = vmatprep.mubr.f32.mxu0 0.0
        %5376 = vmatmul.mubr.f32.gmra.mrb[0].mxu0 %v5242
        %v5377 = vpop.f32.mrb[0].mxu0
        %v5378 = vadd.f32 %v5206, %v5377
        %v5379 = vpop.f32.mrb[0].mxu0
        %5380 = vmatprep.mubr.f32.mxu0 0.0
        %5381 = vmatmul.mubr.f32.gmra.mrb[0].mxu0 %v5245
        %v5382 = vpop.f32.mrb[0].mxu0
        %v5383 = vadd.f32 %v5206, %v5382
        %v5384 = vpop.f32.mrb[0].mxu0
        %5385 = vmatprep.mubr.f32.mxu0 0.0
        %5386 = vmatmul.mubr.f32.gmra.mrb[0].mxu0 %v5248
        %v5387 = vpop.f32.mrb[0].mxu0
        %v5388 = vadd.f32 %v5206, %v5387
        %v5389 = vpop.f32.mrb[0].mxu0
        %5390 = vmatprep.mubr.f32.mxu0 0.0
        %5391 = vmatmul.mubr.f32.gmra.mrb[0].mxu0 %v5251
        %v5392 = vpop.f32.mrb[0].mxu0
        %v5393 = vadd.f32 %v5206, %v5392
        %v5394 = vpop.f32.mrb[0].mxu0
        %5395 = vmatprep.mubr.f32.mxu0 0.0
        %5396 = vmatmul.mubr.f32.gmra.mrb[0].mxu0 %v5254
        %v5397 = vpop.f32.mrb[0].mxu0
        %v5398 = vadd.f32 %v5206, %v5397
        %v5399 = vpop.f32.mrb[0].mxu0
        %5400 = vdwg.mxu0
        %v5401 = vmul.f32 %v5323, 0.5
        %v5402 = vmul.f32 %v5328, 0.5
        %v5403 = vmul.f32 %v5333, 0.5
        %v5404 = vmul.f32 %v5338, 0.5
        %v5405 = vmul.f32 %v5343, 0.5
        %v5406 = vmul.f32 %v5348, 0.5
        %v5407 = vmul.f32 %v5353, 0.5
        %v5408 = vmul.f32 %v5358, 0.5
        %v5409 = vmul.f32 %v5363, 0.5
        %v5410 = vmul.f32 %v5368, 0.5
        %v5411 = vmul.f32 %v5373, 0.5
        %v5412 = vmul.f32 %v5378, 0.5
        %v5413 = vmul.f32 %v5383, 0.5
        %v5414 = vmul.f32 %v5388, 0.5
        %v5415 = vmul.f32 %v5393, 0.5
        %v5416 = vmul.f32 %v5398, 0.5
        %v5417 = vmul.f32 %v5323, 0.70710677
        %v5418 = vmul.f32 %v5328, 0.70710677
        %v5419 = vmul.f32 %v5333, 0.70710677
        %v5420 = vmul.f32 %v5338, 0.70710677
        %v5421 = vmul.f32 %v5343, 0.70710677
        %v5422 = vmul.f32 %v5348, 0.70710677
        %v5423 = vmul.f32 %v5353, 0.70710677
        %v5424 = vmul.f32 %v5358, 0.70710677
        %v5425 = vmul.f32 %v5363, 0.70710677
        %v5426 = vmul.f32 %v5368, 0.70710677
        %v5427 = vmul.f32 %v5373, 0.70710677
        %v5428 = vmul.f32 %v5378, 0.70710677
        %v5429 = vmul.f32 %v5383, 0.70710677
        %v5430 = vmul.f32 %v5388, 0.70710677
        %v5431 = vmul.f32 %v5393, 0.70710677
        %v5432 = vmul.f32 %v5398, 0.70710677
        %vm5433 = vcmp.ge.f32.partialorder %v5417, 0.0
        %vm5434 = vcmp.ge.f32.partialorder %v5418, 0.0
        %vm5435 = vcmp.ge.f32.partialorder %v5419, 0.0
        %vm5436 = vcmp.ge.f32.partialorder %v5420, 0.0
        %vm5437 = vcmp.ge.f32.partialorder %v5421, 0.0
        %vm5438 = vcmp.ge.f32.partialorder %v5422, 0.0
        %vm5439 = vcmp.ge.f32.partialorder %v5423, 0.0
        %vm5440 = vcmp.ge.f32.partialorder %v5424, 0.0
        %vm5441 = vcmp.ge.f32.partialorder %v5425, 0.0
        %vm5442 = vcmp.ge.f32.partialorder %v5426, 0.0
        %vm5443 = vcmp.ge.f32.partialorder %v5427, 0.0
        %vm5444 = vcmp.ge.f32.partialorder %v5428, 0.0
        %vm5445 = vcmp.ge.f32.partialorder %v5429, 0.0
        %vm5446 = vcmp.ge.f32.partialorder %v5430, 0.0
        %vm5447 = vcmp.ge.f32.partialorder %v5431, 0.0
        %vm5448 = vcmp.ge.f32.partialorder %v5432, 0.0
        %v5449 = vsel %vm5433, 1.0, -1.0
        %v5450 = vsel %vm5434, 1.0, -1.0
        %v5451 = vsel %vm5435, 1.0, -1.0
        %v5452 = vsel %vm5436, 1.0, -1.0
        %v5453 = vsel %vm5437, 1.0, -1.0
        %v5454 = vsel %vm5438, 1.0, -1.0
        %v5455 = vsel %vm5439, 1.0, -1.0
        %v5456 = vsel %vm5440, 1.0, -1.0
        %v5457 = vsel %vm5441, 1.0, -1.0
        %v5458 = vsel %vm5442, 1.0, -1.0
        %v5459 = vsel %vm5443, 1.0, -1.0
        %v5460 = vsel %vm5444, 1.0, -1.0
        %v5461 = vsel %vm5445, 1.0, -1.0
        %v5462 = vsel %vm5446, 1.0, -1.0
        %v5463 = vsel %vm5447, 1.0, -1.0
        %v5464 = vsel %vm5448, 1.0, -1.0
        %v5465 = vand.u32 2147483647, %v5417
        %v5466 = vand.u32 2147483647, %v5418
        %v5467 = vand.u32 2147483647, %v5419
        %v5468 = vand.u32 2147483647, %v5420
        %v5469 = vand.u32 2147483647, %v5421
        %v5470 = vand.u32 2147483647, %v5422
        %v5471 = vand.u32 2147483647, %v5423
        %v5472 = vand.u32 2147483647, %v5424
        %v5473 = vand.u32 2147483647, %v5425
        %v5474 = vand.u32 2147483647, %v5426
        %v5475 = vand.u32 2147483647, %v5427
        %v5476 = vand.u32 2147483647, %v5428
        %v5477 = vand.u32 2147483647, %v5429
        %v5478 = vand.u32 2147483647, %v5430
        %v5479 = vand.u32 2147483647, %v5431
        %v5480 = vand.u32 2147483647, %v5432
        %v5481 = vmul.f32 %v5465, 0.3275911
        %v5482 = vmul.f32 %v5466, 0.3275911
        %v5483 = vmul.f32 %v5467, 0.3275911
        %v5484 = vmul.f32 %v5468, 0.3275911
        %v5485 = vmul.f32 %v5469, 0.3275911
        %v5486 = vmul.f32 %v5470, 0.3275911
        %v5487 = vmul.f32 %v5471, 0.3275911
        %v5488 = vmul.f32 %v5472, 0.3275911
        %v5489 = vmul.f32 %v5473, 0.3275911
        %v5490 = vmul.f32 %v5474, 0.3275911
        %v5491 = vmul.f32 %v5475, 0.3275911
        %v5492 = vmul.f32 %v5476, 0.3275911
        %v5493 = vmul.f32 %v5477, 0.3275911
        %v5494 = vmul.f32 %v5478, 0.3275911
        %v5495 = vmul.f32 %v5479, 0.3275911
        %v5496 = vmul.f32 %v5480, 0.3275911
        %v5497 = vadd.f32 %v5481, 1.0
        %v5498 = vadd.f32 %v5482, 1.0
        %v5499 = vadd.f32 %v5483, 1.0
        %v5500 = vadd.f32 %v5484, 1.0
        %v5501 = vadd.f32 %v5485, 1.0
        %v5502 = vadd.f32 %v5486, 1.0
        %v5503 = vadd.f32 %v5487, 1.0
        %v5504 = vadd.f32 %v5488, 1.0
        %v5505 = vadd.f32 %v5489, 1.0
        %v5506 = vadd.f32 %v5490, 1.0
        %v5507 = vadd.f32 %v5491, 1.0
        %v5508 = vadd.f32 %v5492, 1.0
        %v5509 = vadd.f32 %v5493, 1.0
        %v5510 = vadd.f32 %v5494, 1.0
        %v5511 = vadd.f32 %v5495, 1.0
        %v5512 = vadd.f32 %v5496, 1.0
        %v5513 = vrcp.pop %v5497
        %v5514 = vmul.f32 1.0, %v5513
        %v5515 = vrcp.pop %v5498
        %v5516 = vmul.f32 1.0, %v5515
        %v5517 = vrcp.pop %v5499
        %v5518 = vmul.f32 1.0, %v5517
        %v5519 = vrcp.pop %v5500
        %v5520 = vmul.f32 1.0, %v5519
        %v5521 = vrcp.pop %v5501
        %v5522 = vmul.f32 1.0, %v5521
        %v5523 = vrcp.pop %v5502
        %v5524 = vmul.f32 1.0, %v5523
        %v5525 = vrcp.pop %v5503
        %v5526 = vmul.f32 1.0, %v5525
        %v5527 = vrcp.pop %v5504
        %v5528 = vmul.f32 1.0, %v5527
        %v5529 = vrcp.pop %v5505
        %v5530 = vmul.f32 1.0, %v5529
        %v5531 = vrcp.pop %v5506
        %v5532 = vmul.f32 1.0, %v5531
        %v5533 = vrcp.pop %v5507
        %v5534 = vmul.f32 1.0, %v5533
        %v5535 = vrcp.pop %v5508
        %v5536 = vmul.f32 1.0, %v5535
        %v5537 = vrcp.pop %v5509
        %v5538 = vmul.f32 1.0, %v5537
        %v5539 = vrcp.pop %v5510
        %v5540 = vmul.f32 1.0, %v5539
        %v5541 = vrcp.pop %v5511
        %v5542 = vmul.f32 1.0, %v5541
        %v5543 = vrcp.pop %v5512
        %v5544 = vmul.f32 1.0, %v5543
        %v5545 = vmul.f32 %v5514, 1.0614054
        %v5546 = vmul.f32 %v5516, 1.0614054
        %v5547 = vmul.f32 %v5518, 1.0614054
        %v5548 = vmul.f32 %v5520, 1.0614054
        %v5549 = vmul.f32 %v5522, 1.0614054
        %v5550 = vmul.f32 %v5524, 1.0614054
        %v5551 = vmul.f32 %v5526, 1.0614054
        %v5552 = vmul.f32 %v5528, 1.0614054
        %v5553 = vmul.f32 %v5530, 1.0614054
        %v5554 = vmul.f32 %v5532, 1.0614054
        %v5555 = vmul.f32 %v5534, 1.0614054
        %v5556 = vmul.f32 %v5536, 1.0614054
        %v5557 = vmul.f32 %v5538, 1.0614054
        %v5558 = vmul.f32 %v5540, 1.0614054
        %v5559 = vmul.f32 %v5542, 1.0614054
        %v5560 = vmul.f32 %v5544, 1.0614054
        %v5561 = vadd.f32 %v5545, -1.4531521
        %v5562 = vadd.f32 %v5546, -1.4531521
        %v5563 = vadd.f32 %v5547, -1.4531521
        %v5564 = vadd.f32 %v5548, -1.4531521
        %v5565 = vadd.f32 %v5549, -1.4531521
        %v5566 = vadd.f32 %v5550, -1.4531521
        %v5567 = vadd.f32 %v5551, -1.4531521
        %v5568 = vadd.f32 %v5552, -1.4531521
        %v5569 = vadd.f32 %v5553, -1.4531521
        %v5570 = vadd.f32 %v5554, -1.4531521
        %v5571 = vadd.f32 %v5555, -1.4531521
        %v5572 = vadd.f32 %v5556, -1.4531521
        %v5573 = vadd.f32 %v5557, -1.4531521
        %v5574 = vadd.f32 %v5558, -1.4531521
        %v5575 = vadd.f32 %v5559, -1.4531521
        %v5576 = vadd.f32 %v5560, -1.4531521
        %v5577 = vmul.f32 %v5561, %v5514
        %v5578 = vmul.f32 %v5562, %v5516
        %v5579 = vmul.f32 %v5563, %v5518
        %v5580 = vmul.f32 %v5564, %v5520
        %v5581 = vmul.f32 %v5565, %v5522
        %v5582 = vmul.f32 %v5566, %v5524
        %v5583 = vmul.f32 %v5567, %v5526
        %v5584 = vmul.f32 %v5568, %v5528
        %v5585 = vmul.f32 %v5569, %v5530
        %v5586 = vmul.f32 %v5570, %v5532
        %v5587 = vmul.f32 %v5571, %v5534
        %v5588 = vmul.f32 %v5572, %v5536
        %v5589 = vmul.f32 %v5573, %v5538
        %v5590 = vmul.f32 %v5574, %v5540
        %v5591 = vmul.f32 %v5575, %v5542
        %v5592 = vmul.f32 %v5576, %v5544
        %v5593 = vadd.f32 %v5577, 1.4214138
        %v5594 = vadd.f32 %v5578, 1.4214138
        %v5595 = vadd.f32 %v5579, 1.4214138
        %v5596 = vadd.f32 %v5580, 1.4214138
        %v5597 = vadd.f32 %v5581, 1.4214138
        %v5598 = vadd.f32 %v5582, 1.4214138
        %v5599 = vadd.f32 %v5583, 1.4214138
        %v5600 = vadd.f32 %v5584, 1.4214138
        %v5601 = vadd.f32 %v5585, 1.4214138
        %v5602 = vadd.f32 %v5586, 1.4214138
        %v5603 = vadd.f32 %v5587, 1.4214138
        %v5604 = vadd.f32 %v5588, 1.4214138
        %v5605 = vadd.f32 %v5589, 1.4214138
        %v5606 = vadd.f32 %v5590, 1.4214138
        %v5607 = vadd.f32 %v5591, 1.4214138
        %v5608 = vadd.f32 %v5592, 1.4214138
        %v5609 = vmul.f32 %v5593, %v5514
        %v5610 = vmul.f32 %v5594, %v5516
        %v5611 = vmul.f32 %v5595, %v5518
        %v5612 = vmul.f32 %v5596, %v5520
        %v5613 = vmul.f32 %v5597, %v5522
        %v5614 = vmul.f32 %v5598, %v5524
        %v5615 = vmul.f32 %v5599, %v5526
        %v5616 = vmul.f32 %v5600, %v5528
        %v5617 = vmul.f32 %v5601, %v5530
        %v5618 = vmul.f32 %v5602, %v5532
        %v5619 = vmul.f32 %v5603, %v5534
        %v5620 = vmul.f32 %v5604, %v5536
        %v5621 = vmul.f32 %v5605, %v5538
        %v5622 = vmul.f32 %v5606, %v5540
        %v5623 = vmul.f32 %v5607, %v5542
        %v5624 = vmul.f32 %v5608, %v5544
        %v5625 = vadd.f32 %v5609, -0.28449672
        %v5626 = vadd.f32 %v5610, -0.28449672
        %v5627 = vadd.f32 %v5611, -0.28449672
        %v5628 = vadd.f32 %v5612, -0.28449672
        %v5629 = vadd.f32 %v5613, -0.28449672
        %v5630 = vadd.f32 %v5614, -0.28449672
        %v5631 = vadd.f32 %v5615, -0.28449672
        %v5632 = vadd.f32 %v5616, -0.28449672
        %v5633 = vadd.f32 %v5617, -0.28449672
        %v5634 = vadd.f32 %v5618, -0.28449672
        %v5635 = vadd.f32 %v5619, -0.28449672
        %v5636 = vadd.f32 %v5620, -0.28449672
        %v5637 = vadd.f32 %v5621, -0.28449672
        %v5638 = vadd.f32 %v5622, -0.28449672
        %v5639 = vadd.f32 %v5623, -0.28449672
        %v5640 = vadd.f32 %v5624, -0.28449672
        %v5641 = vmul.f32 %v5625, %v5514
        %v5642 = vmul.f32 %v5626, %v5516
        %v5643 = vmul.f32 %v5627, %v5518
        %v5644 = vmul.f32 %v5628, %v5520
        %v5645 = vmul.f32 %v5629, %v5522
        %v5646 = vmul.f32 %v5630, %v5524
        %v5647 = vmul.f32 %v5631, %v5526
        %v5648 = vmul.f32 %v5632, %v5528
        %v5649 = vmul.f32 %v5633, %v5530
        %v5650 = vmul.f32 %v5634, %v5532
        %v5651 = vmul.f32 %v5635, %v5534
        %v5652 = vmul.f32 %v5636, %v5536
        %v5653 = vmul.f32 %v5637, %v5538
        %v5654 = vmul.f32 %v5638, %v5540
        %v5655 = vmul.f32 %v5639, %v5542
        %v5656 = vmul.f32 %v5640, %v5544
        %v5657 = vadd.f32 %v5641, 0.2548296
        %v5658 = vadd.f32 %v5642, 0.2548296
        %v5659 = vadd.f32 %v5643, 0.2548296
        %v5660 = vadd.f32 %v5644, 0.2548296
        %v5661 = vadd.f32 %v5645, 0.2548296
        %v5662 = vadd.f32 %v5646, 0.2548296
        %v5663 = vadd.f32 %v5647, 0.2548296
        %v5664 = vadd.f32 %v5648, 0.2548296
        %v5665 = vadd.f32 %v5649, 0.2548296
        %v5666 = vadd.f32 %v5650, 0.2548296
        %v5667 = vadd.f32 %v5651, 0.2548296
        %v5668 = vadd.f32 %v5652, 0.2548296
        %v5669 = vadd.f32 %v5653, 0.2548296
        %v5670 = vadd.f32 %v5654, 0.2548296
        %v5671 = vadd.f32 %v5655, 0.2548296
        %v5672 = vadd.f32 %v5656, 0.2548296
        %v5673 = vmul.f32 %v5657, %v5514
        %v5674 = vmul.f32 %v5658, %v5516
        %v5675 = vmul.f32 %v5659, %v5518
        %v5676 = vmul.f32 %v5660, %v5520
        %v5677 = vmul.f32 %v5661, %v5522
        %v5678 = vmul.f32 %v5662, %v5524
        %v5679 = vmul.f32 %v5663, %v5526
        %v5680 = vmul.f32 %v5664, %v5528
        %v5681 = vmul.f32 %v5665, %v5530
        %v5682 = vmul.f32 %v5666, %v5532
        %v5683 = vmul.f32 %v5667, %v5534
        %v5684 = vmul.f32 %v5668, %v5536
        %v5685 = vmul.f32 %v5669, %v5538
        %v5686 = vmul.f32 %v5670, %v5540
        %v5687 = vmul.f32 %v5671, %v5542
        %v5688 = vmul.f32 %v5672, %v5544
        %v5689 = vsub.f32 0.0, %v5465
        %v5690 = vsub.f32 0.0, %v5466
        %v5691 = vsub.f32 0.0, %v5467
        %v5692 = vsub.f32 0.0, %v5468
        %v5693 = vsub.f32 0.0, %v5469
        %v5694 = vsub.f32 0.0, %v5470
        %v5695 = vsub.f32 0.0, %v5471
        %v5696 = vsub.f32 0.0, %v5472
        %v5697 = vsub.f32 0.0, %v5473
        %v5698 = vsub.f32 0.0, %v5474
        %v5699 = vsub.f32 0.0, %v5475
        %v5700 = vsub.f32 0.0, %v5476
        %v5701 = vsub.f32 0.0, %v5477
        %v5702 = vsub.f32 0.0, %v5478
        %v5703 = vsub.f32 0.0, %v5479
        %v5704 = vsub.f32 0.0, %v5480
        %v5705 = vmul.f32 %v5689, %v5465
        %v5706 = vmul.f32 %v5690, %v5466
        %v5707 = vmul.f32 %v5691, %v5467
        %v5708 = vmul.f32 %v5692, %v5468
        %v5709 = vmul.f32 %v5693, %v5469
        %v5710 = vmul.f32 %v5694, %v5470
        %v5711 = vmul.f32 %v5695, %v5471
        %v5712 = vmul.f32 %v5696, %v5472
        %v5713 = vmul.f32 %v5697, %v5473
        %v5714 = vmul.f32 %v5698, %v5474
        %v5715 = vmul.f32 %v5699, %v5475
        %v5716 = vmul.f32 %v5700, %v5476
        %v5717 = vmul.f32 %v5701, %v5477
        %v5718 = vmul.f32 %v5702, %v5478
        %v5719 = vmul.f32 %v5703, %v5479
        %v5720 = vmul.f32 %v5704, %v5480
        %v5721 = vmul.f32 %v5705, 1.442695
        %v5722 = vpow.pop %v5721
        %v5723 = vmul.f32 %v5706, 1.442695
        %v5724 = vpow.pop %v5723
        %v5725 = vmul.f32 %v5707, 1.442695
        %v5726 = vpow.pop %v5725
        %v5727 = vmul.f32 %v5708, 1.442695
        %v5728 = vpow.pop %v5727
        %v5729 = vmul.f32 %v5709, 1.442695
        %v5730 = vpow.pop %v5729
        %v5731 = vmul.f32 %v5710, 1.442695
        %v5732 = vpow.pop %v5731
        %v5733 = vmul.f32 %v5711, 1.442695
        %v5734 = vpow.pop %v5733
        %v5735 = vmul.f32 %v5712, 1.442695
        %v5736 = vpow.pop %v5735
        %v5737 = vmul.f32 %v5713, 1.442695
        %v5738 = vpow.pop %v5737
        %v5739 = vmul.f32 %v5714, 1.442695
        %v5740 = vpow.pop %v5739
        %v5741 = vmul.f32 %v5715, 1.442695
        %v5742 = vpow.pop %v5741
        %v5743 = vmul.f32 %v5716, 1.442695
        %v5744 = vpow.pop %v5743
        %v5745 = vmul.f32 %v5717, 1.442695
        %v5746 = vpow.pop %v5745
        %v5747 = vmul.f32 %v5718, 1.442695
        %v5748 = vpow.pop %v5747
        %v5749 = vmul.f32 %v5719, 1.442695
        %v5750 = vpow.pop %v5749
        %v5751 = vmul.f32 %v5720, 1.442695
        %v5752 = vpow.pop %v5751
        %v5753 = vmul.f32 %v5673, %v5722
        %v5754 = vmul.f32 %v5674, %v5724
        %v5755 = vmul.f32 %v5675, %v5726
        %v5756 = vmul.f32 %v5676, %v5728
        %v5757 = vmul.f32 %v5677, %v5730
        %v5758 = vmul.f32 %v5678, %v5732
        %v5759 = vmul.f32 %v5679, %v5734
        %v5760 = vmul.f32 %v5680, %v5736
        %v5761 = vmul.f32 %v5681, %v5738
        %v5762 = vmul.f32 %v5682, %v5740
        %v5763 = vmul.f32 %v5683, %v5742
        %v5764 = vmul.f32 %v5684, %v5744
        %v5765 = vmul.f32 %v5685, %v5746
        %v5766 = vmul.f32 %v5686, %v5748
        %v5767 = vmul.f32 %v5687, %v5750
        %v5768 = vmul.f32 %v5688, %v5752
        %v5769 = vsub.f32 1.0, %v5753
        %v5770 = vsub.f32 1.0, %v5754
        %v5771 = vsub.f32 1.0, %v5755
        %v5772 = vsub.f32 1.0, %v5756
        %v5773 = vsub.f32 1.0, %v5757
        %v5774 = vsub.f32 1.0, %v5758
        %v5775 = vsub.f32 1.0, %v5759
        %v5776 = vsub.f32 1.0, %v5760
        %v5777 = vsub.f32 1.0, %v5761
        %v5778 = vsub.f32 1.0, %v5762
        %v5779 = vsub.f32 1.0, %v5763
        %v5780 = vsub.f32 1.0, %v5764
        %v5781 = vsub.f32 1.0, %v5765
        %v5782 = vsub.f32 1.0, %v5766
        %v5783 = vsub.f32 1.0, %v5767
        %v5784 = vsub.f32 1.0, %v5768
        %v5785 = vmul.f32 %v5449, %v5769
        %v5786 = vmul.f32 %v5450, %v5770
        %v5787 = vmul.f32 %v5451, %v5771
        %v5788 = vmul.f32 %v5452, %v5772
        %v5789 = vmul.f32 %v5453, %v5773
        %v5790 = vmul.f32 %v5454, %v5774
        %v5791 = vmul.f32 %v5455, %v5775
        %v5792 = vmul.f32 %v5456, %v5776
        %v5793 = vmul.f32 %v5457, %v5777
        %v5794 = vmul.f32 %v5458, %v5778
        %v5795 = vmul.f32 %v5459, %v5779
        %v5796 = vmul.f32 %v5460, %v5780
        %v5797 = vmul.f32 %v5461, %v5781
        %v5798 = vmul.f32 %v5462, %v5782
        %v5799 = vmul.f32 %v5463, %v5783
        %v5800 = vmul.f32 %v5464, %v5784
        %v5801 = vadd.f32 %v5785, 1.0
        %v5802 = vadd.f32 %v5786, 1.0
        %v5803 = vadd.f32 %v5787, 1.0
        %v5804 = vadd.f32 %v5788, 1.0
        %v5805 = vadd.f32 %v5789, 1.0
        %v5806 = vadd.f32 %v5790, 1.0
        %v5807 = vadd.f32 %v5791, 1.0
        %v5808 = vadd.f32 %v5792, 1.0
        %v5809 = vadd.f32 %v5793, 1.0
        %v5810 = vadd.f32 %v5794, 1.0
        %v5811 = vadd.f32 %v5795, 1.0
        %v5812 = vadd.f32 %v5796, 1.0
        %v5813 = vadd.f32 %v5797, 1.0
        %v5814 = vadd.f32 %v5798, 1.0
        %v5815 = vadd.f32 %v5799, 1.0
        %v5816 = vadd.f32 %v5800, 1.0
        %v5817 = vmul.f32 %v5401, %v5801
        %v5818 = vmul.f32 %v5402, %v5802
        %v5819 = vmul.f32 %v5403, %v5803
        %v5820 = vmul.f32 %v5404, %v5804
        %v5821 = vmul.f32 %v5405, %v5805
        %v5822 = vmul.f32 %v5406, %v5806
        %v5823 = vmul.f32 %v5407, %v5807
        %v5824 = vmul.f32 %v5408, %v5808
        %v5825 = vmul.f32 %v5409, %v5809
        %v5826 = vmul.f32 %v5410, %v5810
        %v5827 = vmul.f32 %v5411, %v5811
        %v5828 = vmul.f32 %v5412, %v5812
        %v5829 = vmul.f32 %v5413, %v5813
        %v5830 = vmul.f32 %v5414, %v5814
        %v5831 = vmul.f32 %v5415, %v5815
        %v5832 = vmul.f32 %v5416, %v5816
        %v5833 = vld [vmem:[#allocation23] sm:$0xff]
        %v5834 = vld [vmem:[#allocation23 + $0x8] sm:$0xff]
        %v5835 = vld [vmem:[#allocation23 + $0x10] sm:$0xff]
        %v5836 = vld [vmem:[#allocation23 + $0x18] sm:$0xff]
        %v5837 = vld [vmem:[#allocation23 + $0x20] sm:$0xff]
        %v5838 = vld [vmem:[#allocation23 + $0x28] sm:$0xff]
        %v5839 = vld [vmem:[#allocation23 + $0x30] sm:$0xff]
        %v5840 = vld [vmem:[#allocation23 + $0x38] sm:$0xff]
        %v5841 = vld [vmem:[#allocation23 + $0x40] sm:$0xff]
        %v5842 = vld [vmem:[#allocation23 + $0x48] sm:$0xff]
        %v5843 = vld [vmem:[#allocation23 + $0x50] sm:$0xff]
        %v5844 = vld [vmem:[#allocation23 + $0x58] sm:$0xff]
        %v5845 = vld [vmem:[#allocation23 + $0x60] sm:$0xff]
        %v5846 = vld [vmem:[#allocation23 + $0x68] sm:$0xff]
        %v5847 = vld [vmem:[#allocation23 + $0x70] sm:$0xff]
        %v5848 = vld [vmem:[#allocation23 + $0x78] sm:$0xff]
        %v5850 = vlaneseq
        %v5851 = vshrl.u32 %v5850, 7
        %v5852 = vsub.s32 0, %v5851
        %v5853 = vrot.slane %v696, %v5852
        %5855 = vmatprep.subr.mxu0 0.0
        %5856 = vmatpush1.msra.mxu0 %v5833
        %5857 = vmatprep.subr.mxu0 0.0
        %5858 = vmatpush1.msra.mxu0 %v5834
        %5859 = vmatprep.subr.mxu0 0.0
        %5860 = vmatpush1.msra.mxu0 %v5835
        %5861 = vmatprep.subr.mxu0 0.0
        %5862 = vmatpush1.msra.mxu0 %v5836
        %5863 = vmatprep.subr.mxu0 0.0
        %5864 = vmatpush1.msra.mxu0 %v5837
        %5865 = vmatprep.subr.mxu0 0.0
        %5866 = vmatpush1.msra.mxu0 %v5838
        %5867 = vmatprep.subr.mxu0 0.0
        %5868 = vmatpush1.msra.mxu0 %v5839
        %5869 = vmatprep.subr.mxu0 0.0
        %5870 = vmatpush1.msra.mxu0 %v5840
        %5871 = vmatprep.subr.mxu0 0.0
        %5872 = vmatpush1.msra.mxu0 %v5841
        %5873 = vmatprep.subr.mxu0 0.0
        %5874 = vmatpush1.msra.mxu0 %v5842
        %5875 = vmatprep.subr.mxu0 0.0
        %5876 = vmatpush1.msra.mxu0 %v5843
        %5877 = vmatprep.subr.mxu0 0.0
        %5878 = vmatpush1.msra.mxu0 %v5844
        %5879 = vmatprep.subr.mxu0 0.0
        %5880 = vmatpush1.msra.mxu0 %v5845
        %5881 = vmatprep.subr.mxu0 0.0
        %5882 = vmatpush1.msra.mxu0 %v5846
        %5883 = vmatprep.subr.mxu0 0.0
        %5884 = vmatpush1.msra.mxu0 %v5847
        %5885 = vmatprep.subr.mxu0 0.0
        %5886 = vmatpush1.msra.mxu0 %v5848
        %5887 = vmatprep.subr.mxu0 0.0
        %5888 = vmatpush1.msra.mxu0 0.0
        %5889 = vmatprep.subr.mxu0 0.0
        %5890 = vmatpush1.msra.mxu0 0.0
        %5891 = vmatprep.subr.mxu0 0.0
        %5892 = vmatpush1.msra.mxu0 0.0
        %5893 = vmatprep.subr.mxu0 0.0
        %5894 = vmatpush1.msra.mxu0 0.0
        %5895 = vmatprep.subr.mxu0 0.0
        %5896 = vmatpush1.msra.mxu0 0.0
        %5897 = vmatprep.subr.mxu0 0.0
        %5898 = vmatpush1.msra.mxu0 0.0
        %5899 = vmatprep.subr.mxu0 0.0
        %5900 = vmatpush1.msra.mxu0 0.0
        %5901 = vmatprep.subr.mxu0 0.0
        %5902 = vmatpush1.msra.mxu0 0.0
        %5903 = vmatprep.subr.mxu0 0.0
        %5904 = vmatpush1.msra.mxu0 0.0
        %5905 = vmatprep.subr.mxu0 0.0
        %5906 = vmatpush1.msra.mxu0 0.0
        %5907 = vmatprep.subr.mxu0 0.0
        %5908 = vmatpush1.msra.mxu0 0.0
        %5909 = vmatprep.subr.mxu0 0.0
        %5910 = vmatpush1.msra.mxu0 0.0
        %5911 = vmatprep.subr.mxu0 0.0
        %5912 = vmatpush1.msra.mxu0 0.0
        %5913 = vmatprep.subr.mxu0 0.0
        %5914 = vmatpush1.msra.mxu0 0.0
        %5915 = vmatprep.subr.mxu0 0.0
        %5916 = vmatpush1.msra.mxu0 0.0
        %5917 = vmatprep.subr.mxu0 0.0
        %5918 = vmatpush1.msra.mxu0 0.0
        %5919 = vmatprep.mubr.f32.mxu0 0.0
        %5920 = vmatmul.mubr.f32.gmra.mrb[0].mxu0 %v5817
        %v5921 = vpop.f32.mrb[0].mxu0
        %v5922 = vadd.f32 %v5853, %v5921
        %v5923 = vpop.f32.mrb[0].mxu0
        %5924 = vmatprep.mubr.f32.mxu0 0.0
        %5925 = vmatmul.mubr.f32.gmra.mrb[0].mxu0 %v5818
        %v5926 = vpop.f32.mrb[0].mxu0
        %v5927 = vadd.f32 %v5853, %v5926
        %v5928 = vpop.f32.mrb[0].mxu0
        %5929 = vmatprep.mubr.f32.mxu0 0.0
        %5930 = vmatmul.mubr.f32.gmra.mrb[0].mxu0 %v5819
        %v5931 = vpop.f32.mrb[0].mxu0
        %v5932 = vadd.f32 %v5853, %v5931
        %v5933 = vpop.f32.mrb[0].mxu0
        %5934 = vmatprep.mubr.f32.mxu0 0.0
        %5935 = vmatmul.mubr.f32.gmra.mrb[0].mxu0 %v5820
        %v5936 = vpop.f32.mrb[0].mxu0
        %v5937 = vadd.f32 %v5853, %v5936
        %v5938 = vpop.f32.mrb[0].mxu0
        %5939 = vmatprep.mubr.f32.mxu0 0.0
        %5940 = vmatmul.mubr.f32.gmra.mrb[0].mxu0 %v5821
        %v5941 = vpop.f32.mrb[0].mxu0
        %v5942 = vadd.f32 %v5853, %v5941
        %v5943 = vpop.f32.mrb[0].mxu0
        %5944 = vmatprep.mubr.f32.mxu0 0.0
        %5945 = vmatmul.mubr.f32.gmra.mrb[0].mxu0 %v5822
        %v5946 = vpop.f32.mrb[0].mxu0
        %v5947 = vadd.f32 %v5853, %v5946
        %v5948 = vpop.f32.mrb[0].mxu0
        %5949 = vmatprep.mubr.f32.mxu0 0.0
        %5950 = vmatmul.mubr.f32.gmra.mrb[0].mxu0 %v5823
        %v5951 = vpop.f32.mrb[0].mxu0
        %v5952 = vadd.f32 %v5853, %v5951
        %v5953 = vpop.f32.mrb[0].mxu0
        %5954 = vmatprep.mubr.f32.mxu0 0.0
        %5955 = vmatmul.mubr.f32.gmra.mrb[0].mxu0 %v5824
        %v5956 = vpop.f32.mrb[0].mxu0
        %v5957 = vadd.f32 %v5853, %v5956
        %v5958 = vpop.f32.mrb[0].mxu0
        %5959 = vmatprep.mubr.f32.mxu0 0.0
        %5960 = vmatmul.mubr.f32.gmra.mrb[0].mxu0 %v5825
        %v5961 = vpop.f32.mrb[0].mxu0
        %v5962 = vadd.f32 %v5853, %v5961
        %v5963 = vpop.f32.mrb[0].mxu0
        %5964 = vmatprep.mubr.f32.mxu0 0.0
        %5965 = vmatmul.mubr.f32.gmra.mrb[0].mxu0 %v5826
        %v5966 = vpop.f32.mrb[0].mxu0
        %v5967 = vadd.f32 %v5853, %v5966
        %v5968 = vpop.f32.mrb[0].mxu0
        %5969 = vmatprep.mubr.f32.mxu0 0.0
        %5970 = vmatmul.mubr.f32.gmra.mrb[0].mxu0 %v5827
        %v5971 = vpop.f32.mrb[0].mxu0
        %v5972 = vadd.f32 %v5853, %v5971
        %v5973 = vpop.f32.mrb[0].mxu0
        %5974 = vmatprep.mubr.f32.mxu0 0.0
        %5975 = vmatmul.mubr.f32.gmra.mrb[0].mxu0 %v5828
        %v5976 = vpop.f32.mrb[0].mxu0
        %v5977 = vadd.f32 %v5853, %v5976
        %v5978 = vpop.f32.mrb[0].mxu0
        %5979 = vmatprep.mubr.f32.mxu0 0.0
        %5980 = vmatmul.mubr.f32.gmra.mrb[0].mxu0 %v5829
        %v5981 = vpop.f32.mrb[0].mxu0
        %v5982 = vadd.f32 %v5853, %v5981
        %v5983 = vpop.f32.mrb[0].mxu0
        %5984 = vmatprep.mubr.f32.mxu0 0.0
        %5985 = vmatmul.mubr.f32.gmra.mrb[0].mxu0 %v5830
        %v5986 = vpop.f32.mrb[0].mxu0
        %v5987 = vadd.f32 %v5853, %v5986
        %v5988 = vpop.f32.mrb[0].mxu0
        %5989 = vmatprep.mubr.f32.mxu0 0.0
        %5990 = vmatmul.mubr.f32.gmra.mrb[0].mxu0 %v5831
        %v5991 = vpop.f32.mrb[0].mxu0
        %v5992 = vadd.f32 %v5853, %v5991
        %v5993 = vpop.f32.mrb[0].mxu0
        %5994 = vmatprep.mubr.f32.mxu0 0.0
        %5995 = vmatmul.mubr.f32.gmra.mrb[0].mxu0 %v5832
        %v5996 = vpop.f32.mrb[0].mxu0
        %v5997 = vadd.f32 %v5853, %v5996
        %v5998 = vpop.f32.mrb[0].mxu0
        %5999 = vdwg.mxu0
        %v6000 = vadd.f32 %v4930, %v5922
        %v6001 = vadd.f32 %v4931, %v5927
        %v6002 = vadd.f32 %v4932, %v5932
        %v6003 = vadd.f32 %v4933, %v5937
        %v6004 = vadd.f32 %v4934, %v5942
        %v6005 = vadd.f32 %v4935, %v5947
        %v6006 = vadd.f32 %v4936, %v5952
        %v6007 = vadd.f32 %v4937, %v5957
        %v6008 = vadd.f32 %v4938, %v5962
        %v6009 = vadd.f32 %v4939, %v5967
        %v6010 = vadd.f32 %v4940, %v5972
        %v6011 = vadd.f32 %v4941, %v5977
        %v6012 = vadd.f32 %v4942, %v5982
        %v6013 = vadd.f32 %v4943, %v5987
        %v6014 = vadd.f32 %v4944, %v5992
        %v6015 = vadd.f32 %v4945, %v5997
        %6016 = vst.msk [vmem:[%s685] sm:$0xff] %vm729, %v6000
        %6017 = vst.msk [vmem:[%s685 + $0x8] sm:$0xff] %vm729, %v6001
        %6018 = vst.msk [vmem:[%s685 + $0x10] sm:$0xff] %vm729, %v6002
        %6019 = vst.msk [vmem:[%s685 + $0x18] sm:$0xff] %vm729, %v6003
        %6020 = vst.msk [vmem:[%s685 + $0x20] sm:$0xff] %vm729, %v6004
        %6021 = vst.msk [vmem:[%s685 + $0x28] sm:$0xff] %vm729, %v6005
        %6022 = vst.msk [vmem:[%s685 + $0x30] sm:$0xff] %vm729, %v6006
        %6023 = vst.msk [vmem:[%s685 + $0x38] sm:$0xff] %vm729, %v6007
        %6024 = vst.msk [vmem:[%s685 + $0x40] sm:$0xff] %vm729, %v6008
        %6025 = vst.msk [vmem:[%s685 + $0x48] sm:$0xff] %vm729, %v6009
        %6026 = vst.msk [vmem:[%s685 + $0x50] sm:$0xff] %vm729, %v6010
        %6027 = vst.msk [vmem:[%s685 + $0x58] sm:$0xff] %vm729, %v6011
        %6028 = vst.msk [vmem:[%s685 + $0x60] sm:$0xff] %vm729, %v6012
        %6029 = vst.msk [vmem:[%s685 + $0x68] sm:$0xff] %vm729, %v6013
        %6030 = vst.msk [vmem:[%s685 + $0x70] sm:$0xff] %vm729, %v6014
        %6031 = vst.msk [vmem:[%s685 + $0x78] sm:$0xff] %vm729, %v6015
        %s6032 = sand.u32 %s352, 1
        %s6033 = scalar_lea.sflag [#allocation5], %s6032
        %s6034 = sand.u32 %s352, 1
        %s6035 = smul.addr %s6034, 128
        %s6036 = scalar_lea.vmem [#allocation26], %s6035
        // Predicated region
        $region133: #{tpu_custom_call.1} parent=75 // pred_check
          %p6037 = pneg %p362
        $region134: #{tpu_custom_call.1} parent=75 // pred_check_branch
          %6039 = sbr.rel (%p6037) target = $region136
        $region135: #{tpu_custom_call.1} parent=75 // pred_region
          %s6040 = smul.u32 2, %s40
          %s6042 = ssub.s32 2048, 2048
          %6043 = vsyncadd %s6033, %s6042
          %s6044 = smul.addr %s6040, 8
          %s6045 = smul.addr %s6044, 128
          %s6046 = scalar_lea.hbm %s14, %s6045
          %s6047 = sshll.u32 %s6036, 4
          %s6048 = int_to_ptr.vmem [resolvable:$true] %s6047
          %6053 = dma.vmem_to_hbm [thread:$0]  %s6048, 2048, %s6046, %s6033, 128, 128, 8
        $region136: #{tpu_custom_call.1} parent=75 // pred_fallthru
          _
      $region76: #{tpu_custom_call.1} parent=5 // pred_fallthru
        _
      %p6054 = scmp.le.s32.totalorder 2, %s35
      // Predicated region
      $region137: #{tpu_custom_call.1} parent=5 // pred_check
        %p6055 = pneg %p6054
      $region138: #{tpu_custom_call.1} parent=5 // pred_check_branch
        %6057 = sbr.rel (%p6055) target = $region140
      $region139: #{tpu_custom_call.1} parent=5 // pred_region
        %s6058 = ssub.s32 %s35, 2
        // Predicated region
        $region141: #{tpu_custom_call.1} parent=139 // pred_check
          %p6059 = pneg %p368
        $region142: #{tpu_custom_call.1} parent=139 // pred_check_branch
          %6061 = sbr.rel (%p6059) target = $region144
        $region143: #{tpu_custom_call.1} parent=139 // pred_region
          %s6062 = sand.u32 %s353, 1
          %s6063 = scalar_lea.sflag [#allocation5], %s6062
          %s6064 = sand.u32 %s353, 1
          %s6065 = smul.addr %s6064, 128
          %s6066 = scalar_lea.vmem [#allocation26], %s6065
          %6067 = dma.done %s6063, 2048
        $region144: #{tpu_custom_call.1} parent=139 // pred_fallthru
          _
      $region140: #{tpu_custom_call.1} parent=5 // pred_fallthru
        _
    $region6: #{tpu_custom_call.1} parent=1 // loop_footer
      %s39 = sadd.s32 1, %s35
    $region7: #{tpu_custom_call.1} parent=1 // loop_footer_branch
      %34 = sbr.rel target = $region3
    $region8: #{tpu_custom_call.1} parent=1 // loop_exit
      _
    %6068 = vsyncpa [#allocation4], 1
    %s6069 = scalar_lea.sflag [#allocation4], 1
    %6070 = vsyncpa %s6069, 1
    %6071 = vsyncpa [#allocation7], 1
    %s6072 = scalar_lea.sflag [#allocation7], 1
    %6073 = vsyncpa %s6072, 1
    %6074 = vsyncpa [#allocation10], 1
    %6075 = vsyncpa [#allocation13], 1
    %6076 = vsyncpa [#allocation16], 1
    %6077 = vsyncpa [#allocation19], 1
    %6078 = vsyncpa [#allocation22], 1
    %6079 = vsyncpa [#allocation25], 1
    %6080 = vsyncpa [#allocation5], 1
    %s6081 = scalar_lea.sflag [#allocation5], 1
    %6082 = vsyncpa %s6081, 1

</llo_original>
